<compile_context>
chip_gen: v5e
topology: v5e:2x2
jax: 0.10.0
libtpu: 0.0.40
codegen_flags: <defaults>
</compile_context>

<pallas_src>
import jax
import jax.numpy as jnp
import numpy as np
from jax.experimental import pallas as pl
from jax.experimental.pallas import tpu as pltpu

ENC_CHANNELS = (4, 8, 16)
DEC_CHANNELS = (8, 8)


# ----------------------------------------------------------------------------
# Host-side constant / weight packing (tiny, constant-folded under jit)
# ----------------------------------------------------------------------------
def _pool_matrix(H, W):
    """(Hp*Wp, H*W) matrix whose row (hp*Wp+wp) averages the 2x2 window at (2hp, 2wp)."""
    Hp, Wp = H // 2, W // 2
    hw_to_pool = (np.arange(H)[:, None] // 2) * Wp + (np.arange(W)[None, :] // 2)
    pp = hw_to_pool.reshape(-1)[None, :] == np.arange(Hp * Wp)[:, None]
    return jnp.asarray(pp.astype(np.float32) * 0.25)


def _pack_conv_weight(cw):
    # (3, 3, Cin, Cmid) -> (9*Cin, Cmid); tap order (kh, kw) row-major, channel fastest
    kh, kw, cin, cout = cw.shape
    return cw.reshape(kh * kw * cin, cout).astype(jnp.bfloat16)


def _pack_convT_weight(dw):
    # ConvTranspose2d(3x3, stride=(1,s), dilation=(1,s//2), padding=(1,0), bias=False):
    #   wo = wp*s       ("slot 0") <- kw=0 tap at wi=wp  +  kw=2 tap at wi=wp-1
    #   wo = wp*s + s/2 ("slot 1") <- kw=1 tap at wi=wp
    #   all other output columns are exactly zero.
    # Merge both slots into one (6*Cmid, 2*Dout) weight so the kernel does a single
    # lane-dense dot per output row (shared LHS for both slots).
    cmid, dout = dw.shape[2], dw.shape[3]
    col0 = jnp.concatenate([dw[0, 0], dw[1, 0], dw[2, 0],
                            dw[0, 2], dw[1, 2], dw[2, 2]], axis=0)       # (6*Cmid, Dout)
    col1 = jnp.concatenate([dw[0, 1], dw[1, 1], dw[2, 1],
                            jnp.zeros((3 * cmid, dout), dw.dtype)], axis=0)
    return jnp.concatenate([col0, col1], axis=1).astype(jnp.bfloat16)    # (6*Cmid, 2*Dout)


# ----------------------------------------------------------------------------
# Fused per-stage kernel: conv3x3+bias+ReLU -> 2x2 avg-pool -> ConvTranspose2d
# ----------------------------------------------------------------------------
def _make_stage_kernel(H, W):
    Hp, Wp = H // 2, W // 2

    def kernel(x_ref, wc_ref, cb_ref, pp_ref, wt_ref, p_ref, c_ref):
        # ---- 3x3 conv (pad=1) + bias + ReLU: in-kernel im2col + one MXU dot ----
        rows = []
        for h in range(H):
            taps = [x_ref[0, h + kh, kw:kw + W, :]
                    for kh in range(3) for kw in range(3)]               # 9 x (W, Cin)
            rows.append(jnp.concatenate(taps, axis=-1))                  # (W, 9*Cin)
        patches = jnp.concatenate(rows, axis=0).astype(jnp.bfloat16)     # (H*W, 9*Cin)
        y = jnp.dot(patches, wc_ref[...], preferred_element_type=jnp.float32)
        y = jnp.maximum(y + cb_ref[...], 0.0)                            # (H*W, Cmid)

        # ---- 2x2 avg-pool: one f32 matmul with the constant pooling matrix ----
        p = jnp.dot(pp_ref[...], y, preferred_element_type=jnp.float32)  # (Hp*Wp, Cmid)

        # ---- pooled activation, stored with a 1-px zero border: it is both the
        #      LHS of the transposed conv below and the next stage's padded input ----
        p_ref[...] = jnp.zeros(p_ref.shape, p_ref.dtype)
        for hp in range(Hp):
            p_ref[0, hp + 1, 1:Wp + 1, :] = p[hp * Wp:(hp + 1) * Wp, :]

        # ---- ConvTranspose2d: one merged (Wp, 6*Cmid) @ (6*Cmid, 2*Dout) dot per
        #      output row; only the two non-zero slots are computed and stored ----
        pv = p_ref[0]                                                    # (Hp+2, Wp+2, Cmid)
        for ho in range(Hp):
            pieces = [pv[ho + 2 - kh, 1:Wp + 1, :] for kh in range(3)]   # wi = wp
            pieces += [pv[ho + 2 - kh, 0:Wp, :] for kh in range(3)]      # wi = wp - 1
            lhs = jnp.concatenate(pieces, axis=-1).astype(jnp.bfloat16)  # (Wp, 6*Cmid)
            c_ref[0, ho, :, :] = jnp.dot(lhs, wt_ref[...],
                                         preferred_element_type=jnp.float32)

    return kernel


def _fused_stage(xpad, wc, cb, pp, wt):
    # xpad: (B, H+2, W+2, Cin) f32 (1-px zero border); wc: (9*Cin, Cmid) bf16;
    # cb: (1, Cmid) f32; pp: (Hp*Wp, H*W) f32; wt: (6*Cmid, 2*Dout) bf16.
    B = xpad.shape[0]
    H, W, Cin = xpad.shape[1] - 2, xpad.shape[2] - 2, xpad.shape[3]
    Cmid, Dout2 = wc.shape[1], wt.shape[1]
    Hp, Wp = H // 2, W // 2

    out_shape = (
        jax.ShapeDtypeStruct((B, Hp + 2, Wp + 2, Cmid), jnp.float32),  # padded pooled act
        jax.ShapeDtypeStruct((B, Hp, Wp, Dout2), jnp.float32),         # convT, 2 slots lane-major
    )
    return pl.pallas_call(
        _make_stage_kernel(H, W),
        out_shape=out_shape,
        grid=(B,),
        in_specs=[
            pl.BlockSpec((1, H + 2, W + 2, Cin), lambda b: (b, 0, 0, 0)),
            pl.BlockSpec(wc.shape, lambda b: (0, 0)),
            pl.BlockSpec(cb.shape, lambda b: (0, 0)),
            pl.BlockSpec(pp.shape, lambda b: (0, 0)),
            pl.BlockSpec(wt.shape, lambda b: (0, 0)),
        ],
        out_specs=(
            pl.BlockSpec((1, Hp + 2, Wp + 2, Cmid), lambda b: (b, 0, 0, 0)),
            pl.BlockSpec((1, Hp, Wp, Dout2), lambda b: (b, 0, 0, 0)),
        ),
        compiler_params=pltpu.CompilerParams(dimension_semantics=("parallel",)),
    )(xpad, wc, cb, pp, wt)


# ----------------------------------------------------------------------------
# RepEncoder forward
# ----------------------------------------------------------------------------
def rep_encoder_forward(x, params):
    # x: (B, H, W, ENC_CHANNELS[0]) NHWC float32
    B, H, W, _ = x.shape
    xpad = jnp.pad(x, ((0, 0), (1, 1), (1, 1), (0, 0)))
    outs = []
    for i in range(len(ENC_CHANNELS) - 1):
        cw, cb, dw = params[i]
        dout = DEC_CHANNELS[i]
        s = 2 ** (i + 1)
        Hp, Wp = H // 2, W // 2

        p_pad, c2 = _fused_stage(
            xpad,
            _pack_conv_weight(cw),
            cb.reshape(1, -1).astype(jnp.float32),
            _pool_matrix(H, W),
            _pack_convT_weight(dw),
        )

        # Interleave the two non-zero slots (and, for s > 2, the all-zero columns)
        # back onto the width axis: (B, Hp, Wp, 2*Dout) -> (B, Hp, Wp*s, Dout).
        # This matches ConvTranspose2d(...)(x)[:, :, :, :-1].
        c = c2.reshape(B, Hp, Wp, 2, 1, dout)
        if s > 2:
            zeros = jnp.zeros((B, Hp, Wp, 2, s // 2 - 1, dout), c2.dtype)
            c = jnp.concatenate([c, zeros], axis=4)
        outs.append(c.reshape(B, Hp, Wp * s, dout))

        xpad, H, W = p_pad, Hp, Wp   # pooled activation already carries its zero border
    return outs


def init_params(key):
    params = []
    for i in range(len(ENC_CHANNELS) - 1):
        cin, cout = ENC_CHANNELS[i], ENC_CHANNELS[i + 1]
        dout = DEC_CHANNELS[i]
        k1, k2, k3, key = jax.random.split(key, 4)
        cw = jax.random.normal(k1, (3, 3, cin, cout), jnp.float32) * (9 * cin) ** -0.5
        cb = jax.random.normal(k2, (cout,), jnp.float32) * 0.01
        dw = jax.random.normal(k3, (3, 3, cout, dout), jnp.float32) * (9 * cout) ** -0.5
        params.append((cw, cb, dw))
    return params


if __name__ == "__main__":
    key = jax.random.PRNGKey(0)
    kx, kp = jax.random.split(key)

    B, H, W = 2, 16, 16
    x = jax.random.normal(kx, (B, H, W, ENC_CHANNELS[0]), jnp.float32)  # NHWC
    params = init_params(kp)

    fwd = jax.jit(lambda xx: rep_encoder_forward(xx, params))
    outs = fwd(x)
    outs = jax.block_until_ready(outs)

    # Expected (NHWC): stage 0 -> (2, 8, 16, 8); stage 1 -> (2, 4, 16, 8)
    assert outs[0].shape == (2, 8, 16, 8), outs[0].shape
    assert outs[1].shape == (2, 4, 16, 8), outs[1].shape
    assert all(bool(jnp.all(jnp.isfinite(o))) for o in outs)

    print("KERNEL_OK")
</pallas_src>

<mosaic_0001>
module attributes {stable_mosaic.version = 11 : i64} {
  func.func @kernel(%arg0: i32, %arg1: memref<1x10x10x8xf32, #tpu.memory_space<vmem>>, %arg2: memref<72x16xbf16, #tpu.memory_space<vmem>>, %arg3: memref<1x16xf32, #tpu.memory_space<vmem>>, %arg4: memref<16x64xf32, #tpu.memory_space<vmem>>, %arg5: memref<96x16xbf16, #tpu.memory_space<vmem>>, %arg6: memref<1x6x6x16xf32, #tpu.memory_space<vmem>>, %arg7: memref<1x4x4x16xf32, #tpu.memory_space<vmem>>) attributes {dimension_semantics = [#tpu.dimension_semantics<parallel>], iteration_bounds = array<i64: 2>, scalar_prefetch = 0 : i64, scratch_operands = 0 : i64, tpu.core_type = #tpu.core_type<tc>, window_params = [{transform_indices = @transform_0, window_bounds = array<i64: 1, 10, 10, 8>}, {pipeline_mode = #tpu.pipeline_mode<synchronous>, transform_indices = @transform_1, window_bounds = array<i64: 72, 16>}, {pipeline_mode = #tpu.pipeline_mode<synchronous>, transform_indices = @transform_2, window_bounds = array<i64: 1, 16>}, {pipeline_mode = #tpu.pipeline_mode<synchronous>, transform_indices = @transform_3, window_bounds = array<i64: 16, 64>}, {pipeline_mode = #tpu.pipeline_mode<synchronous>, transform_indices = @transform_4, window_bounds = array<i64: 96, 16>}, {transform_indices = @transform_5, window_bounds = array<i64: 1, 6, 6, 16>}, {transform_indices = @transform_6, window_bounds = array<i64: 1, 4, 4, 16>}]} {
    %c0 = arith.constant 0 : index
    %c0_0 = arith.constant 0 : index
    %c0_1 = arith.constant 0 : index
    %c0_2 = arith.constant 0 : index
    %0 = vector.load %arg1[%c0, %c0_0, %c0_1, %c0_2] : memref<1x10x10x8xf32, #tpu.memory_space<vmem>>, vector<1x1x8x8xf32>
    %1 = vector.shape_cast %0 : vector<1x1x8x8xf32> to vector<8x8xf32>
    %c0_3 = arith.constant 0 : index
    %c0_4 = arith.constant 0 : index
    %c1 = arith.constant 1 : index
    %c0_5 = arith.constant 0 : index
    %2 = vector.load %arg1[%c0_3, %c0_4, %c1, %c0_5] : memref<1x10x10x8xf32, #tpu.memory_space<vmem>>, vector<1x1x8x8xf32>
    %3 = vector.shape_cast %2 : vector<1x1x8x8xf32> to vector<8x8xf32>
    %c0_6 = arith.constant 0 : index
    %c0_7 = arith.constant 0 : index
    %c2 = arith.constant 2 : index
    %c0_8 = arith.constant 0 : index
    %4 = vector.load %arg1[%c0_6, %c0_7, %c2, %c0_8] : memref<1x10x10x8xf32, #tpu.memory_space<vmem>>, vector<1x1x8x8xf32>
    %5 = vector.shape_cast %4 : vector<1x1x8x8xf32> to vector<8x8xf32>
    %c0_9 = arith.constant 0 : index
    %c1_10 = arith.constant 1 : index
    %c0_11 = arith.constant 0 : index
    %c0_12 = arith.constant 0 : index
    %6 = vector.load %arg1[%c0_9, %c1_10, %c0_11, %c0_12] : memref<1x10x10x8xf32, #tpu.memory_space<vmem>>, vector<1x1x8x8xf32>
    %7 = vector.shape_cast %6 : vector<1x1x8x8xf32> to vector<8x8xf32>
    %c0_13 = arith.constant 0 : index
    %c1_14 = arith.constant 1 : index
    %c1_15 = arith.constant 1 : index
    %c0_16 = arith.constant 0 : index
    %8 = vector.load %arg1[%c0_13, %c1_14, %c1_15, %c0_16] : memref<1x10x10x8xf32, #tpu.memory_space<vmem>>, vector<1x1x8x8xf32>
    %9 = vector.shape_cast %8 : vector<1x1x8x8xf32> to vector<8x8xf32>
    %c0_17 = arith.constant 0 : index
    %c1_18 = arith.constant 1 : index
    %c2_19 = arith.constant 2 : index
    %c0_20 = arith.constant 0 : index
    %10 = vector.load %arg1[%c0_17, %c1_18, %c2_19, %c0_20] : memref<1x10x10x8xf32, #tpu.memory_space<vmem>>, vector<1x1x8x8xf32>
    %11 = vector.shape_cast %10 : vector<1x1x8x8xf32> to vector<8x8xf32>
    %c0_21 = arith.constant 0 : index
    %c2_22 = arith.constant 2 : index
    %c0_23 = arith.constant 0 : index
    %c0_24 = arith.constant 0 : index
    %12 = vector.load %arg1[%c0_21, %c2_22, %c0_23, %c0_24] : memref<1x10x10x8xf32, #tpu.memory_space<vmem>>, vector<1x1x8x8xf32>
    %13 = vector.shape_cast %12 : vector<1x1x8x8xf32> to vector<8x8xf32>
    %c0_25 = arith.constant 0 : index
    %c2_26 = arith.constant 2 : index
    %c1_27 = arith.constant 1 : index
    %c0_28 = arith.constant 0 : index
    %14 = vector.load %arg1[%c0_25, %c2_26, %c1_27, %c0_28] : memref<1x10x10x8xf32, #tpu.memory_space<vmem>>, vector<1x1x8x8xf32>
    %15 = vector.shape_cast %14 : vector<1x1x8x8xf32> to vector<8x8xf32>
    %c0_29 = arith.constant 0 : index
    %c2_30 = arith.constant 2 : index
    %c2_31 = arith.constant 2 : index
    %c0_32 = arith.constant 0 : index
    %16 = vector.load %arg1[%c0_29, %c2_30, %c2_31, %c0_32] : memref<1x10x10x8xf32, #tpu.memory_space<vmem>>, vector<1x1x8x8xf32>
    %17 = vector.shape_cast %16 : vector<1x1x8x8xf32> to vector<8x8xf32>
    %18 = tpu.concatenate %1, %3, %5, %7, %9, %11, %13, %15, %17 in 1 : vector<8x8xf32>, vector<8x8xf32>, vector<8x8xf32>, vector<8x8xf32>, vector<8x8xf32>, vector<8x8xf32>, vector<8x8xf32>, vector<8x8xf32>, vector<8x8xf32> -> vector<8x72xf32>
    %c0_33 = arith.constant 0 : index
    %c1_34 = arith.constant 1 : index
    %c0_35 = arith.constant 0 : index
    %c0_36 = arith.constant 0 : index
    %19 = vector.load %arg1[%c0_33, %c1_34, %c0_35, %c0_36] : memref<1x10x10x8xf32, #tpu.memory_space<vmem>>, vector<1x1x8x8xf32>
    %20 = vector.shape_cast %19 : vector<1x1x8x8xf32> to vector<8x8xf32>
    %c0_37 = arith.constant 0 : index
    %c1_38 = arith.constant 1 : index
    %c1_39 = arith.constant 1 : index
    %c0_40 = arith.constant 0 : index
    %21 = vector.load %arg1[%c0_37, %c1_38, %c1_39, %c0_40] : memref<1x10x10x8xf32, #tpu.memory_space<vmem>>, vector<1x1x8x8xf32>
    %22 = vector.shape_cast %21 : vector<1x1x8x8xf32> to vector<8x8xf32>
    %c0_41 = arith.constant 0 : index
    %c1_42 = arith.constant 1 : index
    %c2_43 = arith.constant 2 : index
    %c0_44 = arith.constant 0 : index
    %23 = vector.load %arg1[%c0_41, %c1_42, %c2_43, %c0_44] : memref<1x10x10x8xf32, #tpu.memory_space<vmem>>, vector<1x1x8x8xf32>
    %24 = vector.shape_cast %23 : vector<1x1x8x8xf32> to vector<8x8xf32>
    %c0_45 = arith.constant 0 : index
    %c2_46 = arith.constant 2 : index
    %c0_47 = arith.constant 0 : index
    %c0_48 = arith.constant 0 : index
    %25 = vector.load %arg1[%c0_45, %c2_46, %c0_47, %c0_48] : memref<1x10x10x8xf32, #tpu.memory_space<vmem>>, vector<1x1x8x8xf32>
    %26 = vector.shape_cast %25 : vector<1x1x8x8xf32> to vector<8x8xf32>
    %c0_49 = arith.constant 0 : index
    %c2_50 = arith.constant 2 : index
    %c1_51 = arith.constant 1 : index
    %c0_52 = arith.constant 0 : index
    %27 = vector.load %arg1[%c0_49, %c2_50, %c1_51, %c0_52] : memref<1x10x10x8xf32, #tpu.memory_space<vmem>>, vector<1x1x8x8xf32>
    %28 = vector.shape_cast %27 : vector<1x1x8x8xf32> to vector<8x8xf32>
    %c0_53 = arith.constant 0 : index
    %c2_54 = arith.constant 2 : index
    %c2_55 = arith.constant 2 : index
    %c0_56 = arith.constant 0 : index
    %29 = vector.load %arg1[%c0_53, %c2_54, %c2_55, %c0_56] : memref<1x10x10x8xf32, #tpu.memory_space<vmem>>, vector<1x1x8x8xf32>
    %30 = vector.shape_cast %29 : vector<1x1x8x8xf32> to vector<8x8xf32>
    %c0_57 = arith.constant 0 : index
    %c3 = arith.constant 3 : index
    %c0_58 = arith.constant 0 : index
    %c0_59 = arith.constant 0 : index
    %31 = vector.load %arg1[%c0_57, %c3, %c0_58, %c0_59] : memref<1x10x10x8xf32, #tpu.memory_space<vmem>>, vector<1x1x8x8xf32>
    %32 = vector.shape_cast %31 : vector<1x1x8x8xf32> to vector<8x8xf32>
    %c0_60 = arith.constant 0 : index
    %c3_61 = arith.constant 3 : index
    %c1_62 = arith.constant 1 : index
    %c0_63 = arith.constant 0 : index
    %33 = vector.load %arg1[%c0_60, %c3_61, %c1_62, %c0_63] : memref<1x10x10x8xf32, #tpu.memory_space<vmem>>, vector<1x1x8x8xf32>
    %34 = vector.shape_cast %33 : vector<1x1x8x8xf32> to vector<8x8xf32>
    %c0_64 = arith.constant 0 : index
    %c3_65 = arith.constant 3 : index
    %c2_66 = arith.constant 2 : index
    %c0_67 = arith.constant 0 : index
    %35 = vector.load %arg1[%c0_64, %c3_65, %c2_66, %c0_67] : memref<1x10x10x8xf32, #tpu.memory_space<vmem>>, vector<1x1x8x8xf32>
    %36 = vector.shape_cast %35 : vector<1x1x8x8xf32> to vector<8x8xf32>
    %37 = tpu.concatenate %20, %22, %24, %26, %28, %30, %32, %34, %36 in 1 : vector<8x8xf32>, vector<8x8xf32>, vector<8x8xf32>, vector<8x8xf32>, vector<8x8xf32>, vector<8x8xf32>, vector<8x8xf32>, vector<8x8xf32>, vector<8x8xf32> -> vector<8x72xf32>
    %c0_68 = arith.constant 0 : index
    %c2_69 = arith.constant 2 : index
    %c0_70 = arith.constant 0 : index
    %c0_71 = arith.constant 0 : index
    %38 = vector.load %arg1[%c0_68, %c2_69, %c0_70, %c0_71] : memref<1x10x10x8xf32, #tpu.memory_space<vmem>>, vector<1x1x8x8xf32>
    %39 = vector.shape_cast %38 : vector<1x1x8x8xf32> to vector<8x8xf32>
    %c0_72 = arith.constant 0 : index
    %c2_73 = arith.constant 2 : index
    %c1_74 = arith.constant 1 : index
    %c0_75 = arith.constant 0 : index
    %40 = vector.load %arg1[%c0_72, %c2_73, %c1_74, %c0_75] : memref<1x10x10x8xf32, #tpu.memory_space<vmem>>, vector<1x1x8x8xf32>
    %41 = vector.shape_cast %40 : vector<1x1x8x8xf32> to vector<8x8xf32>
    %c0_76 = arith.constant 0 : index
    %c2_77 = arith.constant 2 : index
    %c2_78 = arith.constant 2 : index
    %c0_79 = arith.constant 0 : index
    %42 = vector.load %arg1[%c0_76, %c2_77, %c2_78, %c0_79] : memref<1x10x10x8xf32, #tpu.memory_space<vmem>>, vector<1x1x8x8xf32>
    %43 = vector.shape_cast %42 : vector<1x1x8x8xf32> to vector<8x8xf32>
    %c0_80 = arith.constant 0 : index
    %c3_81 = arith.constant 3 : index
    %c0_82 = arith.constant 0 : index
    %c0_83 = arith.constant 0 : index
    %44 = vector.load %arg1[%c0_80, %c3_81, %c0_82, %c0_83] : memref<1x10x10x8xf32, #tpu.memory_space<vmem>>, vector<1x1x8x8xf32>
    %45 = vector.shape_cast %44 : vector<1x1x8x8xf32> to vector<8x8xf32>
    %c0_84 = arith.constant 0 : index
    %c3_85 = arith.constant 3 : index
    %c1_86 = arith.constant 1 : index
    %c0_87 = arith.constant 0 : index
    %46 = vector.load %arg1[%c0_84, %c3_85, %c1_86, %c0_87] : memref<1x10x10x8xf32, #tpu.memory_space<vmem>>, vector<1x1x8x8xf32>
    %47 = vector.shape_cast %46 : vector<1x1x8x8xf32> to vector<8x8xf32>
    %c0_88 = arith.constant 0 : index
    %c3_89 = arith.constant 3 : index
    %c2_90 = arith.constant 2 : index
    %c0_91 = arith.constant 0 : index
    %48 = vector.load %arg1[%c0_88, %c3_89, %c2_90, %c0_91] : memref<1x10x10x8xf32, #tpu.memory_space<vmem>>, vector<1x1x8x8xf32>
    %49 = vector.shape_cast %48 : vector<1x1x8x8xf32> to vector<8x8xf32>
    %c0_92 = arith.constant 0 : index
    %c4 = arith.constant 4 : index
    %c0_93 = arith.constant 0 : index
    %c0_94 = arith.constant 0 : index
    %50 = vector.load %arg1[%c0_92, %c4, %c0_93, %c0_94] : memref<1x10x10x8xf32, #tpu.memory_space<vmem>>, vector<1x1x8x8xf32>
    %51 = vector.shape_cast %50 : vector<1x1x8x8xf32> to vector<8x8xf32>
    %c0_95 = arith.constant 0 : index
    %c4_96 = arith.constant 4 : index
    %c1_97 = arith.constant 1 : index
    %c0_98 = arith.constant 0 : index
    %52 = vector.load %arg1[%c0_95, %c4_96, %c1_97, %c0_98] : memref<1x10x10x8xf32, #tpu.memory_space<vmem>>, vector<1x1x8x8xf32>
    %53 = vector.shape_cast %52 : vector<1x1x8x8xf32> to vector<8x8xf32>
    %c0_99 = arith.constant 0 : index
    %c4_100 = arith.constant 4 : index
    %c2_101 = arith.constant 2 : index
    %c0_102 = arith.constant 0 : index
    %54 = vector.load %arg1[%c0_99, %c4_100, %c2_101, %c0_102] : memref<1x10x10x8xf32, #tpu.memory_space<vmem>>, vector<1x1x8x8xf32>
    %55 = vector.shape_cast %54 : vector<1x1x8x8xf32> to vector<8x8xf32>
    %56 = tpu.concatenate %39, %41, %43, %45, %47, %49, %51, %53, %55 in 1 : vector<8x8xf32>, vector<8x8xf32>, vector<8x8xf32>, vector<8x8xf32>, vector<8x8xf32>, vector<8x8xf32>, vector<8x8xf32>, vector<8x8xf32>, vector<8x8xf32> -> vector<8x72xf32>
    %c0_103 = arith.constant 0 : index
    %c3_104 = arith.constant 3 : index
    %c0_105 = arith.constant 0 : index
    %c0_106 = arith.constant 0 : index
    %57 = vector.load %arg1[%c0_103, %c3_104, %c0_105, %c0_106] : memref<1x10x10x8xf32, #tpu.memory_space<vmem>>, vector<1x1x8x8xf32>
    %58 = vector.shape_cast %57 : vector<1x1x8x8xf32> to vector<8x8xf32>
    %c0_107 = arith.constant 0 : index
    %c3_108 = arith.constant 3 : index
    %c1_109 = arith.constant 1 : index
    %c0_110 = arith.constant 0 : index
    %59 = vector.load %arg1[%c0_107, %c3_108, %c1_109, %c0_110] : memref<1x10x10x8xf32, #tpu.memory_space<vmem>>, vector<1x1x8x8xf32>
    %60 = vector.shape_cast %59 : vector<1x1x8x8xf32> to vector<8x8xf32>
    %c0_111 = arith.constant 0 : index
    %c3_112 = arith.constant 3 : index
    %c2_113 = arith.constant 2 : index
    %c0_114 = arith.constant 0 : index
    %61 = vector.load %arg1[%c0_111, %c3_112, %c2_113, %c0_114] : memref<1x10x10x8xf32, #tpu.memory_space<vmem>>, vector<1x1x8x8xf32>
    %62 = vector.shape_cast %61 : vector<1x1x8x8xf32> to vector<8x8xf32>
    %c0_115 = arith.constant 0 : index
    %c4_116 = arith.constant 4 : index
    %c0_117 = arith.constant 0 : index
    %c0_118 = arith.constant 0 : index
    %63 = vector.load %arg1[%c0_115, %c4_116, %c0_117, %c0_118] : memref<1x10x10x8xf32, #tpu.memory_space<vmem>>, vector<1x1x8x8xf32>
    %64 = vector.shape_cast %63 : vector<1x1x8x8xf32> to vector<8x8xf32>
    %c0_119 = arith.constant 0 : index
    %c4_120 = arith.constant 4 : index
    %c1_121 = arith.constant 1 : index
    %c0_122 = arith.constant 0 : index
    %65 = vector.load %arg1[%c0_119, %c4_120, %c1_121, %c0_122] : memref<1x10x10x8xf32, #tpu.memory_space<vmem>>, vector<1x1x8x8xf32>
    %66 = vector.shape_cast %65 : vector<1x1x8x8xf32> to vector<8x8xf32>
    %c0_123 = arith.constant 0 : index
    %c4_124 = arith.constant 4 : index
    %c2_125 = arith.constant 2 : index
    %c0_126 = arith.constant 0 : index
    %67 = vector.load %arg1[%c0_123, %c4_124, %c2_125, %c0_126] : memref<1x10x10x8xf32, #tpu.memory_space<vmem>>, vector<1x1x8x8xf32>
    %68 = vector.shape_cast %67 : vector<1x1x8x8xf32> to vector<8x8xf32>
    %c0_127 = arith.constant 0 : index
    %c5 = arith.constant 5 : index
    %c0_128 = arith.constant 0 : index
    %c0_129 = arith.constant 0 : index
    %69 = vector.load %arg1[%c0_127, %c5, %c0_128, %c0_129] : memref<1x10x10x8xf32, #tpu.memory_space<vmem>>, vector<1x1x8x8xf32>
    %70 = vector.shape_cast %69 : vector<1x1x8x8xf32> to vector<8x8xf32>
    %c0_130 = arith.constant 0 : index
    %c5_131 = arith.constant 5 : index
    %c1_132 = arith.constant 1 : index
    %c0_133 = arith.constant 0 : index
    %71 = vector.load %arg1[%c0_130, %c5_131, %c1_132, %c0_133] : memref<1x10x10x8xf32, #tpu.memory_space<vmem>>, vector<1x1x8x8xf32>
    %72 = vector.shape_cast %71 : vector<1x1x8x8xf32> to vector<8x8xf32>
    %c0_134 = arith.constant 0 : index
    %c5_135 = arith.constant 5 : index
    %c2_136 = arith.constant 2 : index
    %c0_137 = arith.constant 0 : index
    %73 = vector.load %arg1[%c0_134, %c5_135, %c2_136, %c0_137] : memref<1x10x10x8xf32, #tpu.memory_space<vmem>>, vector<1x1x8x8xf32>
    %74 = vector.shape_cast %73 : vector<1x1x8x8xf32> to vector<8x8xf32>
    %75 = tpu.concatenate %58, %60, %62, %64, %66, %68, %70, %72, %74 in 1 : vector<8x8xf32>, vector<8x8xf32>, vector<8x8xf32>, vector<8x8xf32>, vector<8x8xf32>, vector<8x8xf32>, vector<8x8xf32>, vector<8x8xf32>, vector<8x8xf32> -> vector<8x72xf32>
    %c0_138 = arith.constant 0 : index
    %c4_139 = arith.constant 4 : index
    %c0_140 = arith.constant 0 : index
    %c0_141 = arith.constant 0 : index
    %76 = vector.load %arg1[%c0_138, %c4_139, %c0_140, %c0_141] : memref<1x10x10x8xf32, #tpu.memory_space<vmem>>, vector<1x1x8x8xf32>
    %77 = vector.shape_cast %76 : vector<1x1x8x8xf32> to vector<8x8xf32>
    %c0_142 = arith.constant 0 : index
    %c4_143 = arith.constant 4 : index
    %c1_144 = arith.constant 1 : index
    %c0_145 = arith.constant 0 : index
    %78 = vector.load %arg1[%c0_142, %c4_143, %c1_144, %c0_145] : memref<1x10x10x8xf32, #tpu.memory_space<vmem>>, vector<1x1x8x8xf32>
    %79 = vector.shape_cast %78 : vector<1x1x8x8xf32> to vector<8x8xf32>
    %c0_146 = arith.constant 0 : index
    %c4_147 = arith.constant 4 : index
    %c2_148 = arith.constant 2 : index
    %c0_149 = arith.constant 0 : index
    %80 = vector.load %arg1[%c0_146, %c4_147, %c2_148, %c0_149] : memref<1x10x10x8xf32, #tpu.memory_space<vmem>>, vector<1x1x8x8xf32>
    %81 = vector.shape_cast %80 : vector<1x1x8x8xf32> to vector<8x8xf32>
    %c0_150 = arith.constant 0 : index
    %c5_151 = arith.constant 5 : index
    %c0_152 = arith.constant 0 : index
    %c0_153 = arith.constant 0 : index
    %82 = vector.load %arg1[%c0_150, %c5_151, %c0_152, %c0_153] : memref<1x10x10x8xf32, #tpu.memory_space<vmem>>, vector<1x1x8x8xf32>
    %83 = vector.shape_cast %82 : vector<1x1x8x8xf32> to vector<8x8xf32>
    %c0_154 = arith.constant 0 : index
    %c5_155 = arith.constant 5 : index
    %c1_156 = arith.constant 1 : index
    %c0_157 = arith.constant 0 : index
    %84 = vector.load %arg1[%c0_154, %c5_155, %c1_156, %c0_157] : memref<1x10x10x8xf32, #tpu.memory_space<vmem>>, vector<1x1x8x8xf32>
    %85 = vector.shape_cast %84 : vector<1x1x8x8xf32> to vector<8x8xf32>
    %c0_158 = arith.constant 0 : index
    %c5_159 = arith.constant 5 : index
    %c2_160 = arith.constant 2 : index
    %c0_161 = arith.constant 0 : index
    %86 = vector.load %arg1[%c0_158, %c5_159, %c2_160, %c0_161] : memref<1x10x10x8xf32, #tpu.memory_space<vmem>>, vector<1x1x8x8xf32>
    %87 = vector.shape_cast %86 : vector<1x1x8x8xf32> to vector<8x8xf32>
    %c0_162 = arith.constant 0 : index
    %c6 = arith.constant 6 : index
    %c0_163 = arith.constant 0 : index
    %c0_164 = arith.constant 0 : index
    %88 = vector.load %arg1[%c0_162, %c6, %c0_163, %c0_164] : memref<1x10x10x8xf32, #tpu.memory_space<vmem>>, vector<1x1x8x8xf32>
    %89 = vector.shape_cast %88 : vector<1x1x8x8xf32> to vector<8x8xf32>
    %c0_165 = arith.constant 0 : index
    %c6_166 = arith.constant 6 : index
    %c1_167 = arith.constant 1 : index
    %c0_168 = arith.constant 0 : index
    %90 = vector.load %arg1[%c0_165, %c6_166, %c1_167, %c0_168] : memref<1x10x10x8xf32, #tpu.memory_space<vmem>>, vector<1x1x8x8xf32>
    %91 = vector.shape_cast %90 : vector<1x1x8x8xf32> to vector<8x8xf32>
    %c0_169 = arith.constant 0 : index
    %c6_170 = arith.constant 6 : index
    %c2_171 = arith.constant 2 : index
    %c0_172 = arith.constant 0 : index
    %92 = vector.load %arg1[%c0_169, %c6_170, %c2_171, %c0_172] : memref<1x10x10x8xf32, #tpu.memory_space<vmem>>, vector<1x1x8x8xf32>
    %93 = vector.shape_cast %92 : vector<1x1x8x8xf32> to vector<8x8xf32>
    %94 = tpu.concatenate %77, %79, %81, %83, %85, %87, %89, %91, %93 in 1 : vector<8x8xf32>, vector<8x8xf32>, vector<8x8xf32>, vector<8x8xf32>, vector<8x8xf32>, vector<8x8xf32>, vector<8x8xf32>, vector<8x8xf32>, vector<8x8xf32> -> vector<8x72xf32>
    %c0_173 = arith.constant 0 : index
    %c5_174 = arith.constant 5 : index
    %c0_175 = arith.constant 0 : index
    %c0_176 = arith.constant 0 : index
    %95 = vector.load %arg1[%c0_173, %c5_174, %c0_175, %c0_176] : memref<1x10x10x8xf32, #tpu.memory_space<vmem>>, vector<1x1x8x8xf32>
    %96 = vector.shape_cast %95 : vector<1x1x8x8xf32> to vector<8x8xf32>
    %c0_177 = arith.constant 0 : index
    %c5_178 = arith.constant 5 : index
    %c1_179 = arith.constant 1 : index
    %c0_180 = arith.constant 0 : index
    %97 = vector.load %arg1[%c0_177, %c5_178, %c1_179, %c0_180] : memref<1x10x10x8xf32, #tpu.memory_space<vmem>>, vector<1x1x8x8xf32>
    %98 = vector.shape_cast %97 : vector<1x1x8x8xf32> to vector<8x8xf32>
    %c0_181 = arith.constant 0 : index
    %c5_182 = arith.constant 5 : index
    %c2_183 = arith.constant 2 : index
    %c0_184 = arith.constant 0 : index
    %99 = vector.load %arg1[%c0_181, %c5_182, %c2_183, %c0_184] : memref<1x10x10x8xf32, #tpu.memory_space<vmem>>, vector<1x1x8x8xf32>
    %100 = vector.shape_cast %99 : vector<1x1x8x8xf32> to vector<8x8xf32>
    %c0_185 = arith.constant 0 : index
    %c6_186 = arith.constant 6 : index
    %c0_187 = arith.constant 0 : index
    %c0_188 = arith.constant 0 : index
    %101 = vector.load %arg1[%c0_185, %c6_186, %c0_187, %c0_188] : memref<1x10x10x8xf32, #tpu.memory_space<vmem>>, vector<1x1x8x8xf32>
    %102 = vector.shape_cast %101 : vector<1x1x8x8xf32> to vector<8x8xf32>
    %c0_189 = arith.constant 0 : index
    %c6_190 = arith.constant 6 : index
    %c1_191 = arith.constant 1 : index
    %c0_192 = arith.constant 0 : index
    %103 = vector.load %arg1[%c0_189, %c6_190, %c1_191, %c0_192] : memref<1x10x10x8xf32, #tpu.memory_space<vmem>>, vector<1x1x8x8xf32>
    %104 = vector.shape_cast %103 : vector<1x1x8x8xf32> to vector<8x8xf32>
    %c0_193 = arith.constant 0 : index
    %c6_194 = arith.constant 6 : index
    %c2_195 = arith.constant 2 : index
    %c0_196 = arith.constant 0 : index
    %105 = vector.load %arg1[%c0_193, %c6_194, %c2_195, %c0_196] : memref<1x10x10x8xf32, #tpu.memory_space<vmem>>, vector<1x1x8x8xf32>
    %106 = vector.shape_cast %105 : vector<1x1x8x8xf32> to vector<8x8xf32>
    %c0_197 = arith.constant 0 : index
    %c7 = arith.constant 7 : index
    %c0_198 = arith.constant 0 : index
    %c0_199 = arith.constant 0 : index
    %107 = vector.load %arg1[%c0_197, %c7, %c0_198, %c0_199] : memref<1x10x10x8xf32, #tpu.memory_space<vmem>>, vector<1x1x8x8xf32>
    %108 = vector.shape_cast %107 : vector<1x1x8x8xf32> to vector<8x8xf32>
    %c0_200 = arith.constant 0 : index
    %c7_201 = arith.constant 7 : index
    %c1_202 = arith.constant 1 : index
    %c0_203 = arith.constant 0 : index
    %109 = vector.load %arg1[%c0_200, %c7_201, %c1_202, %c0_203] : memref<1x10x10x8xf32, #tpu.memory_space<vmem>>, vector<1x1x8x8xf32>
    %110 = vector.shape_cast %109 : vector<1x1x8x8xf32> to vector<8x8xf32>
    %c0_204 = arith.constant 0 : index
    %c7_205 = arith.constant 7 : index
    %c2_206 = arith.constant 2 : index
    %c0_207 = arith.constant 0 : index
    %111 = vector.load %arg1[%c0_204, %c7_205, %c2_206, %c0_207] : memref<1x10x10x8xf32, #tpu.memory_space<vmem>>, vector<1x1x8x8xf32>
    %112 = vector.shape_cast %111 : vector<1x1x8x8xf32> to vector<8x8xf32>
    %113 = tpu.concatenate %96, %98, %100, %102, %104, %106, %108, %110, %112 in 1 : vector<8x8xf32>, vector<8x8xf32>, vector<8x8xf32>, vector<8x8xf32>, vector<8x8xf32>, vector<8x8xf32>, vector<8x8xf32>, vector<8x8xf32>, vector<8x8xf32> -> vector<8x72xf32>
    %c0_208 = arith.constant 0 : index
    %c6_209 = arith.constant 6 : index
    %c0_210 = arith.constant 0 : index
    %c0_211 = arith.constant 0 : index
    %114 = vector.load %arg1[%c0_208, %c6_209, %c0_210, %c0_211] : memref<1x10x10x8xf32, #tpu.memory_space<vmem>>, vector<1x1x8x8xf32>
    %115 = vector.shape_cast %114 : vector<1x1x8x8xf32> to vector<8x8xf32>
    %c0_212 = arith.constant 0 : index
    %c6_213 = arith.constant 6 : index
    %c1_214 = arith.constant 1 : index
    %c0_215 = arith.constant 0 : index
    %116 = vector.load %arg1[%c0_212, %c6_213, %c1_214, %c0_215] : memref<1x10x10x8xf32, #tpu.memory_space<vmem>>, vector<1x1x8x8xf32>
    %117 = vector.shape_cast %116 : vector<1x1x8x8xf32> to vector<8x8xf32>
    %c0_216 = arith.constant 0 : index
    %c6_217 = arith.constant 6 : index
    %c2_218 = arith.constant 2 : index
    %c0_219 = arith.constant 0 : index
    %118 = vector.load %arg1[%c0_216, %c6_217, %c2_218, %c0_219] : memref<1x10x10x8xf32, #tpu.memory_space<vmem>>, vector<1x1x8x8xf32>
    %119 = vector.shape_cast %118 : vector<1x1x8x8xf32> to vector<8x8xf32>
    %c0_220 = arith.constant 0 : index
    %c7_221 = arith.constant 7 : index
    %c0_222 = arith.constant 0 : index
    %c0_223 = arith.constant 0 : index
    %120 = vector.load %arg1[%c0_220, %c7_221, %c0_222, %c0_223] : memref<1x10x10x8xf32, #tpu.memory_space<vmem>>, vector<1x1x8x8xf32>
    %121 = vector.shape_cast %120 : vector<1x1x8x8xf32> to vector<8x8xf32>
    %c0_224 = arith.constant 0 : index
    %c7_225 = arith.constant 7 : index
    %c1_226 = arith.constant 1 : index
    %c0_227 = arith.constant 0 : index
    %122 = vector.load %arg1[%c0_224, %c7_225, %c1_226, %c0_227] : memref<1x10x10x8xf32, #tpu.memory_space<vmem>>, vector<1x1x8x8xf32>
    %123 = vector.shape_cast %122 : vector<1x1x8x8xf32> to vector<8x8xf32>
    %c0_228 = arith.constant 0 : index
    %c7_229 = arith.constant 7 : index
    %c2_230 = arith.constant 2 : index
    %c0_231 = arith.constant 0 : index
    %124 = vector.load %arg1[%c0_228, %c7_229, %c2_230, %c0_231] : memref<1x10x10x8xf32, #tpu.memory_space<vmem>>, vector<1x1x8x8xf32>
    %125 = vector.shape_cast %124 : vector<1x1x8x8xf32> to vector<8x8xf32>
    %c0_232 = arith.constant 0 : index
    %c8 = arith.constant 8 : index
    %c0_233 = arith.constant 0 : index
    %c0_234 = arith.constant 0 : index
    %126 = vector.load %arg1[%c0_232, %c8, %c0_233, %c0_234] : memref<1x10x10x8xf32, #tpu.memory_space<vmem>>, vector<1x1x8x8xf32>
    %127 = vector.shape_cast %126 : vector<1x1x8x8xf32> to vector<8x8xf32>
    %c0_235 = arith.constant 0 : index
    %c8_236 = arith.constant 8 : index
    %c1_237 = arith.constant 1 : index
    %c0_238 = arith.constant 0 : index
    %128 = vector.load %arg1[%c0_235, %c8_236, %c1_237, %c0_238] : memref<1x10x10x8xf32, #tpu.memory_space<vmem>>, vector<1x1x8x8xf32>
    %129 = vector.shape_cast %128 : vector<1x1x8x8xf32> to vector<8x8xf32>
    %c0_239 = arith.constant 0 : index
    %c8_240 = arith.constant 8 : index
    %c2_241 = arith.constant 2 : index
    %c0_242 = arith.constant 0 : index
    %130 = vector.load %arg1[%c0_239, %c8_240, %c2_241, %c0_242] : memref<1x10x10x8xf32, #tpu.memory_space<vmem>>, vector<1x1x8x8xf32>
    %131 = vector.shape_cast %130 : vector<1x1x8x8xf32> to vector<8x8xf32>
    %132 = tpu.concatenate %115, %117, %119, %121, %123, %125, %127, %129, %131 in 1 : vector<8x8xf32>, vector<8x8xf32>, vector<8x8xf32>, vector<8x8xf32>, vector<8x8xf32>, vector<8x8xf32>, vector<8x8xf32>, vector<8x8xf32>, vector<8x8xf32> -> vector<8x72xf32>
    %c0_243 = arith.constant 0 : index
    %c7_244 = arith.constant 7 : index
    %c0_245 = arith.constant 0 : index
    %c0_246 = arith.constant 0 : index
    %133 = vector.load %arg1[%c0_243, %c7_244, %c0_245, %c0_246] : memref<1x10x10x8xf32, #tpu.memory_space<vmem>>, vector<1x1x8x8xf32>
    %134 = vector.shape_cast %133 : vector<1x1x8x8xf32> to vector<8x8xf32>
    %c0_247 = arith.constant 0 : index
    %c7_248 = arith.constant 7 : index
    %c1_249 = arith.constant 1 : index
    %c0_250 = arith.constant 0 : index
    %135 = vector.load %arg1[%c0_247, %c7_248, %c1_249, %c0_250] : memref<1x10x10x8xf32, #tpu.memory_space<vmem>>, vector<1x1x8x8xf32>
    %136 = vector.shape_cast %135 : vector<1x1x8x8xf32> to vector<8x8xf32>
    %c0_251 = arith.constant 0 : index
    %c7_252 = arith.constant 7 : index
    %c2_253 = arith.constant 2 : index
    %c0_254 = arith.constant 0 : index
    %137 = vector.load %arg1[%c0_251, %c7_252, %c2_253, %c0_254] : memref<1x10x10x8xf32, #tpu.memory_space<vmem>>, vector<1x1x8x8xf32>
    %138 = vector.shape_cast %137 : vector<1x1x8x8xf32> to vector<8x8xf32>
    %c0_255 = arith.constant 0 : index
    %c8_256 = arith.constant 8 : index
    %c0_257 = arith.constant 0 : index
    %c0_258 = arith.constant 0 : index
    %139 = vector.load %arg1[%c0_255, %c8_256, %c0_257, %c0_258] : memref<1x10x10x8xf32, #tpu.memory_space<vmem>>, vector<1x1x8x8xf32>
    %140 = vector.shape_cast %139 : vector<1x1x8x8xf32> to vector<8x8xf32>
    %c0_259 = arith.constant 0 : index
    %c8_260 = arith.constant 8 : index
    %c1_261 = arith.constant 1 : index
    %c0_262 = arith.constant 0 : index
    %141 = vector.load %arg1[%c0_259, %c8_260, %c1_261, %c0_262] : memref<1x10x10x8xf32, #tpu.memory_space<vmem>>, vector<1x1x8x8xf32>
    %142 = vector.shape_cast %141 : vector<1x1x8x8xf32> to vector<8x8xf32>
    %c0_263 = arith.constant 0 : index
    %c8_264 = arith.constant 8 : index
    %c2_265 = arith.constant 2 : index
    %c0_266 = arith.constant 0 : index
    %143 = vector.load %arg1[%c0_263, %c8_264, %c2_265, %c0_266] : memref<1x10x10x8xf32, #tpu.memory_space<vmem>>, vector<1x1x8x8xf32>
    %144 = vector.shape_cast %143 : vector<1x1x8x8xf32> to vector<8x8xf32>
    %c0_267 = arith.constant 0 : index
    %c9 = arith.constant 9 : index
    %c0_268 = arith.constant 0 : index
    %c0_269 = arith.constant 0 : index
    %145 = vector.load %arg1[%c0_267, %c9, %c0_268, %c0_269] : memref<1x10x10x8xf32, #tpu.memory_space<vmem>>, vector<1x1x8x8xf32>
    %146 = vector.shape_cast %145 : vector<1x1x8x8xf32> to vector<8x8xf32>
    %c0_270 = arith.constant 0 : index
    %c9_271 = arith.constant 9 : index
    %c1_272 = arith.constant 1 : index
    %c0_273 = arith.constant 0 : index
    %147 = vector.load %arg1[%c0_270, %c9_271, %c1_272, %c0_273] : memref<1x10x10x8xf32, #tpu.memory_space<vmem>>, vector<1x1x8x8xf32>
    %148 = vector.shape_cast %147 : vector<1x1x8x8xf32> to vector<8x8xf32>
    %c0_274 = arith.constant 0 : index
    %c9_275 = arith.constant 9 : index
    %c2_276 = arith.constant 2 : index
    %c0_277 = arith.constant 0 : index
    %149 = vector.load %arg1[%c0_274, %c9_275, %c2_276, %c0_277] : memref<1x10x10x8xf32, #tpu.memory_space<vmem>>, vector<1x1x8x8xf32>
    %150 = vector.shape_cast %149 : vector<1x1x8x8xf32> to vector<8x8xf32>
    %151 = tpu.concatenate %134, %136, %138, %140, %142, %144, %146, %148, %150 in 1 : vector<8x8xf32>, vector<8x8xf32>, vector<8x8xf32>, vector<8x8xf32>, vector<8x8xf32>, vector<8x8xf32>, vector<8x8xf32>, vector<8x8xf32>, vector<8x8xf32> -> vector<8x72xf32>
    %152 = tpu.concatenate %18, %37, %56, %75, %94, %113, %132, %151 in 0 : vector<8x72xf32>, vector<8x72xf32>, vector<8x72xf32>, vector<8x72xf32>, vector<8x72xf32>, vector<8x72xf32>, vector<8x72xf32>, vector<8x72xf32> -> vector<64x72xf32>
    %153 = arith.truncf %152 : vector<64x72xf32> to vector<64x72xbf16>
    %c0_278 = arith.constant 0 : index
    %c0_279 = arith.constant 0 : index
    %154 = vector.load %arg2[%c0_278, %c0_279] : memref<72x16xbf16, #tpu.memory_space<vmem>>, vector<72x16xbf16>
    %cst = arith.constant dense<0.000000e+00> : vector<64x16xf32>
    %155 = tpu.matmul %153, %154, %cst {dimension_numbers = #tpu.dot_dimension_numbers<[1], [0], [0], [1], [0, 0, 1, 1], [], []>} : vector<64x72xbf16>, vector<72x16xbf16>, vector<64x16xf32> -> vector<64x16xf32>
    %c0_280 = arith.constant 0 : index
    %c0_281 = arith.constant 0 : index
    %156 = vector.load %arg3[%c0_280, %c0_281] : memref<1x16xf32, #tpu.memory_space<vmem>>, vector<1x16xf32>
    %157 = vector.broadcast %156 : vector<1x16xf32> to vector<64x16xf32>
    %158 = arith.addf %155, %157 : vector<64x16xf32>
    %cst_282 = arith.constant 0.000000e+00 : f32
    %159 = vector.broadcast %cst_282 : f32 to vector<64x16xf32>
    %160 = arith.maximumf %158, %159 : vector<64x16xf32>
    %c0_283 = arith.constant 0 : index
    %c0_284 = arith.constant 0 : index
    %161 = vector.load %arg4[%c0_283, %c0_284] : memref<16x64xf32, #tpu.memory_space<vmem>>, vector<16x64xf32>
    %cst_285 = arith.constant dense<0.000000e+00> : vector<16x16xf32>
    %162 = tpu.matmul %161, %160, %cst_285 {dimension_numbers = #tpu.dot_dimension_numbers<[1], [0], [0], [1], [0, 0, 1, 1], [], []>} : vector<16x64xf32>, vector<64x16xf32>, vector<16x16xf32> -> vector<16x16xf32>
    %cst_286 = arith.constant 0.000000e+00 : f32
    %163 = vector.broadcast %cst_286 : f32 to vector<1x6x6x16xf32>
    %c0_287 = arith.constant 0 : index
    %c0_288 = arith.constant 0 : index
    %c0_289 = arith.constant 0 : index
    %c0_290 = arith.constant 0 : index
    %164 = vector.load %arg6[%c0_287, %c0_288, %c0_289, %c0_290] : memref<1x6x6x16xf32, #tpu.memory_space<vmem>>, vector<1x6x6x16xf32>
    tpu.vector_store %arg6[%c0_287, %c0_288, %c0_289, %c0_290], %163 {strides = array<i32>} : memref<1x6x6x16xf32, #tpu.memory_space<vmem>>, vector<1x6x6x16xf32>,
    %165 = vector.extract_strided_slice %162 {offsets = [0, 0], sizes = [4, 16], strides = [1, 1]} : vector<16x16xf32> to vector<4x16xf32>
    %c0_291 = arith.constant 0 : index
    %c1_292 = arith.constant 1 : index
    %c1_293 = arith.constant 1 : index
    %c0_294 = arith.constant 0 : index
    %166 = vector.load %arg6[%c0_291, %c1_292, %c1_293, %c0_294] : memref<1x6x6x16xf32, #tpu.memory_space<vmem>>, vector<1x1x4x16xf32>
    %167 = vector.shape_cast %166 : vector<1x1x4x16xf32> to vector<4x16xf32>
    %168 = vector.shape_cast %165 : vector<4x16xf32> to vector<1x1x4x16xf32>
    tpu.vector_store %arg6[%c0_291, %c1_292, %c1_293, %c0_294], %168 {strides = array<i32>} : memref<1x6x6x16xf32, #tpu.memory_space<vmem>>, vector<1x1x4x16xf32>,
    %169 = vector.extract_strided_slice %162 {offsets = [4, 0], sizes = [4, 16], strides = [1, 1]} : vector<16x16xf32> to vector<4x16xf32>
    %c0_295 = arith.constant 0 : index
    %c2_296 = arith.constant 2 : index
    %c1_297 = arith.constant 1 : index
    %c0_298 = arith.constant 0 : index
    %170 = vector.load %arg6[%c0_295, %c2_296, %c1_297, %c0_298] : memref<1x6x6x16xf32, #tpu.memory_space<vmem>>, vector<1x1x4x16xf32>
    %171 = vector.shape_cast %170 : vector<1x1x4x16xf32> to vector<4x16xf32>
    %172 = vector.shape_cast %169 : vector<4x16xf32> to vector<1x1x4x16xf32>
    tpu.vector_store %arg6[%c0_295, %c2_296, %c1_297, %c0_298], %172 {strides = array<i32>} : memref<1x6x6x16xf32, #tpu.memory_space<vmem>>, vector<1x1x4x16xf32>,
    %173 = vector.extract_strided_slice %162 {offsets = [8, 0], sizes = [4, 16], strides = [1, 1]} : vector<16x16xf32> to vector<4x16xf32>
    %c0_299 = arith.constant 0 : index
    %c3_300 = arith.constant 3 : index
    %c1_301 = arith.constant 1 : index
    %c0_302 = arith.constant 0 : index
    %174 = vector.load %arg6[%c0_299, %c3_300, %c1_301, %c0_302] : memref<1x6x6x16xf32, #tpu.memory_space<vmem>>, vector<1x1x4x16xf32>
    %175 = vector.shape_cast %174 : vector<1x1x4x16xf32> to vector<4x16xf32>
    %176 = vector.shape_cast %173 : vector<4x16xf32> to vector<1x1x4x16xf32>
    tpu.vector_store %arg6[%c0_299, %c3_300, %c1_301, %c0_302], %176 {strides = array<i32>} : memref<1x6x6x16xf32, #tpu.memory_space<vmem>>, vector<1x1x4x16xf32>,
    %177 = vector.extract_strided_slice %162 {offsets = [12, 0], sizes = [4, 16], strides = [1, 1]} : vector<16x16xf32> to vector<4x16xf32>
    %c0_303 = arith.constant 0 : index
    %c4_304 = arith.constant 4 : index
    %c1_305 = arith.constant 1 : index
    %c0_306 = arith.constant 0 : index
    %178 = vector.load %arg6[%c0_303, %c4_304, %c1_305, %c0_306] : memref<1x6x6x16xf32, #tpu.memory_space<vmem>>, vector<1x1x4x16xf32>
    %179 = vector.shape_cast %178 : vector<1x1x4x16xf32> to vector<4x16xf32>
    %180 = vector.shape_cast %177 : vector<4x16xf32> to vector<1x1x4x16xf32>
    tpu.vector_store %arg6[%c0_303, %c4_304, %c1_305, %c0_306], %180 {strides = array<i32>} : memref<1x6x6x16xf32, #tpu.memory_space<vmem>>, vector<1x1x4x16xf32>,
    %c0_307 = arith.constant 0 : index
    %c0_308 = arith.constant 0 : index
    %c0_309 = arith.constant 0 : index
    %c0_310 = arith.constant 0 : index
    %181 = vector.load %arg6[%c0_307, %c0_308, %c0_309, %c0_310] : memref<1x6x6x16xf32, #tpu.memory_space<vmem>>, vector<1x6x6x16xf32>
    %182 = vector.shape_cast %181 : vector<1x6x6x16xf32> to vector<6x6x16xf32>
    %183 = vector.extract_strided_slice %182 {offsets = [2, 1, 0], sizes = [1, 4, 16], strides = [1, 1, 1]} : vector<6x6x16xf32> to vector<1x4x16xf32>
    %184 = vector.shape_cast %183 : vector<1x4x16xf32> to vector<4x16xf32>
    %185 = vector.extract_strided_slice %182 {offsets = [1, 1, 0], sizes = [1, 4, 16], strides = [1, 1, 1]} : vector<6x6x16xf32> to vector<1x4x16xf32>
    %186 = vector.shape_cast %185 : vector<1x4x16xf32> to vector<4x16xf32>
    %187 = vector.extract_strided_slice %182 {offsets = [0, 1, 0], sizes = [1, 4, 16], strides = [1, 1, 1]} : vector<6x6x16xf32> to vector<1x4x16xf32>
    %188 = vector.shape_cast %187 : vector<1x4x16xf32> to vector<4x16xf32>
    %189 = vector.extract_strided_slice %182 {offsets = [2, 0, 0], sizes = [1, 4, 16], strides = [1, 1, 1]} : vector<6x6x16xf32> to vector<1x4x16xf32>
    %190 = vector.shape_cast %189 : vector<1x4x16xf32> to vector<4x16xf32>
    %191 = vector.extract_strided_slice %182 {offsets = [1, 0, 0], sizes = [1, 4, 16], strides = [1, 1, 1]} : vector<6x6x16xf32> to vector<1x4x16xf32>
    %192 = vector.shape_cast %191 : vector<1x4x16xf32> to vector<4x16xf32>
    %193 = vector.extract_strided_slice %182 {offsets = [0, 0, 0], sizes = [1, 4, 16], strides = [1, 1, 1]} : vector<6x6x16xf32> to vector<1x4x16xf32>
    %194 = vector.shape_cast %193 : vector<1x4x16xf32> to vector<4x16xf32>
    %195 = tpu.concatenate %184, %186, %188, %190, %192, %194 in 1 : vector<4x16xf32>, vector<4x16xf32>, vector<4x16xf32>, vector<4x16xf32>, vector<4x16xf32>, vector<4x16xf32> -> vector<4x96xf32>
    %196 = arith.truncf %195 : vector<4x96xf32> to vector<4x96xbf16>
    %c0_311 = arith.constant 0 : index
    %c0_312 = arith.constant 0 : index
    %197 = vector.load %arg5[%c0_311, %c0_312] : memref<96x16xbf16, #tpu.memory_space<vmem>>, vector<96x16xbf16>
    %cst_313 = arith.constant dense<0.000000e+00> : vector<4x16xf32>
    %198 = tpu.matmul %196, %197, %cst_313 {dimension_numbers = #tpu.dot_dimension_numbers<[1], [0], [0], [1], [0, 0, 1, 1], [], []>} : vector<4x96xbf16>, vector<96x16xbf16>, vector<4x16xf32> -> vector<4x16xf32>
    %c0_314 = arith.constant 0 : index
    %c0_315 = arith.constant 0 : index
    %c0_316 = arith.constant 0 : index
    %c0_317 = arith.constant 0 : index
    %199 = vector.load %arg7[%c0_314, %c0_315, %c0_316, %c0_317] : memref<1x4x4x16xf32, #tpu.memory_space<vmem>>, vector<1x1x4x16xf32>
    %200 = vector.shape_cast %199 : vector<1x1x4x16xf32> to vector<4x16xf32>
    %201 = vector.shape_cast %198 : vector<4x16xf32> to vector<1x1x4x16xf32>
    tpu.vector_store %arg7[%c0_314, %c0_315, %c0_316, %c0_317], %201 {strides = array<i32>} : memref<1x4x4x16xf32, #tpu.memory_space<vmem>>, vector<1x1x4x16xf32>,
    %202 = vector.extract_strided_slice %182 {offsets = [3, 1, 0], sizes = [1, 4, 16], strides = [1, 1, 1]} : vector<6x6x16xf32> to vector<1x4x16xf32>
    %203 = vector.shape_cast %202 : vector<1x4x16xf32> to vector<4x16xf32>
    %204 = vector.extract_strided_slice %182 {offsets = [2, 1, 0], sizes = [1, 4, 16], strides = [1, 1, 1]} : vector<6x6x16xf32> to vector<1x4x16xf32>
    %205 = vector.shape_cast %204 : vector<1x4x16xf32> to vector<4x16xf32>
    %206 = vector.extract_strided_slice %182 {offsets = [1, 1, 0], sizes = [1, 4, 16], strides = [1, 1, 1]} : vector<6x6x16xf32> to vector<1x4x16xf32>
    %207 = vector.shape_cast %206 : vector<1x4x16xf32> to vector<4x16xf32>
    %208 = vector.extract_strided_slice %182 {offsets = [3, 0, 0], sizes = [1, 4, 16], strides = [1, 1, 1]} : vector<6x6x16xf32> to vector<1x4x16xf32>
    %209 = vector.shape_cast %208 : vector<1x4x16xf32> to vector<4x16xf32>
    %210 = vector.extract_strided_slice %182 {offsets = [2, 0, 0], sizes = [1, 4, 16], strides = [1, 1, 1]} : vector<6x6x16xf32> to vector<1x4x16xf32>
    %211 = vector.shape_cast %210 : vector<1x4x16xf32> to vector<4x16xf32>
    %212 = vector.extract_strided_slice %182 {offsets = [1, 0, 0], sizes = [1, 4, 16], strides = [1, 1, 1]} : vector<6x6x16xf32> to vector<1x4x16xf32>
    %213 = vector.shape_cast %212 : vector<1x4x16xf32> to vector<4x16xf32>
    %214 = tpu.concatenate %203, %205, %207, %209, %211, %213 in 1 : vector<4x16xf32>, vector<4x16xf32>, vector<4x16xf32>, vector<4x16xf32>, vector<4x16xf32>, vector<4x16xf32> -> vector<4x96xf32>
    %215 = arith.truncf %214 : vector<4x96xf32> to vector<4x96xbf16>
    %c0_318 = arith.constant 0 : index
    %c0_319 = arith.constant 0 : index
    %216 = vector.load %arg5[%c0_318, %c0_319] : memref<96x16xbf16, #tpu.memory_space<vmem>>, vector<96x16xbf16>
    %cst_320 = arith.constant dense<0.000000e+00> : vector<4x16xf32>
    %217 = tpu.matmul %215, %216, %cst_320 {dimension_numbers = #tpu.dot_dimension_numbers<[1], [0], [0], [1], [0, 0, 1, 1], [], []>} : vector<4x96xbf16>, vector<96x16xbf16>, vector<4x16xf32> -> vector<4x16xf32>
    %c0_321 = arith.constant 0 : index
    %c1_322 = arith.constant 1 : index
    %c0_323 = arith.constant 0 : index
    %c0_324 = arith.constant 0 : index
    %218 = vector.load %arg7[%c0_321, %c1_322, %c0_323, %c0_324] : memref<1x4x4x16xf32, #tpu.memory_space<vmem>>, vector<1x1x4x16xf32>
    %219 = vector.shape_cast %218 : vector<1x1x4x16xf32> to vector<4x16xf32>
    %220 = vector.shape_cast %217 : vector<4x16xf32> to vector<1x1x4x16xf32>
    tpu.vector_store %arg7[%c0_321, %c1_322, %c0_323, %c0_324], %220 {strides = array<i32>} : memref<1x4x4x16xf32, #tpu.memory_space<vmem>>, vector<1x1x4x16xf32>,
    %221 = vector.extract_strided_slice %182 {offsets = [4, 1, 0], sizes = [1, 4, 16], strides = [1, 1, 1]} : vector<6x6x16xf32> to vector<1x4x16xf32>
    %222 = vector.shape_cast %221 : vector<1x4x16xf32> to vector<4x16xf32>
    %223 = vector.extract_strided_slice %182 {offsets = [3, 1, 0], sizes = [1, 4, 16], strides = [1, 1, 1]} : vector<6x6x16xf32> to vector<1x4x16xf32>
    %224 = vector.shape_cast %223 : vector<1x4x16xf32> to vector<4x16xf32>
    %225 = vector.extract_strided_slice %182 {offsets = [2, 1, 0], sizes = [1, 4, 16], strides = [1, 1, 1]} : vector<6x6x16xf32> to vector<1x4x16xf32>
    %226 = vector.shape_cast %225 : vector<1x4x16xf32> to vector<4x16xf32>
    %227 = vector.extract_strided_slice %182 {offsets = [4, 0, 0], sizes = [1, 4, 16], strides = [1, 1, 1]} : vector<6x6x16xf32> to vector<1x4x16xf32>
    %228 = vector.shape_cast %227 : vector<1x4x16xf32> to vector<4x16xf32>
    %229 = vector.extract_strided_slice %182 {offsets = [3, 0, 0], sizes = [1, 4, 16], strides = [1, 1, 1]} : vector<6x6x16xf32> to vector<1x4x16xf32>
    %230 = vector.shape_cast %229 : vector<1x4x16xf32> to vector<4x16xf32>
    %231 = vector.extract_strided_slice %182 {offsets = [2, 0, 0], sizes = [1, 4, 16], strides = [1, 1, 1]} : vector<6x6x16xf32> to vector<1x4x16xf32>
    %232 = vector.shape_cast %231 : vector<1x4x16xf32> to vector<4x16xf32>
    %233 = tpu.concatenate %222, %224, %226, %228, %230, %232 in 1 : vector<4x16xf32>, vector<4x16xf32>, vector<4x16xf32>, vector<4x16xf32>, vector<4x16xf32>, vector<4x16xf32> -> vector<4x96xf32>
    %234 = arith.truncf %233 : vector<4x96xf32> to vector<4x96xbf16>
    %c0_325 = arith.constant 0 : index
    %c0_326 = arith.constant 0 : index
    %235 = vector.load %arg5[%c0_325, %c0_326] : memref<96x16xbf16, #tpu.memory_space<vmem>>, vector<96x16xbf16>
    %cst_327 = arith.constant dense<0.000000e+00> : vector<4x16xf32>
    %236 = tpu.matmul %234, %235, %cst_327 {dimension_numbers = #tpu.dot_dimension_numbers<[1], [0], [0], [1], [0, 0, 1, 1], [], []>} : vector<4x96xbf16>, vector<96x16xbf16>, vector<4x16xf32> -> vector<4x16xf32>
    %c0_328 = arith.constant 0 : index
    %c2_329 = arith.constant 2 : index
    %c0_330 = arith.constant 0 : index
    %c0_331 = arith.constant 0 : index
    %237 = vector.load %arg7[%c0_328, %c2_329, %c0_330, %c0_331] : memref<1x4x4x16xf32, #tpu.memory_space<vmem>>, vector<1x1x4x16xf32>
    %238 = vector.shape_cast %237 : vector<1x1x4x16xf32> to vector<4x16xf32>
    %239 = vector.shape_cast %236 : vector<4x16xf32> to vector<1x1x4x16xf32>
    tpu.vector_store %arg7[%c0_328, %c2_329, %c0_330, %c0_331], %239 {strides = array<i32>} : memref<1x4x4x16xf32, #tpu.memory_space<vmem>>, vector<1x1x4x16xf32>,
    %240 = vector.extract_strided_slice %182 {offsets = [5, 1, 0], sizes = [1, 4, 16], strides = [1, 1, 1]} : vector<6x6x16xf32> to vector<1x4x16xf32>
    %241 = vector.shape_cast %240 : vector<1x4x16xf32> to vector<4x16xf32>
    %242 = vector.extract_strided_slice %182 {offsets = [4, 1, 0], sizes = [1, 4, 16], strides = [1, 1, 1]} : vector<6x6x16xf32> to vector<1x4x16xf32>
    %243 = vector.shape_cast %242 : vector<1x4x16xf32> to vector<4x16xf32>
    %244 = vector.extract_strided_slice %182 {offsets = [3, 1, 0], sizes = [1, 4, 16], strides = [1, 1, 1]} : vector<6x6x16xf32> to vector<1x4x16xf32>
    %245 = vector.shape_cast %244 : vector<1x4x16xf32> to vector<4x16xf32>
    %246 = vector.extract_strided_slice %182 {offsets = [5, 0, 0], sizes = [1, 4, 16], strides = [1, 1, 1]} : vector<6x6x16xf32> to vector<1x4x16xf32>
    %247 = vector.shape_cast %246 : vector<1x4x16xf32> to vector<4x16xf32>
    %248 = vector.extract_strided_slice %182 {offsets = [4, 0, 0], sizes = [1, 4, 16], strides = [1, 1, 1]} : vector<6x6x16xf32> to vector<1x4x16xf32>
    %249 = vector.shape_cast %248 : vector<1x4x16xf32> to vector<4x16xf32>
    %250 = vector.extract_strided_slice %182 {offsets = [3, 0, 0], sizes = [1, 4, 16], strides = [1, 1, 1]} : vector<6x6x16xf32> to vector<1x4x16xf32>
    %251 = vector.shape_cast %250 : vector<1x4x16xf32> to vector<4x16xf32>
    %252 = tpu.concatenate %241, %243, %245, %247, %249, %251 in 1 : vector<4x16xf32>, vector<4x16xf32>, vector<4x16xf32>, vector<4x16xf32>, vector<4x16xf32>, vector<4x16xf32> -> vector<4x96xf32>
    %253 = arith.truncf %252 : vector<4x96xf32> to vector<4x96xbf16>
    %c0_332 = arith.constant 0 : index
    %c0_333 = arith.constant 0 : index
    %254 = vector.load %arg5[%c0_332, %c0_333] : memref<96x16xbf16, #tpu.memory_space<vmem>>, vector<96x16xbf16>
    %cst_334 = arith.constant dense<0.000000e+00> : vector<4x16xf32>
    %255 = tpu.matmul %253, %254, %cst_334 {dimension_numbers = #tpu.dot_dimension_numbers<[1], [0], [0], [1], [0, 0, 1, 1], [], []>} : vector<4x96xbf16>, vector<96x16xbf16>, vector<4x16xf32> -> vector<4x16xf32>
    %c0_335 = arith.constant 0 : index
    %c3_336 = arith.constant 3 : index
    %c0_337 = arith.constant 0 : index
    %c0_338 = arith.constant 0 : index
    %256 = vector.load %arg7[%c0_335, %c3_336, %c0_337, %c0_338] : memref<1x4x4x16xf32, #tpu.memory_space<vmem>>, vector<1x1x4x16xf32>
    %257 = vector.shape_cast %256 : vector<1x1x4x16xf32> to vector<4x16xf32>
    %258 = vector.shape_cast %255 : vector<4x16xf32> to vector<1x1x4x16xf32>
    tpu.vector_store %arg7[%c0_335, %c3_336, %c0_337, %c0_338], %258 {strides = array<i32>} : memref<1x4x4x16xf32, #tpu.memory_space<vmem>>, vector<1x1x4x16xf32>,
    return
  }
  func.func @transform_0(%arg0: i32) -> (i32, i32, i32, i32) {
    %c0_i32 = arith.constant 0 : i32
    %c0_i32_0 = arith.constant 0 : i32
    %c0_i32_1 = arith.constant 0 : i32
    %c0_i32_2 = arith.constant 0 : i32
    return %arg0, %c0_i32, %c0_i32_0, %c0_i32_1 : i32, i32, i32, i32
  }
  func.func @transform_1(%arg0: i32) -> (i32, i32) {
    %c0_i32 = arith.constant 0 : i32
    %c0_i32_0 = arith.constant 0 : i32
    %c0_i32_1 = arith.constant 0 : i32
    return %c0_i32, %c0_i32_0 : i32, i32
  }
  func.func @transform_2(%arg0: i32) -> (i32, i32) {
    %c0_i32 = arith.constant 0 : i32
    %c0_i32_0 = arith.constant 0 : i32
    %c0_i32_1 = arith.constant 0 : i32
    return %c0_i32, %c0_i32_0 : i32, i32
  }
  func.func @transform_3(%arg0: i32) -> (i32, i32) {
    %c0_i32 = arith.constant 0 : i32
    %c0_i32_0 = arith.constant 0 : i32
    %c0_i32_1 = arith.constant 0 : i32
    return %c0_i32, %c0_i32_0 : i32, i32
  }
  func.func @transform_4(%arg0: i32) -> (i32, i32) {
    %c0_i32 = arith.constant 0 : i32
    %c0_i32_0 = arith.constant 0 : i32
    %c0_i32_1 = arith.constant 0 : i32
    return %c0_i32, %c0_i32_0 : i32, i32
  }
  func.func @transform_5(%arg0: i32) -> (i32, i32, i32, i32) {
    %c0_i32 = arith.constant 0 : i32
    %c0_i32_0 = arith.constant 0 : i32
    %c0_i32_1 = arith.constant 0 : i32
    %c0_i32_2 = arith.constant 0 : i32
    return %arg0, %c0_i32, %c0_i32_0, %c0_i32_1 : i32, i32, i32, i32
  }
  func.func @transform_6(%arg0: i32) -> (i32, i32, i32, i32) {
    %c0_i32 = arith.constant 0 : i32
    %c0_i32_0 = arith.constant 0 : i32
    %c0_i32_1 = arith.constant 0 : i32
    %c0_i32_2 = arith.constant 0 : i32
    return %arg0, %c0_i32, %c0_i32_0, %c0_i32_1 : i32, i32, i32, i32
  }
}

module attributes {stable_mosaic.version = 11 : i64} {
  func.func @kernel(%arg0: i32, %arg1: memref<1x18x18x4xf32, #tpu.memory_space<vmem>>, %arg2: memref<36x8xbf16, #tpu.memory_space<vmem>>, %arg3: memref<1x8xf32, #tpu.memory_space<vmem>>, %arg4: memref<64x256xf32, #tpu.memory_space<vmem>>, %arg5: memref<48x16xbf16, #tpu.memory_space<vmem>>, %arg6: memref<1x10x10x8xf32, #tpu.memory_space<vmem>>, %arg7: memref<1x8x8x16xf32, #tpu.memory_space<vmem>>) attributes {dimension_semantics = [#tpu.dimension_semantics<parallel>], iteration_bounds = array<i64: 2>, scalar_prefetch = 0 : i64, scratch_operands = 0 : i64, tpu.core_type = #tpu.core_type<tc>, window_params = [{transform_indices = @transform_0, window_bounds = array<i64: 1, 18, 18, 4>}, {pipeline_mode = #tpu.pipeline_mode<synchronous>, transform_indices = @transform_1, window_bounds = array<i64: 36, 8>}, {pipeline_mode = #tpu.pipeline_mode<synchronous>, transform_indices = @transform_2, window_bounds = array<i64: 1, 8>}, {pipeline_mode = #tpu.pipeline_mode<synchronous>, transform_indices = @transform_3, window_bounds = array<i64: 64, 256>}, {pipeline_mode = #tpu.pipeline_mode<synchronous>, transform_indices = @transform_4, window_bounds = array<i64: 48, 16>}, {transform_indices = @transform_5, window_bounds = array<i64: 1, 10, 10, 8>}, {transform_indices = @transform_6, window_bounds = array<i64: 1, 8, 8, 16>}]} {
    %c0 = arith.constant 0 : index
    %c0_0 = arith.constant 0 : index
    %c0_1 = arith.constant 0 : index
    %c0_2 = arith.constant 0 : index
    %0 = vector.load %arg1[%c0, %c0_0, %c0_1, %c0_2] : memref<1x18x18x4xf32, #tpu.memory_space<vmem>>, vector<1x1x16x4xf32>
    %1 = vector.shape_cast %0 : vector<1x1x16x4xf32> to vector<16x4xf32>
    %c0_3 = arith.constant 0 : index
    %c0_4 = arith.constant 0 : index
    %c1 = arith.constant 1 : index
    %c0_5 = arith.constant 0 : index
    %2 = vector.load %arg1[%c0_3, %c0_4, %c1, %c0_5] : memref<1x18x18x4xf32, #tpu.memory_space<vmem>>, vector<1x1x16x4xf32>
    %3 = vector.shape_cast %2 : vector<1x1x16x4xf32> to vector<16x4xf32>
    %c0_6 = arith.constant 0 : index
    %c0_7 = arith.constant 0 : index
    %c2 = arith.constant 2 : index
    %c0_8 = arith.constant 0 : index
    %4 = vector.load %arg1[%c0_6, %c0_7, %c2, %c0_8] : memref<1x18x18x4xf32, #tpu.memory_space<vmem>>, vector<1x1x16x4xf32>
    %5 = vector.shape_cast %4 : vector<1x1x16x4xf32> to vector<16x4xf32>
    %c0_9 = arith.constant 0 : index
    %c1_10 = arith.constant 1 : index
    %c0_11 = arith.constant 0 : index
    %c0_12 = arith.constant 0 : index
    %6 = vector.load %arg1[%c0_9, %c1_10, %c0_11, %c0_12] : memref<1x18x18x4xf32, #tpu.memory_space<vmem>>, vector<1x1x16x4xf32>
    %7 = vector.shape_cast %6 : vector<1x1x16x4xf32> to vector<16x4xf32>
    %c0_13 = arith.constant 0 : index
    %c1_14 = arith.constant 1 : index
    %c1_15 = arith.constant 1 : index
    %c0_16 = arith.constant 0 : index
    %8 = vector.load %arg1[%c0_13, %c1_14, %c1_15, %c0_16] : memref<1x18x18x4xf32, #tpu.memory_space<vmem>>, vector<1x1x16x4xf32>
    %9 = vector.shape_cast %8 : vector<1x1x16x4xf32> to vector<16x4xf32>
    %c0_17 = arith.constant 0 : index
    %c1_18 = arith.constant 1 : index
    %c2_19 = arith.constant 2 : index
    %c0_20 = arith.constant 0 : index
    %10 = vector.load %arg1[%c0_17, %c1_18, %c2_19, %c0_20] : memref<1x18x18x4xf32, #tpu.memory_space<vmem>>, vector<1x1x16x4xf32>
    %11 = vector.shape_cast %10 : vector<1x1x16x4xf32> to vector<16x4xf32>
    %c0_21 = arith.constant 0 : index
    %c2_22 = arith.constant 2 : index
    %c0_23 = arith.constant 0 : index
    %c0_24 = arith.constant 0 : index
    %12 = vector.load %arg1[%c0_21, %c2_22, %c0_23, %c0_24] : memref<1x18x18x4xf32, #tpu.memory_space<vmem>>, vector<1x1x16x4xf32>
    %13 = vector.shape_cast %12 : vector<1x1x16x4xf32> to vector<16x4xf32>
    %c0_25 = arith.constant 0 : index
    %c2_26 = arith.constant 2 : index
    %c1_27 = arith.constant 1 : index
    %c0_28 = arith.constant 0 : index
    %14 = vector.load %arg1[%c0_25, %c2_26, %c1_27, %c0_28] : memref<1x18x18x4xf32, #tpu.memory_space<vmem>>, vector<1x1x16x4xf32>
    %15 = vector.shape_cast %14 : vector<1x1x16x4xf32> to vector<16x4xf32>
    %c0_29 = arith.constant 0 : index
    %c2_30 = arith.constant 2 : index
    %c2_31 = arith.constant 2 : index
    %c0_32 = arith.constant 0 : index
    %16 = vector.load %arg1[%c0_29, %c2_30, %c2_31, %c0_32] : memref<1x18x18x4xf32, #tpu.memory_space<vmem>>, vector<1x1x16x4xf32>
    %17 = vector.shape_cast %16 : vector<1x1x16x4xf32> to vector<16x4xf32>
    %18 = tpu.concatenate %1, %3, %5, %7, %9, %11, %13, %15, %17 in 1 : vector<16x4xf32>, vector<16x4xf32>, vector<16x4xf32>, vector<16x4xf32>, vector<16x4xf32>, vector<16x4xf32>, vector<16x4xf32>, vector<16x4xf32>, vector<16x4xf32> -> vector<16x36xf32>
    %c0_33 = arith.constant 0 : index
    %c1_34 = arith.constant 1 : index
    %c0_35 = arith.constant 0 : index
    %c0_36 = arith.constant 0 : index
    %19 = vector.load %arg1[%c0_33, %c1_34, %c0_35, %c0_36] : memref<1x18x18x4xf32, #tpu.memory_space<vmem>>, vector<1x1x16x4xf32>
    %20 = vector.shape_cast %19 : vector<1x1x16x4xf32> to vector<16x4xf32>
    %c0_37 = arith.constant 0 : index
    %c1_38 = arith.constant 1 : index
    %c1_39 = arith.constant 1 : index
    %c0_40 = arith.constant 0 : index
    %21 = vector.load %arg1[%c0_37, %c1_38, %c1_39, %c0_40] : memref<1x18x18x4xf32, #tpu.memory_space<vmem>>, vector<1x1x16x4xf32>
    %22 = vector.shape_cast %21 : vector<1x1x16x4xf32> to vector<16x4xf32>
    %c0_41 = arith.constant 0 : index
    %c1_42 = arith.constant 1 : index
    %c2_43 = arith.constant 2 : index
    %c0_44 = arith.constant 0 : index
    %23 = vector.load %arg1[%c0_41, %c1_42, %c2_43, %c0_44] : memref<1x18x18x4xf32, #tpu.memory_space<vmem>>, vector<1x1x16x4xf32>
    %24 = vector.shape_cast %23 : vector<1x1x16x4xf32> to vector<16x4xf32>
    %c0_45 = arith.constant 0 : index
    %c2_46 = arith.constant 2 : index
    %c0_47 = arith.constant 0 : index
    %c0_48 = arith.constant 0 : index
    %25 = vector.load %arg1[%c0_45, %c2_46, %c0_47, %c0_48] : memref<1x18x18x4xf32, #tpu.memory_space<vmem>>, vector<1x1x16x4xf32>
    %26 = vector.shape_cast %25 : vector<1x1x16x4xf32> to vector<16x4xf32>
    %c0_49 = arith.constant 0 : index
    %c2_50 = arith.constant 2 : index
    %c1_51 = arith.constant 1 : index
    %c0_52 = arith.constant 0 : index
    %27 = vector.load %arg1[%c0_49, %c2_50, %c1_51, %c0_52] : memref<1x18x18x4xf32, #tpu.memory_space<vmem>>, vector<1x1x16x4xf32>
    %28 = vector.shape_cast %27 : vector<1x1x16x4xf32> to vector<16x4xf32>
    %c0_53 = arith.constant 0 : index
    %c2_54 = arith.constant 2 : index
    %c2_55 = arith.constant 2 : index
    %c0_56 = arith.constant 0 : index
    %29 = vector.load %arg1[%c0_53, %c2_54, %c2_55, %c0_56] : memref<1x18x18x4xf32, #tpu.memory_space<vmem>>, vector<1x1x16x4xf32>
    %30 = vector.shape_cast %29 : vector<1x1x16x4xf32> to vector<16x4xf32>
    %c0_57 = arith.constant 0 : index
    %c3 = arith.constant 3 : index
    %c0_58 = arith.constant 0 : index
    %c0_59 = arith.constant 0 : index
    %31 = vector.load %arg1[%c0_57, %c3, %c0_58, %c0_59] : memref<1x18x18x4xf32, #tpu.memory_space<vmem>>, vector<1x1x16x4xf32>
    %32 = vector.shape_cast %31 : vector<1x1x16x4xf32> to vector<16x4xf32>
    %c0_60 = arith.constant 0 : index
    %c3_61 = arith.constant 3 : index
    %c1_62 = arith.constant 1 : index
    %c0_63 = arith.constant 0 : index
    %33 = vector.load %arg1[%c0_60, %c3_61, %c1_62, %c0_63] : memref<1x18x18x4xf32, #tpu.memory_space<vmem>>, vector<1x1x16x4xf32>
    %34 = vector.shape_cast %33 : vector<1x1x16x4xf32> to vector<16x4xf32>
    %c0_64 = arith.constant 0 : index
    %c3_65 = arith.constant 3 : index
    %c2_66 = arith.constant 2 : index
    %c0_67 = arith.constant 0 : index
    %35 = vector.load %arg1[%c0_64, %c3_65, %c2_66, %c0_67] : memref<1x18x18x4xf32, #tpu.memory_space<vmem>>, vector<1x1x16x4xf32>
    %36 = vector.shape_cast %35 : vector<1x1x16x4xf32> to vector<16x4xf32>
    %37 = tpu.concatenate %20, %22, %24, %26, %28, %30, %32, %34, %36 in 1 : vector<16x4xf32>, vector<16x4xf32>, vector<16x4xf32>, vector<16x4xf32>, vector<16x4xf32>, vector<16x4xf32>, vector<16x4xf32>, vector<16x4xf32>, vector<16x4xf32> -> vector<16x36xf32>
    %c0_68 = arith.constant 0 : index
    %c2_69 = arith.constant 2 : index
    %c0_70 = arith.constant 0 : index
    %c0_71 = arith.constant 0 : index
    %38 = vector.load %arg1[%c0_68, %c2_69, %c0_70, %c0_71] : memref<1x18x18x4xf32, #tpu.memory_space<vmem>>, vector<1x1x16x4xf32>
    %39 = vector.shape_cast %38 : vector<1x1x16x4xf32> to vector<16x4xf32>
    %c0_72 = arith.constant 0 : index
    %c2_73 = arith.constant 2 : index
    %c1_74 = arith.constant 1 : index
    %c0_75 = arith.constant 0 : index
    %40 = vector.load %arg1[%c0_72, %c2_73, %c1_74, %c0_75] : memref<1x18x18x4xf32, #tpu.memory_space<vmem>>, vector<1x1x16x4xf32>
    %41 = vector.shape_cast %40 : vector<1x1x16x4xf32> to vector<16x4xf32>
    %c0_76 = arith.constant 0 : index
    %c2_77 = arith.constant 2 : index
    %c2_78 = arith.constant 2 : index
    %c0_79 = arith.constant 0 : index
    %42 = vector.load %arg1[%c0_76, %c2_77, %c2_78, %c0_79] : memref<1x18x18x4xf32, #tpu.memory_space<vmem>>, vector<1x1x16x4xf32>
    %43 = vector.shape_cast %42 : vector<1x1x16x4xf32> to vector<16x4xf32>
    %c0_80 = arith.constant 0 : index
    %c3_81 = arith.constant 3 : index
    %c0_82 = arith.constant 0 : index
    %c0_83 = arith.constant 0 : index
    %44 = vector.load %arg1[%c0_80, %c3_81, %c0_82, %c0_83] : memref<1x18x18x4xf32, #tpu.memory_space<vmem>>, vector<1x1x16x4xf32>
    %45 = vector.shape_cast %44 : vector<1x1x16x4xf32> to vector<16x4xf32>
    %c0_84 = arith.constant 0 : index
    %c3_85 = arith.constant 3 : index
    %c1_86 = arith.constant 1 : index
    %c0_87 = arith.constant 0 : index
    %46 = vector.load %arg1[%c0_84, %c3_85, %c1_86, %c0_87] : memref<1x18x18x4xf32, #tpu.memory_space<vmem>>, vector<1x1x16x4xf32>
    %47 = vector.shape_cast %46 : vector<1x1x16x4xf32> to vector<16x4xf32>
    %c0_88 = arith.constant 0 : index
    %c3_89 = arith.constant 3 : index
    %c2_90 = arith.constant 2 : index
    %c0_91 = arith.constant 0 : index
    %48 = vector.load %arg1[%c0_88, %c3_89, %c2_90, %c0_91] : memref<1x18x18x4xf32, #tpu.memory_space<vmem>>, vector<1x1x16x4xf32>
    %49 = vector.shape_cast %48 : vector<1x1x16x4xf32> to vector<16x4xf32>
    %c0_92 = arith.constant 0 : index
    %c4 = arith.constant 4 : index
    %c0_93 = arith.constant 0 : index
    %c0_94 = arith.constant 0 : index
    %50 = vector.load %arg1[%c0_92, %c4, %c0_93, %c0_94] : memref<1x18x18x4xf32, #tpu.memory_space<vmem>>, vector<1x1x16x4xf32>
    %51 = vector.shape_cast %50 : vector<1x1x16x4xf32> to vector<16x4xf32>
    %c0_95 = arith.constant 0 : index
    %c4_96 = arith.constant 4 : index
    %c1_97 = arith.constant 1 : index
    %c0_98 = arith.constant 0 : index
    %52 = vector.load %arg1[%c0_95, %c4_96, %c1_97, %c0_98] : memref<1x18x18x4xf32, #tpu.memory_space<vmem>>, vector<1x1x16x4xf32>
    %53 = vector.shape_cast %52 : vector<1x1x16x4xf32> to vector<16x4xf32>
    %c0_99 = arith.constant 0 : index
    %c4_100 = arith.constant 4 : index
    %c2_101 = arith.constant 2 : index
    %c0_102 = arith.constant 0 : index
    %54 = vector.load %arg1[%c0_99, %c4_100, %c2_101, %c0_102] : memref<1x18x18x4xf32, #tpu.memory_space<vmem>>, vector<1x1x16x4xf32>
    %55 = vector.shape_cast %54 : vector<1x1x16x4xf32> to vector<16x4xf32>
    %56 = tpu.concatenate %39, %41, %43, %45, %47, %49, %51, %53, %55 in 1 : vector<16x4xf32>, vector<16x4xf32>, vector<16x4xf32>, vector<16x4xf32>, vector<16x4xf32>, vector<16x4xf32>, vector<16x4xf32>, vector<16x4xf32>, vector<16x4xf32> -> vector<16x36xf32>
    %c0_103 = arith.constant 0 : index
    %c3_104 = arith.constant 3 : index
    %c0_105 = arith.constant 0 : index
    %c0_106 = arith.constant 0 : index
    %57 = vector.load %arg1[%c0_103, %c3_104, %c0_105, %c0_106] : memref<1x18x18x4xf32, #tpu.memory_space<vmem>>, vector<1x1x16x4xf32>
    %58 = vector.shape_cast %57 : vector<1x1x16x4xf32> to vector<16x4xf32>
    %c0_107 = arith.constant 0 : index
    %c3_108 = arith.constant 3 : index
    %c1_109 = arith.constant 1 : index
    %c0_110 = arith.constant 0 : index
    %59 = vector.load %arg1[%c0_107, %c3_108, %c1_109, %c0_110] : memref<1x18x18x4xf32, #tpu.memory_space<vmem>>, vector<1x1x16x4xf32>
    %60 = vector.shape_cast %59 : vector<1x1x16x4xf32> to vector<16x4xf32>
    %c0_111 = arith.constant 0 : index
    %c3_112 = arith.constant 3 : index
    %c2_113 = arith.constant 2 : index
    %c0_114 = arith.constant 0 : index
    %61 = vector.load %arg1[%c0_111, %c3_112, %c2_113, %c0_114] : memref<1x18x18x4xf32, #tpu.memory_space<vmem>>, vector<1x1x16x4xf32>
    %62 = vector.shape_cast %61 : vector<1x1x16x4xf32> to vector<16x4xf32>
    %c0_115 = arith.constant 0 : index
    %c4_116 = arith.constant 4 : index
    %c0_117 = arith.constant 0 : index
    %c0_118 = arith.constant 0 : index
    %63 = vector.load %arg1[%c0_115, %c4_116, %c0_117, %c0_118] : memref<1x18x18x4xf32, #tpu.memory_space<vmem>>, vector<1x1x16x4xf32>
    %64 = vector.shape_cast %63 : vector<1x1x16x4xf32> to vector<16x4xf32>
    %c0_119 = arith.constant 0 : index
    %c4_120 = arith.constant 4 : index
    %c1_121 = arith.constant 1 : index
    %c0_122 = arith.constant 0 : index
    %65 = vector.load %arg1[%c0_119, %c4_120, %c1_121, %c0_122] : memref<1x18x18x4xf32, #tpu.memory_space<vmem>>, vector<1x1x16x4xf32>
    %66 = vector.shape_cast %65 : vector<1x1x16x4xf32> to vector<16x4xf32>
    %c0_123 = arith.constant 0 : index
    %c4_124 = arith.constant 4 : index
    %c2_125 = arith.constant 2 : index
    %c0_126 = arith.constant 0 : index
    %67 = vector.load %arg1[%c0_123, %c4_124, %c2_125, %c0_126] : memref<1x18x18x4xf32, #tpu.memory_space<vmem>>, vector<1x1x16x4xf32>
    %68 = vector.shape_cast %67 : vector<1x1x16x4xf32> to vector<16x4xf32>
    %c0_127 = arith.constant 0 : index
    %c5 = arith.constant 5 : index
    %c0_128 = arith.constant 0 : index
    %c0_129 = arith.constant 0 : index
    %69 = vector.load %arg1[%c0_127, %c5, %c0_128, %c0_129] : memref<1x18x18x4xf32, #tpu.memory_space<vmem>>, vector<1x1x16x4xf32>
    %70 = vector.shape_cast %69 : vector<1x1x16x4xf32> to vector<16x4xf32>
    %c0_130 = arith.constant 0 : index
    %c5_131 = arith.constant 5 : index
    %c1_132 = arith.constant 1 : index
    %c0_133 = arith.constant 0 : index
    %71 = vector.load %arg1[%c0_130, %c5_131, %c1_132, %c0_133] : memref<1x18x18x4xf32, #tpu.memory_space<vmem>>, vector<1x1x16x4xf32>
    %72 = vector.shape_cast %71 : vector<1x1x16x4xf32> to vector<16x4xf32>
    %c0_134 = arith.constant 0 : index
    %c5_135 = arith.constant 5 : index
    %c2_136 = arith.constant 2 : index
    %c0_137 = arith.constant 0 : index
    %73 = vector.load %arg1[%c0_134, %c5_135, %c2_136, %c0_137] : memref<1x18x18x4xf32, #tpu.memory_space<vmem>>, vector<1x1x16x4xf32>
    %74 = vector.shape_cast %73 : vector<1x1x16x4xf32> to vector<16x4xf32>
    %75 = tpu.concatenate %58, %60, %62, %64, %66, %68, %70, %72, %74 in 1 : vector<16x4xf32>, vector<16x4xf32>, vector<16x4xf32>, vector<16x4xf32>, vector<16x4xf32>, vector<16x4xf32>, vector<16x4xf32>, vector<16x4xf32>, vector<16x4xf32> -> vector<16x36xf32>
    %c0_138 = arith.constant 0 : index
    %c4_139 = arith.constant 4 : index
    %c0_140 = arith.constant 0 : index
    %c0_141 = arith.constant 0 : index
    %76 = vector.load %arg1[%c0_138, %c4_139, %c0_140, %c0_141] : memref<1x18x18x4xf32, #tpu.memory_space<vmem>>, vector<1x1x16x4xf32>
    %77 = vector.shape_cast %76 : vector<1x1x16x4xf32> to vector<16x4xf32>
    %c0_142 = arith.constant 0 : index
    %c4_143 = arith.constant 4 : index
    %c1_144 = arith.constant 1 : index
    %c0_145 = arith.constant 0 : index
    %78 = vector.load %arg1[%c0_142, %c4_143, %c1_144, %c0_145] : memref<1x18x18x4xf32, #tpu.memory_space<vmem>>, vector<1x1x16x4xf32>
    %79 = vector.shape_cast %78 : vector<1x1x16x4xf32> to vector<16x4xf32>
    %c0_146 = arith.constant 0 : index
    %c4_147 = arith.constant 4 : index
    %c2_148 = arith.constant 2 : index
    %c0_149 = arith.constant 0 : index
    %80 = vector.load %arg1[%c0_146, %c4_147, %c2_148, %c0_149] : memref<1x18x18x4xf32, #tpu.memory_space<vmem>>, vector<1x1x16x4xf32>
    %81 = vector.shape_cast %80 : vector<1x1x16x4xf32> to vector<16x4xf32>
    %c0_150 = arith.constant 0 : index
    %c5_151 = arith.constant 5 : index
    %c0_152 = arith.constant 0 : index
    %c0_153 = arith.constant 0 : index
    %82 = vector.load %arg1[%c0_150, %c5_151, %c0_152, %c0_153] : memref<1x18x18x4xf32, #tpu.memory_space<vmem>>, vector<1x1x16x4xf32>
    %83 = vector.shape_cast %82 : vector<1x1x16x4xf32> to vector<16x4xf32>
    %c0_154 = arith.constant 0 : index
    %c5_155 = arith.constant 5 : index
    %c1_156 = arith.constant 1 : index
    %c0_157 = arith.constant 0 : index
    %84 = vector.load %arg1[%c0_154, %c5_155, %c1_156, %c0_157] : memref<1x18x18x4xf32, #tpu.memory_space<vmem>>, vector<1x1x16x4xf32>
    %85 = vector.shape_cast %84 : vector<1x1x16x4xf32> to vector<16x4xf32>
    %c0_158 = arith.constant 0 : index
    %c5_159 = arith.constant 5 : index
    %c2_160 = arith.constant 2 : index
    %c0_161 = arith.constant 0 : index
    %86 = vector.load %arg1[%c0_158, %c5_159, %c2_160, %c0_161] : memref<1x18x18x4xf32, #tpu.memory_space<vmem>>, vector<1x1x16x4xf32>
    %87 = vector.shape_cast %86 : vector<1x1x16x4xf32> to vector<16x4xf32>
    %c0_162 = arith.constant 0 : index
    %c6 = arith.constant 6 : index
    %c0_163 = arith.constant 0 : index
    %c0_164 = arith.constant 0 : index
    %88 = vector.load %arg1[%c0_162, %c6, %c0_163, %c0_164] : memref<1x18x18x4xf32, #tpu.memory_space<vmem>>, vector<1x1x16x4xf32>
    %89 = vector.shape_cast %88 : vector<1x1x16x4xf32> to vector<16x4xf32>
    %c0_165 = arith.constant 0 : index
    %c6_166 = arith.constant 6 : index
    %c1_167 = arith.constant 1 : index
    %c0_168 = arith.constant 0 : index
    %90 = vector.load %arg1[%c0_165, %c6_166, %c1_167, %c0_168] : memref<1x18x18x4xf32, #tpu.memory_space<vmem>>, vector<1x1x16x4xf32>
    %91 = vector.shape_cast %90 : vector<1x1x16x4xf32> to vector<16x4xf32>
    %c0_169 = arith.constant 0 : index
    %c6_170 = arith.constant 6 : index
    %c2_171 = arith.constant 2 : index
    %c0_172 = arith.constant 0 : index
    %92 = vector.load %arg1[%c0_169, %c6_170, %c2_171, %c0_172] : memref<1x18x18x4xf32, #tpu.memory_space<vmem>>, vector<1x1x16x4xf32>
    %93 = vector.shape_cast %92 : vector<1x1x16x4xf32> to vector<16x4xf32>
    %94 = tpu.concatenate %77, %79, %81, %83, %85, %87, %89, %91, %93 in 1 : vector<16x4xf32>, vector<16x4xf32>, vector<16x4xf32>, vector<16x4xf32>, vector<16x4xf32>, vector<16x4xf32>, vector<16x4xf32>, vector<16x4xf32>, vector<16x4xf32> -> vector<16x36xf32>
    %c0_173 = arith.constant 0 : index
    %c5_174 = arith.constant 5 : index
    %c0_175 = arith.constant 0 : index
    %c0_176 = arith.constant 0 : index
    %95 = vector.load %arg1[%c0_173, %c5_174, %c0_175, %c0_176] : memref<1x18x18x4xf32, #tpu.memory_space<vmem>>, vector<1x1x16x4xf32>
    %96 = vector.shape_cast %95 : vector<1x1x16x4xf32> to vector<16x4xf32>
    %c0_177 = arith.constant 0 : index
    %c5_178 = arith.constant 5 : index
    %c1_179 = arith.constant 1 : index
    %c0_180 = arith.constant 0 : index
    %97 = vector.load %arg1[%c0_177, %c5_178, %c1_179, %c0_180] : memref<1x18x18x4xf32, #tpu.memory_space<vmem>>, vector<1x1x16x4xf32>
    %98 = vector.shape_cast %97 : vector<1x1x16x4xf32> to vector<16x4xf32>
    %c0_181 = arith.constant 0 : index
    %c5_182 = arith.constant 5 : index
    %c2_183 = arith.constant 2 : index
    %c0_184 = arith.constant 0 : index
    %99 = vector.load %arg1[%c0_181, %c5_182, %c2_183, %c0_184] : memref<1x18x18x4xf32, #tpu.memory_space<vmem>>, vector<1x1x16x4xf32>
    %100 = vector.shape_cast %99 : vector<1x1x16x4xf32> to vector<16x4xf32>
    %c0_185 = arith.constant 0 : index
    %c6_186 = arith.constant 6 : index
    %c0_187 = arith.constant 0 : index
    %c0_188 = arith.constant 0 : index
    %101 = vector.load %arg1[%c0_185, %c6_186, %c0_187, %c0_188] : memref<1x18x18x4xf32, #tpu.memory_space<vmem>>, vector<1x1x16x4xf32>
    %102 = vector.shape_cast %101 : vector<1x1x16x4xf32> to vector<16x4xf32>
    %c0_189 = arith.constant 0 : index
    %c6_190 = arith.constant 6 : index
    %c1_191 = arith.constant 1 : index
    %c0_192 = arith.constant 0 : index
    %103 = vector.load %arg1[%c0_189, %c6_190, %c1_191, %c0_192] : memref<1x18x18x4xf32, #tpu.memory_space<vmem>>, vector<1x1x16x4xf32>
    %104 = vector.shape_cast %103 : vector<1x1x16x4xf32> to vector<16x4xf32>
    %c0_193 = arith.constant 0 : index
    %c6_194 = arith.constant 6 : index
    %c2_195 = arith.constant 2 : index
    %c0_196 = arith.constant 0 : index
    %105 = vector.load %arg1[%c0_193, %c6_194, %c2_195, %c0_196] : memref<1x18x18x4xf32, #tpu.memory_space<vmem>>, vector<1x1x16x4xf32>
    %106 = vector.shape_cast %105 : vector<1x1x16x4xf32> to vector<16x4xf32>
    %c0_197 = arith.constant 0 : index
    %c7 = arith.constant 7 : index
    %c0_198 = arith.constant 0 : index
    %c0_199 = arith.constant 0 : index
    %107 = vector.load %arg1[%c0_197, %c7, %c0_198, %c0_199] : memref<1x18x18x4xf32, #tpu.memory_space<vmem>>, vector<1x1x16x4xf32>
    %108 = vector.shape_cast %107 : vector<1x1x16x4xf32> to vector<16x4xf32>
    %c0_200 = arith.constant 0 : index
    %c7_201 = arith.constant 7 : index
    %c1_202 = arith.constant 1 : index
    %c0_203 = arith.constant 0 : index
    %109 = vector.load %arg1[%c0_200, %c7_201, %c1_202, %c0_203] : memref<1x18x18x4xf32, #tpu.memory_space<vmem>>, vector<1x1x16x4xf32>
    %110 = vector.shape_cast %109 : vector<1x1x16x4xf32> to vector<16x4xf32>
    %c0_204 = arith.constant 0 : index
    %c7_205 = arith.constant 7 : index
    %c2_206 = arith.constant 2 : index
    %c0_207 = arith.constant 0 : index
    %111 = vector.load %arg1[%c0_204, %c7_205, %c2_206, %c0_207] : memref<1x18x18x4xf32, #tpu.memory_space<vmem>>, vector<1x1x16x4xf32>
    %112 = vector.shape_cast %111 : vector<1x1x16x4xf32> to vector<16x4xf32>
    %113 = tpu.concatenate %96, %98, %100, %102, %104, %106, %108, %110, %112 in 1 : vector<16x4xf32>, vector<16x4xf32>, vector<16x4xf32>, vector<16x4xf32>, vector<16x4xf32>, vector<16x4xf32>, vector<16x4xf32>, vector<16x4xf32>, vector<16x4xf32> -> vector<16x36xf32>
    %c0_208 = arith.constant 0 : index
    %c6_209 = arith.constant 6 : index
    %c0_210 = arith.constant 0 : index
    %c0_211 = arith.constant 0 : index
    %114 = vector.load %arg1[%c0_208, %c6_209, %c0_210, %c0_211] : memref<1x18x18x4xf32, #tpu.memory_space<vmem>>, vector<1x1x16x4xf32>
    %115 = vector.shape_cast %114 : vector<1x1x16x4xf32> to vector<16x4xf32>
    %c0_212 = arith.constant 0 : index
    %c6_213 = arith.constant 6 : index
    %c1_214 = arith.constant 1 : index
    %c0_215 = arith.constant 0 : index
    %116 = vector.load %arg1[%c0_212, %c6_213, %c1_214, %c0_215] : memref<1x18x18x4xf32, #tpu.memory_space<vmem>>, vector<1x1x16x4xf32>
    %117 = vector.shape_cast %116 : vector<1x1x16x4xf32> to vector<16x4xf32>
    %c0_216 = arith.constant 0 : index
    %c6_217 = arith.constant 6 : index
    %c2_218 = arith.constant 2 : index
    %c0_219 = arith.constant 0 : index
    %118 = vector.load %arg1[%c0_216, %c6_217, %c2_218, %c0_219] : memref<1x18x18x4xf32, #tpu.memory_space<vmem>>, vector<1x1x16x4xf32>
    %119 = vector.shape_cast %118 : vector<1x1x16x4xf32> to vector<16x4xf32>
    %c0_220 = arith.constant 0 : index
    %c7_221 = arith.constant 7 : index
    %c0_222 = arith.constant 0 : index
    %c0_223 = arith.constant 0 : index
    %120 = vector.load %arg1[%c0_220, %c7_221, %c0_222, %c0_223] : memref<1x18x18x4xf32, #tpu.memory_space<vmem>>, vector<1x1x16x4xf32>
    %121 = vector.shape_cast %120 : vector<1x1x16x4xf32> to vector<16x4xf32>
    %c0_224 = arith.constant 0 : index
    %c7_225 = arith.constant 7 : index
    %c1_226 = arith.constant 1 : index
    %c0_227 = arith.constant 0 : index
    %122 = vector.load %arg1[%c0_224, %c7_225, %c1_226, %c0_227] : memref<1x18x18x4xf32, #tpu.memory_space<vmem>>, vector<1x1x16x4xf32>
    %123 = vector.shape_cast %122 : vector<1x1x16x4xf32> to vector<16x4xf32>
    %c0_228 = arith.constant 0 : index
    %c7_229 = arith.constant 7 : index
    %c2_230 = arith.constant 2 : index
    %c0_231 = arith.constant 0 : index
    %124 = vector.load %arg1[%c0_228, %c7_229, %c2_230, %c0_231] : memref<1x18x18x4xf32, #tpu.memory_space<vmem>>, vector<1x1x16x4xf32>
    %125 = vector.shape_cast %124 : vector<1x1x16x4xf32> to vector<16x4xf32>
    %c0_232 = arith.constant 0 : index
    %c8 = arith.constant 8 : index
    %c0_233 = arith.constant 0 : index
    %c0_234 = arith.constant 0 : index
    %126 = vector.load %arg1[%c0_232, %c8, %c0_233, %c0_234] : memref<1x18x18x4xf32, #tpu.memory_space<vmem>>, vector<1x1x16x4xf32>
    %127 = vector.shape_cast %126 : vector<1x1x16x4xf32> to vector<16x4xf32>
    %c0_235 = arith.constant 0 : index
    %c8_236 = arith.constant 8 : index
    %c1_237 = arith.constant 1 : index
    %c0_238 = arith.constant 0 : index
    %128 = vector.load %arg1[%c0_235, %c8_236, %c1_237, %c0_238] : memref<1x18x18x4xf32, #tpu.memory_space<vmem>>, vector<1x1x16x4xf32>
    %129 = vector.shape_cast %128 : vector<1x1x16x4xf32> to vector<16x4xf32>
    %c0_239 = arith.constant 0 : index
    %c8_240 = arith.constant 8 : index
    %c2_241 = arith.constant 2 : index
    %c0_242 = arith.constant 0 : index
    %130 = vector.load %arg1[%c0_239, %c8_240, %c2_241, %c0_242] : memref<1x18x18x4xf32, #tpu.memory_space<vmem>>, vector<1x1x16x4xf32>
    %131 = vector.shape_cast %130 : vector<1x1x16x4xf32> to vector<16x4xf32>
    %132 = tpu.concatenate %115, %117, %119, %121, %123, %125, %127, %129, %131 in 1 : vector<16x4xf32>, vector<16x4xf32>, vector<16x4xf32>, vector<16x4xf32>, vector<16x4xf32>, vector<16x4xf32>, vector<16x4xf32>, vector<16x4xf32>, vector<16x4xf32> -> vector<16x36xf32>
    %c0_243 = arith.constant 0 : index
    %c7_244 = arith.constant 7 : index
    %c0_245 = arith.constant 0 : index
    %c0_246 = arith.constant 0 : index
    %133 = vector.load %arg1[%c0_243, %c7_244, %c0_245, %c0_246] : memref<1x18x18x4xf32, #tpu.memory_space<vmem>>, vector<1x1x16x4xf32>
    %134 = vector.shape_cast %133 : vector<1x1x16x4xf32> to vector<16x4xf32>
    %c0_247 = arith.constant 0 : index
    %c7_248 = arith.constant 7 : index
    %c1_249 = arith.constant 1 : index
    %c0_250 = arith.constant 0 : index
    %135 = vector.load %arg1[%c0_247, %c7_248, %c1_249, %c0_250] : memref<1x18x18x4xf32, #tpu.memory_space<vmem>>, vector<1x1x16x4xf32>
    %136 = vector.shape_cast %135 : vector<1x1x16x4xf32> to vector<16x4xf32>
    %c0_251 = arith.constant 0 : index
    %c7_252 = arith.constant 7 : index
    %c2_253 = arith.constant 2 : index
    %c0_254 = arith.constant 0 : index
    %137 = vector.load %arg1[%c0_251, %c7_252, %c2_253, %c0_254] : memref<1x18x18x4xf32, #tpu.memory_space<vmem>>, vector<1x1x16x4xf32>
    %138 = vector.shape_cast %137 : vector<1x1x16x4xf32> to vector<16x4xf32>
    %c0_255 = arith.constant 0 : index
    %c8_256 = arith.constant 8 : index
    %c0_257 = arith.constant 0 : index
    %c0_258 = arith.constant 0 : index
    %139 = vector.load %arg1[%c0_255, %c8_256, %c0_257, %c0_258] : memref<1x18x18x4xf32, #tpu.memory_space<vmem>>, vector<1x1x16x4xf32>
    %140 = vector.shape_cast %139 : vector<1x1x16x4xf32> to vector<16x4xf32>
    %c0_259 = arith.constant 0 : index
    %c8_260 = arith.constant 8 : index
    %c1_261 = arith.constant 1 : index
    %c0_262 = arith.constant 0 : index
    %141 = vector.load %arg1[%c0_259, %c8_260, %c1_261, %c0_262] : memref<1x18x18x4xf32, #tpu.memory_space<vmem>>, vector<1x1x16x4xf32>
    %142 = vector.shape_cast %141 : vector<1x1x16x4xf32> to vector<16x4xf32>
    %c0_263 = arith.constant 0 : index
    %c8_264 = arith.constant 8 : index
    %c2_265 = arith.constant 2 : index
    %c0_266 = arith.constant 0 : index
    %143 = vector.load %arg1[%c0_263, %c8_264, %c2_265, %c0_266] : memref<1x18x18x4xf32, #tpu.memory_space<vmem>>, vector<1x1x16x4xf32>
    %144 = vector.shape_cast %143 : vector<1x1x16x4xf32> to vector<16x4xf32>
    %c0_267 = arith.constant 0 : index
    %c9 = arith.constant 9 : index
    %c0_268 = arith.constant 0 : index
    %c0_269 = arith.constant 0 : index
    %145 = vector.load %arg1[%c0_267, %c9, %c0_268, %c0_269] : memref<1x18x18x4xf32, #tpu.memory_space<vmem>>, vector<1x1x16x4xf32>
    %146 = vector.shape_cast %145 : vector<1x1x16x4xf32> to vector<16x4xf32>
    %c0_270 = arith.constant 0 : index
    %c9_271 = arith.constant 9 : index
    %c1_272 = arith.constant 1 : index
    %c0_273 = arith.constant 0 : index
    %147 = vector.load %arg1[%c0_270, %c9_271, %c1_272, %c0_273] : memref<1x18x18x4xf32, #tpu.memory_space<vmem>>, vector<1x1x16x4xf32>
    %148 = vector.shape_cast %147 : vector<1x1x16x4xf32> to vector<16x4xf32>
    %c0_274 = arith.constant 0 : index
    %c9_275 = arith.constant 9 : index
    %c2_276 = arith.constant 2 : index
    %c0_277 = arith.constant 0 : index
    %149 = vector.load %arg1[%c0_274, %c9_275, %c2_276, %c0_277] : memref<1x18x18x4xf32, #tpu.memory_space<vmem>>, vector<1x1x16x4xf32>
    %150 = vector.shape_cast %149 : vector<1x1x16x4xf32> to vector<16x4xf32>
    %151 = tpu.concatenate %134, %136, %138, %140, %142, %144, %146, %148, %150 in 1 : vector<16x4xf32>, vector<16x4xf32>, vector<16x4xf32>, vector<16x4xf32>, vector<16x4xf32>, vector<16x4xf32>, vector<16x4xf32>, vector<16x4xf32>, vector<16x4xf32> -> vector<16x36xf32>
    %c0_278 = arith.constant 0 : index
    %c8_279 = arith.constant 8 : index
    %c0_280 = arith.constant 0 : index
    %c0_281 = arith.constant 0 : index
    %152 = vector.load %arg1[%c0_278, %c8_279, %c0_280, %c0_281] : memref<1x18x18x4xf32, #tpu.memory_space<vmem>>, vector<1x1x16x4xf32>
    %153 = vector.shape_cast %152 : vector<1x1x16x4xf32> to vector<16x4xf32>
    %c0_282 = arith.constant 0 : index
    %c8_283 = arith.constant 8 : index
    %c1_284 = arith.constant 1 : index
    %c0_285 = arith.constant 0 : index
    %154 = vector.load %arg1[%c0_282, %c8_283, %c1_284, %c0_285] : memref<1x18x18x4xf32, #tpu.memory_space<vmem>>, vector<1x1x16x4xf32>
    %155 = vector.shape_cast %154 : vector<1x1x16x4xf32> to vector<16x4xf32>
    %c0_286 = arith.constant 0 : index
    %c8_287 = arith.constant 8 : index
    %c2_288 = arith.constant 2 : index
    %c0_289 = arith.constant 0 : index
    %156 = vector.load %arg1[%c0_286, %c8_287, %c2_288, %c0_289] : memref<1x18x18x4xf32, #tpu.memory_space<vmem>>, vector<1x1x16x4xf32>
    %157 = vector.shape_cast %156 : vector<1x1x16x4xf32> to vector<16x4xf32>
    %c0_290 = arith.constant 0 : index
    %c9_291 = arith.constant 9 : index
    %c0_292 = arith.constant 0 : index
    %c0_293 = arith.constant 0 : index
    %158 = vector.load %arg1[%c0_290, %c9_291, %c0_292, %c0_293] : memref<1x18x18x4xf32, #tpu.memory_space<vmem>>, vector<1x1x16x4xf32>
    %159 = vector.shape_cast %158 : vector<1x1x16x4xf32> to vector<16x4xf32>
    %c0_294 = arith.constant 0 : index
    %c9_295 = arith.constant 9 : index
    %c1_296 = arith.constant 1 : index
    %c0_297 = arith.constant 0 : index
    %160 = vector.load %arg1[%c0_294, %c9_295, %c1_296, %c0_297] : memref<1x18x18x4xf32, #tpu.memory_space<vmem>>, vector<1x1x16x4xf32>
    %161 = vector.shape_cast %160 : vector<1x1x16x4xf32> to vector<16x4xf32>
    %c0_298 = arith.constant 0 : index
    %c9_299 = arith.constant 9 : index
    %c2_300 = arith.constant 2 : index
    %c0_301 = arith.constant 0 : index
    %162 = vector.load %arg1[%c0_298, %c9_299, %c2_300, %c0_301] : memref<1x18x18x4xf32, #tpu.memory_space<vmem>>, vector<1x1x16x4xf32>
    %163 = vector.shape_cast %162 : vector<1x1x16x4xf32> to vector<16x4xf32>
    %c0_302 = arith.constant 0 : index
    %c10 = arith.constant 10 : index
    %c0_303 = arith.constant 0 : index
    %c0_304 = arith.constant 0 : index
    %164 = vector.load %arg1[%c0_302, %c10, %c0_303, %c0_304] : memref<1x18x18x4xf32, #tpu.memory_space<vmem>>, vector<1x1x16x4xf32>
    %165 = vector.shape_cast %164 : vector<1x1x16x4xf32> to vector<16x4xf32>
    %c0_305 = arith.constant 0 : index
    %c10_306 = arith.constant 10 : index
    %c1_307 = arith.constant 1 : index
    %c0_308 = arith.constant 0 : index
    %166 = vector.load %arg1[%c0_305, %c10_306, %c1_307, %c0_308] : memref<1x18x18x4xf32, #tpu.memory_space<vmem>>, vector<1x1x16x4xf32>
    %167 = vector.shape_cast %166 : vector<1x1x16x4xf32> to vector<16x4xf32>
    %c0_309 = arith.constant 0 : index
    %c10_310 = arith.constant 10 : index
    %c2_311 = arith.constant 2 : index
    %c0_312 = arith.constant 0 : index
    %168 = vector.load %arg1[%c0_309, %c10_310, %c2_311, %c0_312] : memref<1x18x18x4xf32, #tpu.memory_space<vmem>>, vector<1x1x16x4xf32>
    %169 = vector.shape_cast %168 : vector<1x1x16x4xf32> to vector<16x4xf32>
    %170 = tpu.concatenate %153, %155, %157, %159, %161, %163, %165, %167, %169 in 1 : vector<16x4xf32>, vector<16x4xf32>, vector<16x4xf32>, vector<16x4xf32>, vector<16x4xf32>, vector<16x4xf32>, vector<16x4xf32>, vector<16x4xf32>, vector<16x4xf32> -> vector<16x36xf32>
    %c0_313 = arith.constant 0 : index
    %c9_314 = arith.constant 9 : index
    %c0_315 = arith.constant 0 : index
    %c0_316 = arith.constant 0 : index
    %171 = vector.load %arg1[%c0_313, %c9_314, %c0_315, %c0_316] : memref<1x18x18x4xf32, #tpu.memory_space<vmem>>, vector<1x1x16x4xf32>
    %172 = vector.shape_cast %171 : vector<1x1x16x4xf32> to vector<16x4xf32>
    %c0_317 = arith.constant 0 : index
    %c9_318 = arith.constant 9 : index
    %c1_319 = arith.constant 1 : index
    %c0_320 = arith.constant 0 : index
    %173 = vector.load %arg1[%c0_317, %c9_318, %c1_319, %c0_320] : memref<1x18x18x4xf32, #tpu.memory_space<vmem>>, vector<1x1x16x4xf32>
    %174 = vector.shape_cast %173 : vector<1x1x16x4xf32> to vector<16x4xf32>
    %c0_321 = arith.constant 0 : index
    %c9_322 = arith.constant 9 : index
    %c2_323 = arith.constant 2 : index
    %c0_324 = arith.constant 0 : index
    %175 = vector.load %arg1[%c0_321, %c9_322, %c2_323, %c0_324] : memref<1x18x18x4xf32, #tpu.memory_space<vmem>>, vector<1x1x16x4xf32>
    %176 = vector.shape_cast %175 : vector<1x1x16x4xf32> to vector<16x4xf32>
    %c0_325 = arith.constant 0 : index
    %c10_326 = arith.constant 10 : index
    %c0_327 = arith.constant 0 : index
    %c0_328 = arith.constant 0 : index
    %177 = vector.load %arg1[%c0_325, %c10_326, %c0_327, %c0_328] : memref<1x18x18x4xf32, #tpu.memory_space<vmem>>, vector<1x1x16x4xf32>
    %178 = vector.shape_cast %177 : vector<1x1x16x4xf32> to vector<16x4xf32>
    %c0_329 = arith.constant 0 : index
    %c10_330 = arith.constant 10 : index
    %c1_331 = arith.constant 1 : index
    %c0_332 = arith.constant 0 : index
    %179 = vector.load %arg1[%c0_329, %c10_330, %c1_331, %c0_332] : memref<1x18x18x4xf32, #tpu.memory_space<vmem>>, vector<1x1x16x4xf32>
    %180 = vector.shape_cast %179 : vector<1x1x16x4xf32> to vector<16x4xf32>
    %c0_333 = arith.constant 0 : index
    %c10_334 = arith.constant 10 : index
    %c2_335 = arith.constant 2 : index
    %c0_336 = arith.constant 0 : index
    %181 = vector.load %arg1[%c0_333, %c10_334, %c2_335, %c0_336] : memref<1x18x18x4xf32, #tpu.memory_space<vmem>>, vector<1x1x16x4xf32>
    %182 = vector.shape_cast %181 : vector<1x1x16x4xf32> to vector<16x4xf32>
    %c0_337 = arith.constant 0 : index
    %c11 = arith.constant 11 : index
    %c0_338 = arith.constant 0 : index
    %c0_339 = arith.constant 0 : index
    %183 = vector.load %arg1[%c0_337, %c11, %c0_338, %c0_339] : memref<1x18x18x4xf32, #tpu.memory_space<vmem>>, vector<1x1x16x4xf32>
    %184 = vector.shape_cast %183 : vector<1x1x16x4xf32> to vector<16x4xf32>
    %c0_340 = arith.constant 0 : index
    %c11_341 = arith.constant 11 : index
    %c1_342 = arith.constant 1 : index
    %c0_343 = arith.constant 0 : index
    %185 = vector.load %arg1[%c0_340, %c11_341, %c1_342, %c0_343] : memref<1x18x18x4xf32, #tpu.memory_space<vmem>>, vector<1x1x16x4xf32>
    %186 = vector.shape_cast %185 : vector<1x1x16x4xf32> to vector<16x4xf32>
    %c0_344 = arith.constant 0 : index
    %c11_345 = arith.constant 11 : index
    %c2_346 = arith.constant 2 : index
    %c0_347 = arith.constant 0 : index
    %187 = vector.load %arg1[%c0_344, %c11_345, %c2_346, %c0_347] : memref<1x18x18x4xf32, #tpu.memory_space<vmem>>, vector<1x1x16x4xf32>
    %188 = vector.shape_cast %187 : vector<1x1x16x4xf32> to vector<16x4xf32>
    %189 = tpu.concatenate %172, %174, %176, %178, %180, %182, %184, %186, %188 in 1 : vector<16x4xf32>, vector<16x4xf32>, vector<16x4xf32>, vector<16x4xf32>, vector<16x4xf32>, vector<16x4xf32>, vector<16x4xf32>, vector<16x4xf32>, vector<16x4xf32> -> vector<16x36xf32>
    %c0_348 = arith.constant 0 : index
    %c10_349 = arith.constant 10 : index
    %c0_350 = arith.constant 0 : index
    %c0_351 = arith.constant 0 : index
    %190 = vector.load %arg1[%c0_348, %c10_349, %c0_350, %c0_351] : memref<1x18x18x4xf32, #tpu.memory_space<vmem>>, vector<1x1x16x4xf32>
    %191 = vector.shape_cast %190 : vector<1x1x16x4xf32> to vector<16x4xf32>
    %c0_352 = arith.constant 0 : index
    %c10_353 = arith.constant 10 : index
    %c1_354 = arith.constant 1 : index
    %c0_355 = arith.constant 0 : index
    %192 = vector.load %arg1[%c0_352, %c10_353, %c1_354, %c0_355] : memref<1x18x18x4xf32, #tpu.memory_space<vmem>>, vector<1x1x16x4xf32>
    %193 = vector.shape_cast %192 : vector<1x1x16x4xf32> to vector<16x4xf32>
    %c0_356 = arith.constant 0 : index
    %c10_357 = arith.constant 10 : index
    %c2_358 = arith.constant 2 : index
    %c0_359 = arith.constant 0 : index
    %194 = vector.load %arg1[%c0_356, %c10_357, %c2_358, %c0_359] : memref<1x18x18x4xf32, #tpu.memory_space<vmem>>, vector<1x1x16x4xf32>
    %195 = vector.shape_cast %194 : vector<1x1x16x4xf32> to vector<16x4xf32>
    %c0_360 = arith.constant 0 : index
    %c11_361 = arith.constant 11 : index
    %c0_362 = arith.constant 0 : index
    %c0_363 = arith.constant 0 : index
    %196 = vector.load %arg1[%c0_360, %c11_361, %c0_362, %c0_363] : memref<1x18x18x4xf32, #tpu.memory_space<vmem>>, vector<1x1x16x4xf32>
    %197 = vector.shape_cast %196 : vector<1x1x16x4xf32> to vector<16x4xf32>
    %c0_364 = arith.constant 0 : index
    %c11_365 = arith.constant 11 : index
    %c1_366 = arith.constant 1 : index
    %c0_367 = arith.constant 0 : index
    %198 = vector.load %arg1[%c0_364, %c11_365, %c1_366, %c0_367] : memref<1x18x18x4xf32, #tpu.memory_space<vmem>>, vector<1x1x16x4xf32>
    %199 = vector.shape_cast %198 : vector<1x1x16x4xf32> to vector<16x4xf32>
    %c0_368 = arith.constant 0 : index
    %c11_369 = arith.constant 11 : index
    %c2_370 = arith.constant 2 : index
    %c0_371 = arith.constant 0 : index
    %200 = vector.load %arg1[%c0_368, %c11_369, %c2_370, %c0_371] : memref<1x18x18x4xf32, #tpu.memory_space<vmem>>, vector<1x1x16x4xf32>
    %201 = vector.shape_cast %200 : vector<1x1x16x4xf32> to vector<16x4xf32>
    %c0_372 = arith.constant 0 : index
    %c12 = arith.constant 12 : index
    %c0_373 = arith.constant 0 : index
    %c0_374 = arith.constant 0 : index
    %202 = vector.load %arg1[%c0_372, %c12, %c0_373, %c0_374] : memref<1x18x18x4xf32, #tpu.memory_space<vmem>>, vector<1x1x16x4xf32>
    %203 = vector.shape_cast %202 : vector<1x1x16x4xf32> to vector<16x4xf32>
    %c0_375 = arith.constant 0 : index
    %c12_376 = arith.constant 12 : index
    %c1_377 = arith.constant 1 : index
    %c0_378 = arith.constant 0 : index
    %204 = vector.load %arg1[%c0_375, %c12_376, %c1_377, %c0_378] : memref<1x18x18x4xf32, #tpu.memory_space<vmem>>, vector<1x1x16x4xf32>
    %205 = vector.shape_cast %204 : vector<1x1x16x4xf32> to vector<16x4xf32>
    %c0_379 = arith.constant 0 : index
    %c12_380 = arith.constant 12 : index
    %c2_381 = arith.constant 2 : index
    %c0_382 = arith.constant 0 : index
    %206 = vector.load %arg1[%c0_379, %c12_380, %c2_381, %c0_382] : memref<1x18x18x4xf32, #tpu.memory_space<vmem>>, vector<1x1x16x4xf32>
    %207 = vector.shape_cast %206 : vector<1x1x16x4xf32> to vector<16x4xf32>
    %208 = tpu.concatenate %191, %193, %195, %197, %199, %201, %203, %205, %207 in 1 : vector<16x4xf32>, vector<16x4xf32>, vector<16x4xf32>, vector<16x4xf32>, vector<16x4xf32>, vector<16x4xf32>, vector<16x4xf32>, vector<16x4xf32>, vector<16x4xf32> -> vector<16x36xf32>
    %c0_383 = arith.constant 0 : index
    %c11_384 = arith.constant 11 : index
    %c0_385 = arith.constant 0 : index
    %c0_386 = arith.constant 0 : index
    %209 = vector.load %arg1[%c0_383, %c11_384, %c0_385, %c0_386] : memref<1x18x18x4xf32, #tpu.memory_space<vmem>>, vector<1x1x16x4xf32>
    %210 = vector.shape_cast %209 : vector<1x1x16x4xf32> to vector<16x4xf32>
    %c0_387 = arith.constant 0 : index
    %c11_388 = arith.constant 11 : index
    %c1_389 = arith.constant 1 : index
    %c0_390 = arith.constant 0 : index
    %211 = vector.load %arg1[%c0_387, %c11_388, %c1_389, %c0_390] : memref<1x18x18x4xf32, #tpu.memory_space<vmem>>, vector<1x1x16x4xf32>
    %212 = vector.shape_cast %211 : vector<1x1x16x4xf32> to vector<16x4xf32>
    %c0_391 = arith.constant 0 : index
    %c11_392 = arith.constant 11 : index
    %c2_393 = arith.constant 2 : index
    %c0_394 = arith.constant 0 : index
    %213 = vector.load %arg1[%c0_391, %c11_392, %c2_393, %c0_394] : memref<1x18x18x4xf32, #tpu.memory_space<vmem>>, vector<1x1x16x4xf32>
    %214 = vector.shape_cast %213 : vector<1x1x16x4xf32> to vector<16x4xf32>
    %c0_395 = arith.constant 0 : index
    %c12_396 = arith.constant 12 : index
    %c0_397 = arith.constant 0 : index
    %c0_398 = arith.constant 0 : index
    %215 = vector.load %arg1[%c0_395, %c12_396, %c0_397, %c0_398] : memref<1x18x18x4xf32, #tpu.memory_space<vmem>>, vector<1x1x16x4xf32>
    %216 = vector.shape_cast %215 : vector<1x1x16x4xf32> to vector<16x4xf32>
    %c0_399 = arith.constant 0 : index
    %c12_400 = arith.constant 12 : index
    %c1_401 = arith.constant 1 : index
    %c0_402 = arith.constant 0 : index
    %217 = vector.load %arg1[%c0_399, %c12_400, %c1_401, %c0_402] : memref<1x18x18x4xf32, #tpu.memory_space<vmem>>, vector<1x1x16x4xf32>
    %218 = vector.shape_cast %217 : vector<1x1x16x4xf32> to vector<16x4xf32>
    %c0_403 = arith.constant 0 : index
    %c12_404 = arith.constant 12 : index
    %c2_405 = arith.constant 2 : index
    %c0_406 = arith.constant 0 : index
    %219 = vector.load %arg1[%c0_403, %c12_404, %c2_405, %c0_406] : memref<1x18x18x4xf32, #tpu.memory_space<vmem>>, vector<1x1x16x4xf32>
    %220 = vector.shape_cast %219 : vector<1x1x16x4xf32> to vector<16x4xf32>
    %c0_407 = arith.constant 0 : index
    %c13 = arith.constant 13 : index
    %c0_408 = arith.constant 0 : index
    %c0_409 = arith.constant 0 : index
    %221 = vector.load %arg1[%c0_407, %c13, %c0_408, %c0_409] : memref<1x18x18x4xf32, #tpu.memory_space<vmem>>, vector<1x1x16x4xf32>
    %222 = vector.shape_cast %221 : vector<1x1x16x4xf32> to vector<16x4xf32>
    %c0_410 = arith.constant 0 : index
    %c13_411 = arith.constant 13 : index
    %c1_412 = arith.constant 1 : index
    %c0_413 = arith.constant 0 : index
    %223 = vector.load %arg1[%c0_410, %c13_411, %c1_412, %c0_413] : memref<1x18x18x4xf32, #tpu.memory_space<vmem>>, vector<1x1x16x4xf32>
    %224 = vector.shape_cast %223 : vector<1x1x16x4xf32> to vector<16x4xf32>
    %c0_414 = arith.constant 0 : index
    %c13_415 = arith.constant 13 : index
    %c2_416 = arith.constant 2 : index
    %c0_417 = arith.constant 0 : index
    %225 = vector.load %arg1[%c0_414, %c13_415, %c2_416, %c0_417] : memref<1x18x18x4xf32, #tpu.memory_space<vmem>>, vector<1x1x16x4xf32>
    %226 = vector.shape_cast %225 : vector<1x1x16x4xf32> to vector<16x4xf32>
    %227 = tpu.concatenate %210, %212, %214, %216, %218, %220, %222, %224, %226 in 1 : vector<16x4xf32>, vector<16x4xf32>, vector<16x4xf32>, vector<16x4xf32>, vector<16x4xf32>, vector<16x4xf32>, vector<16x4xf32>, vector<16x4xf32>, vector<16x4xf32> -> vector<16x36xf32>
    %c0_418 = arith.constant 0 : index
    %c12_419 = arith.constant 12 : index
    %c0_420 = arith.constant 0 : index
    %c0_421 = arith.constant 0 : index
    %228 = vector.load %arg1[%c0_418, %c12_419, %c0_420, %c0_421] : memref<1x18x18x4xf32, #tpu.memory_space<vmem>>, vector<1x1x16x4xf32>
    %229 = vector.shape_cast %228 : vector<1x1x16x4xf32> to vector<16x4xf32>
    %c0_422 = arith.constant 0 : index
    %c12_423 = arith.constant 12 : index
    %c1_424 = arith.constant 1 : index
    %c0_425 = arith.constant 0 : index
    %230 = vector.load %arg1[%c0_422, %c12_423, %c1_424, %c0_425] : memref<1x18x18x4xf32, #tpu.memory_space<vmem>>, vector<1x1x16x4xf32>
    %231 = vector.shape_cast %230 : vector<1x1x16x4xf32> to vector<16x4xf32>
    %c0_426 = arith.constant 0 : index
    %c12_427 = arith.constant 12 : index
    %c2_428 = arith.constant 2 : index
    %c0_429 = arith.constant 0 : index
    %232 = vector.load %arg1[%c0_426, %c12_427, %c2_428, %c0_429] : memref<1x18x18x4xf32, #tpu.memory_space<vmem>>, vector<1x1x16x4xf32>
    %233 = vector.shape_cast %232 : vector<1x1x16x4xf32> to vector<16x4xf32>
    %c0_430 = arith.constant 0 : index
    %c13_431 = arith.constant 13 : index
    %c0_432 = arith.constant 0 : index
    %c0_433 = arith.constant 0 : index
    %234 = vector.load %arg1[%c0_430, %c13_431, %c0_432, %c0_433] : memref<1x18x18x4xf32, #tpu.memory_space<vmem>>, vector<1x1x16x4xf32>
    %235 = vector.shape_cast %234 : vector<1x1x16x4xf32> to vector<16x4xf32>
    %c0_434 = arith.constant 0 : index
    %c13_435 = arith.constant 13 : index
    %c1_436 = arith.constant 1 : index
    %c0_437 = arith.constant 0 : index
    %236 = vector.load %arg1[%c0_434, %c13_435, %c1_436, %c0_437] : memref<1x18x18x4xf32, #tpu.memory_space<vmem>>, vector<1x1x16x4xf32>
    %237 = vector.shape_cast %236 : vector<1x1x16x4xf32> to vector<16x4xf32>
    %c0_438 = arith.constant 0 : index
    %c13_439 = arith.constant 13 : index
    %c2_440 = arith.constant 2 : index
    %c0_441 = arith.constant 0 : index
    %238 = vector.load %arg1[%c0_438, %c13_439, %c2_440, %c0_441] : memref<1x18x18x4xf32, #tpu.memory_space<vmem>>, vector<1x1x16x4xf32>
    %239 = vector.shape_cast %238 : vector<1x1x16x4xf32> to vector<16x4xf32>
    %c0_442 = arith.constant 0 : index
    %c14 = arith.constant 14 : index
    %c0_443 = arith.constant 0 : index
    %c0_444 = arith.constant 0 : index
    %240 = vector.load %arg1[%c0_442, %c14, %c0_443, %c0_444] : memref<1x18x18x4xf32, #tpu.memory_space<vmem>>, vector<1x1x16x4xf32>
    %241 = vector.shape_cast %240 : vector<1x1x16x4xf32> to vector<16x4xf32>
    %c0_445 = arith.constant 0 : index
    %c14_446 = arith.constant 14 : index
    %c1_447 = arith.constant 1 : index
    %c0_448 = arith.constant 0 : index
    %242 = vector.load %arg1[%c0_445, %c14_446, %c1_447, %c0_448] : memref<1x18x18x4xf32, #tpu.memory_space<vmem>>, vector<1x1x16x4xf32>
    %243 = vector.shape_cast %242 : vector<1x1x16x4xf32> to vector<16x4xf32>
    %c0_449 = arith.constant 0 : index
    %c14_450 = arith.constant 14 : index
    %c2_451 = arith.constant 2 : index
    %c0_452 = arith.constant 0 : index
    %244 = vector.load %arg1[%c0_449, %c14_450, %c2_451, %c0_452] : memref<1x18x18x4xf32, #tpu.memory_space<vmem>>, vector<1x1x16x4xf32>
    %245 = vector.shape_cast %244 : vector<1x1x16x4xf32> to vector<16x4xf32>
    %246 = tpu.concatenate %229, %231, %233, %235, %237, %239, %241, %243, %245 in 1 : vector<16x4xf32>, vector<16x4xf32>, vector<16x4xf32>, vector<16x4xf32>, vector<16x4xf32>, vector<16x4xf32>, vector<16x4xf32>, vector<16x4xf32>, vector<16x4xf32> -> vector<16x36xf32>
    %c0_453 = arith.constant 0 : index
    %c13_454 = arith.constant 13 : index
    %c0_455 = arith.constant 0 : index
    %c0_456 = arith.constant 0 : index
    %247 = vector.load %arg1[%c0_453, %c13_454, %c0_455, %c0_456] : memref<1x18x18x4xf32, #tpu.memory_space<vmem>>, vector<1x1x16x4xf32>
    %248 = vector.shape_cast %247 : vector<1x1x16x4xf32> to vector<16x4xf32>
    %c0_457 = arith.constant 0 : index
    %c13_458 = arith.constant 13 : index
    %c1_459 = arith.constant 1 : index
    %c0_460 = arith.constant 0 : index
    %249 = vector.load %arg1[%c0_457, %c13_458, %c1_459, %c0_460] : memref<1x18x18x4xf32, #tpu.memory_space<vmem>>, vector<1x1x16x4xf32>
    %250 = vector.shape_cast %249 : vector<1x1x16x4xf32> to vector<16x4xf32>
    %c0_461 = arith.constant 0 : index
    %c13_462 = arith.constant 13 : index
    %c2_463 = arith.constant 2 : index
    %c0_464 = arith.constant 0 : index
    %251 = vector.load %arg1[%c0_461, %c13_462, %c2_463, %c0_464] : memref<1x18x18x4xf32, #tpu.memory_space<vmem>>, vector<1x1x16x4xf32>
    %252 = vector.shape_cast %251 : vector<1x1x16x4xf32> to vector<16x4xf32>
    %c0_465 = arith.constant 0 : index
    %c14_466 = arith.constant 14 : index
    %c0_467 = arith.constant 0 : index
    %c0_468 = arith.constant 0 : index
    %253 = vector.load %arg1[%c0_465, %c14_466, %c0_467, %c0_468] : memref<1x18x18x4xf32, #tpu.memory_space<vmem>>, vector<1x1x16x4xf32>
    %254 = vector.shape_cast %253 : vector<1x1x16x4xf32> to vector<16x4xf32>
    %c0_469 = arith.constant 0 : index
    %c14_470 = arith.constant 14 : index
    %c1_471 = arith.constant 1 : index
    %c0_472 = arith.constant 0 : index
    %255 = vector.load %arg1[%c0_469, %c14_470, %c1_471, %c0_472] : memref<1x18x18x4xf32, #tpu.memory_space<vmem>>, vector<1x1x16x4xf32>
    %256 = vector.shape_cast %255 : vector<1x1x16x4xf32> to vector<16x4xf32>
    %c0_473 = arith.constant 0 : index
    %c14_474 = arith.constant 14 : index
    %c2_475 = arith.constant 2 : index
    %c0_476 = arith.constant 0 : index
    %257 = vector.load %arg1[%c0_473, %c14_474, %c2_475, %c0_476] : memref<1x18x18x4xf32, #tpu.memory_space<vmem>>, vector<1x1x16x4xf32>
    %258 = vector.shape_cast %257 : vector<1x1x16x4xf32> to vector<16x4xf32>
    %c0_477 = arith.constant 0 : index
    %c15 = arith.constant 15 : index
    %c0_478 = arith.constant 0 : index
    %c0_479 = arith.constant 0 : index
    %259 = vector.load %arg1[%c0_477, %c15, %c0_478, %c0_479] : memref<1x18x18x4xf32, #tpu.memory_space<vmem>>, vector<1x1x16x4xf32>
    %260 = vector.shape_cast %259 : vector<1x1x16x4xf32> to vector<16x4xf32>
    %c0_480 = arith.constant 0 : index
    %c15_481 = arith.constant 15 : index
    %c1_482 = arith.constant 1 : index
    %c0_483 = arith.constant 0 : index
    %261 = vector.load %arg1[%c0_480, %c15_481, %c1_482, %c0_483] : memref<1x18x18x4xf32, #tpu.memory_space<vmem>>, vector<1x1x16x4xf32>
    %262 = vector.shape_cast %261 : vector<1x1x16x4xf32> to vector<16x4xf32>
    %c0_484 = arith.constant 0 : index
    %c15_485 = arith.constant 15 : index
    %c2_486 = arith.constant 2 : index
    %c0_487 = arith.constant 0 : index
    %263 = vector.load %arg1[%c0_484, %c15_485, %c2_486, %c0_487] : memref<1x18x18x4xf32, #tpu.memory_space<vmem>>, vector<1x1x16x4xf32>
    %264 = vector.shape_cast %263 : vector<1x1x16x4xf32> to vector<16x4xf32>
    %265 = tpu.concatenate %248, %250, %252, %254, %256, %258, %260, %262, %264 in 1 : vector<16x4xf32>, vector<16x4xf32>, vector<16x4xf32>, vector<16x4xf32>, vector<16x4xf32>, vector<16x4xf32>, vector<16x4xf32>, vector<16x4xf32>, vector<16x4xf32> -> vector<16x36xf32>
    %c0_488 = arith.constant 0 : index
    %c14_489 = arith.constant 14 : index
    %c0_490 = arith.constant 0 : index
    %c0_491 = arith.constant 0 : index
    %266 = vector.load %arg1[%c0_488, %c14_489, %c0_490, %c0_491] : memref<1x18x18x4xf32, #tpu.memory_space<vmem>>, vector<1x1x16x4xf32>
    %267 = vector.shape_cast %266 : vector<1x1x16x4xf32> to vector<16x4xf32>
    %c0_492 = arith.constant 0 : index
    %c14_493 = arith.constant 14 : index
    %c1_494 = arith.constant 1 : index
    %c0_495 = arith.constant 0 : index
    %268 = vector.load %arg1[%c0_492, %c14_493, %c1_494, %c0_495] : memref<1x18x18x4xf32, #tpu.memory_space<vmem>>, vector<1x1x16x4xf32>
    %269 = vector.shape_cast %268 : vector<1x1x16x4xf32> to vector<16x4xf32>
    %c0_496 = arith.constant 0 : index
    %c14_497 = arith.constant 14 : index
    %c2_498 = arith.constant 2 : index
    %c0_499 = arith.constant 0 : index
    %270 = vector.load %arg1[%c0_496, %c14_497, %c2_498, %c0_499] : memref<1x18x18x4xf32, #tpu.memory_space<vmem>>, vector<1x1x16x4xf32>
    %271 = vector.shape_cast %270 : vector<1x1x16x4xf32> to vector<16x4xf32>
    %c0_500 = arith.constant 0 : index
    %c15_501 = arith.constant 15 : index
    %c0_502 = arith.constant 0 : index
    %c0_503 = arith.constant 0 : index
    %272 = vector.load %arg1[%c0_500, %c15_501, %c0_502, %c0_503] : memref<1x18x18x4xf32, #tpu.memory_space<vmem>>, vector<1x1x16x4xf32>
    %273 = vector.shape_cast %272 : vector<1x1x16x4xf32> to vector<16x4xf32>
    %c0_504 = arith.constant 0 : index
    %c15_505 = arith.constant 15 : index
    %c1_506 = arith.constant 1 : index
    %c0_507 = arith.constant 0 : index
    %274 = vector.load %arg1[%c0_504, %c15_505, %c1_506, %c0_507] : memref<1x18x18x4xf32, #tpu.memory_space<vmem>>, vector<1x1x16x4xf32>
    %275 = vector.shape_cast %274 : vector<1x1x16x4xf32> to vector<16x4xf32>
    %c0_508 = arith.constant 0 : index
    %c15_509 = arith.constant 15 : index
    %c2_510 = arith.constant 2 : index
    %c0_511 = arith.constant 0 : index
    %276 = vector.load %arg1[%c0_508, %c15_509, %c2_510, %c0_511] : memref<1x18x18x4xf32, #tpu.memory_space<vmem>>, vector<1x1x16x4xf32>
    %277 = vector.shape_cast %276 : vector<1x1x16x4xf32> to vector<16x4xf32>
    %c0_512 = arith.constant 0 : index
    %c16 = arith.constant 16 : index
    %c0_513 = arith.constant 0 : index
    %c0_514 = arith.constant 0 : index
    %278 = vector.load %arg1[%c0_512, %c16, %c0_513, %c0_514] : memref<1x18x18x4xf32, #tpu.memory_space<vmem>>, vector<1x1x16x4xf32>
    %279 = vector.shape_cast %278 : vector<1x1x16x4xf32> to vector<16x4xf32>
    %c0_515 = arith.constant 0 : index
    %c16_516 = arith.constant 16 : index
    %c1_517 = arith.constant 1 : index
    %c0_518 = arith.constant 0 : index
    %280 = vector.load %arg1[%c0_515, %c16_516, %c1_517, %c0_518] : memref<1x18x18x4xf32, #tpu.memory_space<vmem>>, vector<1x1x16x4xf32>
    %281 = vector.shape_cast %280 : vector<1x1x16x4xf32> to vector<16x4xf32>
    %c0_519 = arith.constant 0 : index
    %c16_520 = arith.constant 16 : index
    %c2_521 = arith.constant 2 : index
    %c0_522 = arith.constant 0 : index
    %282 = vector.load %arg1[%c0_519, %c16_520, %c2_521, %c0_522] : memref<1x18x18x4xf32, #tpu.memory_space<vmem>>, vector<1x1x16x4xf32>
    %283 = vector.shape_cast %282 : vector<1x1x16x4xf32> to vector<16x4xf32>
    %284 = tpu.concatenate %267, %269, %271, %273, %275, %277, %279, %281, %283 in 1 : vector<16x4xf32>, vector<16x4xf32>, vector<16x4xf32>, vector<16x4xf32>, vector<16x4xf32>, vector<16x4xf32>, vector<16x4xf32>, vector<16x4xf32>, vector<16x4xf32> -> vector<16x36xf32>
    %c0_523 = arith.constant 0 : index
    %c15_524 = arith.constant 15 : index
    %c0_525 = arith.constant 0 : index
    %c0_526 = arith.constant 0 : index
    %285 = vector.load %arg1[%c0_523, %c15_524, %c0_525, %c0_526] : memref<1x18x18x4xf32, #tpu.memory_space<vmem>>, vector<1x1x16x4xf32>
    %286 = vector.shape_cast %285 : vector<1x1x16x4xf32> to vector<16x4xf32>
    %c0_527 = arith.constant 0 : index
    %c15_528 = arith.constant 15 : index
    %c1_529 = arith.constant 1 : index
    %c0_530 = arith.constant 0 : index
    %287 = vector.load %arg1[%c0_527, %c15_528, %c1_529, %c0_530] : memref<1x18x18x4xf32, #tpu.memory_space<vmem>>, vector<1x1x16x4xf32>
    %288 = vector.shape_cast %287 : vector<1x1x16x4xf32> to vector<16x4xf32>
    %c0_531 = arith.constant 0 : index
    %c15_532 = arith.constant 15 : index
    %c2_533 = arith.constant 2 : index
    %c0_534 = arith.constant 0 : index
    %289 = vector.load %arg1[%c0_531, %c15_532, %c2_533, %c0_534] : memref<1x18x18x4xf32, #tpu.memory_space<vmem>>, vector<1x1x16x4xf32>
    %290 = vector.shape_cast %289 : vector<1x1x16x4xf32> to vector<16x4xf32>
    %c0_535 = arith.constant 0 : index
    %c16_536 = arith.constant 16 : index
    %c0_537 = arith.constant 0 : index
    %c0_538 = arith.constant 0 : index
    %291 = vector.load %arg1[%c0_535, %c16_536, %c0_537, %c0_538] : memref<1x18x18x4xf32, #tpu.memory_space<vmem>>, vector<1x1x16x4xf32>
    %292 = vector.shape_cast %291 : vector<1x1x16x4xf32> to vector<16x4xf32>
    %c0_539 = arith.constant 0 : index
    %c16_540 = arith.constant 16 : index
    %c1_541 = arith.constant 1 : index
    %c0_542 = arith.constant 0 : index
    %293 = vector.load %arg1[%c0_539, %c16_540, %c1_541, %c0_542] : memref<1x18x18x4xf32, #tpu.memory_space<vmem>>, vector<1x1x16x4xf32>
    %294 = vector.shape_cast %293 : vector<1x1x16x4xf32> to vector<16x4xf32>
    %c0_543 = arith.constant 0 : index
    %c16_544 = arith.constant 16 : index
    %c2_545 = arith.constant 2 : index
    %c0_546 = arith.constant 0 : index
    %295 = vector.load %arg1[%c0_543, %c16_544, %c2_545, %c0_546] : memref<1x18x18x4xf32, #tpu.memory_space<vmem>>, vector<1x1x16x4xf32>
    %296 = vector.shape_cast %295 : vector<1x1x16x4xf32> to vector<16x4xf32>
    %c0_547 = arith.constant 0 : index
    %c17 = arith.constant 17 : index
    %c0_548 = arith.constant 0 : index
    %c0_549 = arith.constant 0 : index
    %297 = vector.load %arg1[%c0_547, %c17, %c0_548, %c0_549] : memref<1x18x18x4xf32, #tpu.memory_space<vmem>>, vector<1x1x16x4xf32>
    %298 = vector.shape_cast %297 : vector<1x1x16x4xf32> to vector<16x4xf32>
    %c0_550 = arith.constant 0 : index
    %c17_551 = arith.constant 17 : index
    %c1_552 = arith.constant 1 : index
    %c0_553 = arith.constant 0 : index
    %299 = vector.load %arg1[%c0_550, %c17_551, %c1_552, %c0_553] : memref<1x18x18x4xf32, #tpu.memory_space<vmem>>, vector<1x1x16x4xf32>
    %300 = vector.shape_cast %299 : vector<1x1x16x4xf32> to vector<16x4xf32>
    %c0_554 = arith.constant 0 : index
    %c17_555 = arith.constant 17 : index
    %c2_556 = arith.constant 2 : index
    %c0_557 = arith.constant 0 : index
    %301 = vector.load %arg1[%c0_554, %c17_555, %c2_556, %c0_557] : memref<1x18x18x4xf32, #tpu.memory_space<vmem>>, vector<1x1x16x4xf32>
    %302 = vector.shape_cast %301 : vector<1x1x16x4xf32> to vector<16x4xf32>
    %303 = tpu.concatenate %286, %288, %290, %292, %294, %296, %298, %300, %302 in 1 : vector<16x4xf32>, vector<16x4xf32>, vector<16x4xf32>, vector<16x4xf32>, vector<16x4xf32>, vector<16x4xf32>, vector<16x4xf32>, vector<16x4xf32>, vector<16x4xf32> -> vector<16x36xf32>
    %304 = tpu.concatenate %18, %37, %56, %75, %94, %113, %132, %151, %170, %189, %208, %227, %246, %265, %284, %303 in 0 : vector<16x36xf32>, vector<16x36xf32>, vector<16x36xf32>, vector<16x36xf32>, vector<16x36xf32>, vector<16x36xf32>, vector<16x36xf32>, vector<16x36xf32>, vector<16x36xf32>, vector<16x36xf32>, vector<16x36xf32>, vector<16x36xf32>, vector<16x36xf32>, vector<16x36xf32>, vector<16x36xf32>, vector<16x36xf32> -> vector<256x36xf32>
    %305 = arith.truncf %304 : vector<256x36xf32> to vector<256x36xbf16>
    %c0_558 = arith.constant 0 : index
    %c0_559 = arith.constant 0 : index
    %306 = vector.load %arg2[%c0_558, %c0_559] : memref<36x8xbf16, #tpu.memory_space<vmem>>, vector<36x8xbf16>
    %cst = arith.constant dense<0.000000e+00> : vector<256x8xf32>
    %307 = tpu.matmul %305, %306, %cst {dimension_numbers = #tpu.dot_dimension_numbers<[1], [0], [0], [1], [0, 0, 1, 1], [], []>} : vector<256x36xbf16>, vector<36x8xbf16>, vector<256x8xf32> -> vector<256x8xf32>
    %c0_560 = arith.constant 0 : index
    %c0_561 = arith.constant 0 : index
    %308 = vector.load %arg3[%c0_560, %c0_561] : memref<1x8xf32, #tpu.memory_space<vmem>>, vector<1x8xf32>
    %309 = vector.broadcast %308 : vector<1x8xf32> to vector<256x8xf32>
    %310 = arith.addf %307, %309 : vector<256x8xf32>
    %cst_562 = arith.constant 0.000000e+00 : f32
    %311 = vector.broadcast %cst_562 : f32 to vector<256x8xf32>
    %312 = arith.maximumf %310, %311 : vector<256x8xf32>
    %c0_563 = arith.constant 0 : index
    %c0_564 = arith.constant 0 : index
    %313 = vector.load %arg4[%c0_563, %c0_564] : memref<64x256xf32, #tpu.memory_space<vmem>>, vector<64x256xf32>
    %cst_565 = arith.constant dense<0.000000e+00> : vector<64x8xf32>
    %314 = tpu.matmul %313, %312, %cst_565 {dimension_numbers = #tpu.dot_dimension_numbers<[1], [0], [0], [1], [0, 0, 1, 1], [], []>} : vector<64x256xf32>, vector<256x8xf32>, vector<64x8xf32> -> vector<64x8xf32>
    %cst_566 = arith.constant 0.000000e+00 : f32
    %315 = vector.broadcast %cst_566 : f32 to vector<1x10x10x8xf32>
    %c0_567 = arith.constant 0 : index
    %c0_568 = arith.constant 0 : index
    %c0_569 = arith.constant 0 : index
    %c0_570 = arith.constant 0 : index
    %316 = vector.load %arg6[%c0_567, %c0_568, %c0_569, %c0_570] : memref<1x10x10x8xf32, #tpu.memory_space<vmem>>, vector<1x10x10x8xf32>
    tpu.vector_store %arg6[%c0_567, %c0_568, %c0_569, %c0_570], %315 {strides = array<i32>} : memref<1x10x10x8xf32, #tpu.memory_space<vmem>>, vector<1x10x10x8xf32>,
    %317 = vector.extract_strided_slice %314 {offsets = [0, 0], sizes = [8, 8], strides = [1, 1]} : vector<64x8xf32> to vector<8x8xf32>
    %c0_571 = arith.constant 0 : index
    %c1_572 = arith.constant 1 : index
    %c1_573 = arith.constant 1 : index
    %c0_574 = arith.constant 0 : index
    %318 = vector.load %arg6[%c0_571, %c1_572, %c1_573, %c0_574] : memref<1x10x10x8xf32, #tpu.memory_space<vmem>>, vector<1x1x8x8xf32>
    %319 = vector.shape_cast %318 : vector<1x1x8x8xf32> to vector<8x8xf32>
    %320 = vector.shape_cast %317 : vector<8x8xf32> to vector<1x1x8x8xf32>
    tpu.vector_store %arg6[%c0_571, %c1_572, %c1_573, %c0_574], %320 {strides = array<i32>} : memref<1x10x10x8xf32, #tpu.memory_space<vmem>>, vector<1x1x8x8xf32>,
    %321 = vector.extract_strided_slice %314 {offsets = [8, 0], sizes = [8, 8], strides = [1, 1]} : vector<64x8xf32> to vector<8x8xf32>
    %c0_575 = arith.constant 0 : index
    %c2_576 = arith.constant 2 : index
    %c1_577 = arith.constant 1 : index
    %c0_578 = arith.constant 0 : index
    %322 = vector.load %arg6[%c0_575, %c2_576, %c1_577, %c0_578] : memref<1x10x10x8xf32, #tpu.memory_space<vmem>>, vector<1x1x8x8xf32>
    %323 = vector.shape_cast %322 : vector<1x1x8x8xf32> to vector<8x8xf32>
    %324 = vector.shape_cast %321 : vector<8x8xf32> to vector<1x1x8x8xf32>
    tpu.vector_store %arg6[%c0_575, %c2_576, %c1_577, %c0_578], %324 {strides = array<i32>} : memref<1x10x10x8xf32, #tpu.memory_space<vmem>>, vector<1x1x8x8xf32>,
    %325 = vector.extract_strided_slice %314 {offsets = [16, 0], sizes = [8, 8], strides = [1, 1]} : vector<64x8xf32> to vector<8x8xf32>
    %c0_579 = arith.constant 0 : index
    %c3_580 = arith.constant 3 : index
    %c1_581 = arith.constant 1 : index
    %c0_582 = arith.constant 0 : index
    %326 = vector.load %arg6[%c0_579, %c3_580, %c1_581, %c0_582] : memref<1x10x10x8xf32, #tpu.memory_space<vmem>>, vector<1x1x8x8xf32>
    %327 = vector.shape_cast %326 : vector<1x1x8x8xf32> to vector<8x8xf32>
    %328 = vector.shape_cast %325 : vector<8x8xf32> to vector<1x1x8x8xf32>
    tpu.vector_store %arg6[%c0_579, %c3_580, %c1_581, %c0_582], %328 {strides = array<i32>} : memref<1x10x10x8xf32, #tpu.memory_space<vmem>>, vector<1x1x8x8xf32>,
    %329 = vector.extract_strided_slice %314 {offsets = [24, 0], sizes = [8, 8], strides = [1, 1]} : vector<64x8xf32> to vector<8x8xf32>
    %c0_583 = arith.constant 0 : index
    %c4_584 = arith.constant 4 : index
    %c1_585 = arith.constant 1 : index
    %c0_586 = arith.constant 0 : index
    %330 = vector.load %arg6[%c0_583, %c4_584, %c1_585, %c0_586] : memref<1x10x10x8xf32, #tpu.memory_space<vmem>>, vector<1x1x8x8xf32>
    %331 = vector.shape_cast %330 : vector<1x1x8x8xf32> to vector<8x8xf32>
    %332 = vector.shape_cast %329 : vector<8x8xf32> to vector<1x1x8x8xf32>
    tpu.vector_store %arg6[%c0_583, %c4_584, %c1_585, %c0_586], %332 {strides = array<i32>} : memref<1x10x10x8xf32, #tpu.memory_space<vmem>>, vector<1x1x8x8xf32>,
    %333 = vector.extract_strided_slice %314 {offsets = [32, 0], sizes = [8, 8], strides = [1, 1]} : vector<64x8xf32> to vector<8x8xf32>
    %c0_587 = arith.constant 0 : index
    %c5_588 = arith.constant 5 : index
    %c1_589 = arith.constant 1 : index
    %c0_590 = arith.constant 0 : index
    %334 = vector.load %arg6[%c0_587, %c5_588, %c1_589, %c0_590] : memref<1x10x10x8xf32, #tpu.memory_space<vmem>>, vector<1x1x8x8xf32>
    %335 = vector.shape_cast %334 : vector<1x1x8x8xf32> to vector<8x8xf32>
    %336 = vector.shape_cast %333 : vector<8x8xf32> to vector<1x1x8x8xf32>
    tpu.vector_store %arg6[%c0_587, %c5_588, %c1_589, %c0_590], %336 {strides = array<i32>} : memref<1x10x10x8xf32, #tpu.memory_space<vmem>>, vector<1x1x8x8xf32>,
    %337 = vector.extract_strided_slice %314 {offsets = [40, 0], sizes = [8, 8], strides = [1, 1]} : vector<64x8xf32> to vector<8x8xf32>
    %c0_591 = arith.constant 0 : index
    %c6_592 = arith.constant 6 : index
    %c1_593 = arith.constant 1 : index
    %c0_594 = arith.constant 0 : index
    %338 = vector.load %arg6[%c0_591, %c6_592, %c1_593, %c0_594] : memref<1x10x10x8xf32, #tpu.memory_space<vmem>>, vector<1x1x8x8xf32>
    %339 = vector.shape_cast %338 : vector<1x1x8x8xf32> to vector<8x8xf32>
    %340 = vector.shape_cast %337 : vector<8x8xf32> to vector<1x1x8x8xf32>
    tpu.vector_store %arg6[%c0_591, %c6_592, %c1_593, %c0_594], %340 {strides = array<i32>} : memref<1x10x10x8xf32, #tpu.memory_space<vmem>>, vector<1x1x8x8xf32>,
    %341 = vector.extract_strided_slice %314 {offsets = [48, 0], sizes = [8, 8], strides = [1, 1]} : vector<64x8xf32> to vector<8x8xf32>
    %c0_595 = arith.constant 0 : index
    %c7_596 = arith.constant 7 : index
    %c1_597 = arith.constant 1 : index
    %c0_598 = arith.constant 0 : index
    %342 = vector.load %arg6[%c0_595, %c7_596, %c1_597, %c0_598] : memref<1x10x10x8xf32, #tpu.memory_space<vmem>>, vector<1x1x8x8xf32>
    %343 = vector.shape_cast %342 : vector<1x1x8x8xf32> to vector<8x8xf32>
    %344 = vector.shape_cast %341 : vector<8x8xf32> to vector<1x1x8x8xf32>
    tpu.vector_store %arg6[%c0_595, %c7_596, %c1_597, %c0_598], %344 {strides = array<i32>} : memref<1x10x10x8xf32, #tpu.memory_space<vmem>>, vector<1x1x8x8xf32>,
    %345 = vector.extract_strided_slice %314 {offsets = [56, 0], sizes = [8, 8], strides = [1, 1]} : vector<64x8xf32> to vector<8x8xf32>
    %c0_599 = arith.constant 0 : index
    %c8_600 = arith.constant 8 : index
    %c1_601 = arith.constant 1 : index
    %c0_602 = arith.constant 0 : index
    %346 = vector.load %arg6[%c0_599, %c8_600, %c1_601, %c0_602] : memref<1x10x10x8xf32, #tpu.memory_space<vmem>>, vector<1x1x8x8xf32>
    %347 = vector.shape_cast %346 : vector<1x1x8x8xf32> to vector<8x8xf32>
    %348 = vector.shape_cast %345 : vector<8x8xf32> to vector<1x1x8x8xf32>
    tpu.vector_store %arg6[%c0_599, %c8_600, %c1_601, %c0_602], %348 {strides = array<i32>} : memref<1x10x10x8xf32, #tpu.memory_space<vmem>>, vector<1x1x8x8xf32>,
    %c0_603 = arith.constant 0 : index
    %c0_604 = arith.constant 0 : index
    %c0_605 = arith.constant 0 : index
    %c0_606 = arith.constant 0 : index
    %349 = vector.load %arg6[%c0_603, %c0_604, %c0_605, %c0_606] : memref<1x10x10x8xf32, #tpu.memory_space<vmem>>, vector<1x10x10x8xf32>
    %350 = vector.shape_cast %349 : vector<1x10x10x8xf32> to vector<10x10x8xf32>
    %351 = vector.extract_strided_slice %350 {offsets = [2, 1, 0], sizes = [1, 8, 8], strides = [1, 1, 1]} : vector<10x10x8xf32> to vector<1x8x8xf32>
    %352 = vector.shape_cast %351 : vector<1x8x8xf32> to vector<8x8xf32>
    %353 = vector.extract_strided_slice %350 {offsets = [1, 1, 0], sizes = [1, 8, 8], strides = [1, 1, 1]} : vector<10x10x8xf32> to vector<1x8x8xf32>
    %354 = vector.shape_cast %353 : vector<1x8x8xf32> to vector<8x8xf32>
    %355 = vector.extract_strided_slice %350 {offsets = [0, 1, 0], sizes = [1, 8, 8], strides = [1, 1, 1]} : vector<10x10x8xf32> to vector<1x8x8xf32>
    %356 = vector.shape_cast %355 : vector<1x8x8xf32> to vector<8x8xf32>
    %357 = vector.extract_strided_slice %350 {offsets = [2, 0, 0], sizes = [1, 8, 8], strides = [1, 1, 1]} : vector<10x10x8xf32> to vector<1x8x8xf32>
    %358 = vector.shape_cast %357 : vector<1x8x8xf32> to vector<8x8xf32>
    %359 = vector.extract_strided_slice %350 {offsets = [1, 0, 0], sizes = [1, 8, 8], strides = [1, 1, 1]} : vector<10x10x8xf32> to vector<1x8x8xf32>
    %360 = vector.shape_cast %359 : vector<1x8x8xf32> to vector<8x8xf32>
    %361 = vector.extract_strided_slice %350 {offsets = [0, 0, 0], sizes = [1, 8, 8], strides = [1, 1, 1]} : vector<10x10x8xf32> to vector<1x8x8xf32>
    %362 = vector.shape_cast %361 : vector<1x8x8xf32> to vector<8x8xf32>
    %363 = tpu.concatenate %352, %354, %356, %358, %360, %362 in 1 : vector<8x8xf32>, vector<8x8xf32>, vector<8x8xf32>, vector<8x8xf32>, vector<8x8xf32>, vector<8x8xf32> -> vector<8x48xf32>
    %364 = arith.truncf %363 : vector<8x48xf32> to vector<8x48xbf16>
    %c0_607 = arith.constant 0 : index
    %c0_608 = arith.constant 0 : index
    %365 = vector.load %arg5[%c0_607, %c0_608] : memref<48x16xbf16, #tpu.memory_space<vmem>>, vector<48x16xbf16>
    %cst_609 = arith.constant dense<0.000000e+00> : vector<8x16xf32>
    %366 = tpu.matmul %364, %365, %cst_609 {dimension_numbers = #tpu.dot_dimension_numbers<[1], [0], [0], [1], [0, 0, 1, 1], [], []>} : vector<8x48xbf16>, vector<48x16xbf16>, vector<8x16xf32> -> vector<8x16xf32>
    %c0_610 = arith.constant 0 : index
    %c0_611 = arith.constant 0 : index
    %c0_612 = arith.constant 0 : index
    %c0_613 = arith.constant 0 : index
    %367 = vector.load %arg7[%c0_610, %c0_611, %c0_612, %c0_613] : memref<1x8x8x16xf32, #tpu.memory_space<vmem>>, vector<1x1x8x16xf32>
    %368 = vector.shape_cast %367 : vector<1x1x8x16xf32> to vector<8x16xf32>
    %369 = vector.shape_cast %366 : vector<8x16xf32> to vector<1x1x8x16xf32>
    tpu.vector_store %arg7[%c0_610, %c0_611, %c0_612, %c0_613], %369 {strides = array<i32>} : memref<1x8x8x16xf32, #tpu.memory_space<vmem>>, vector<1x1x8x16xf32>,
    %370 = vector.extract_strided_slice %350 {offsets = [3, 1, 0], sizes = [1, 8, 8], strides = [1, 1, 1]} : vector<10x10x8xf32> to vector<1x8x8xf32>
    %371 = vector.shape_cast %370 : vector<1x8x8xf32> to vector<8x8xf32>
    %372 = vector.extract_strided_slice %350 {offsets = [2, 1, 0], sizes = [1, 8, 8], strides = [1, 1, 1]} : vector<10x10x8xf32> to vector<1x8x8xf32>
    %373 = vector.shape_cast %372 : vector<1x8x8xf32> to vector<8x8xf32>
    %374 = vector.extract_strided_slice %350 {offsets = [1, 1, 0], sizes = [1, 8, 8], strides = [1, 1, 1]} : vector<10x10x8xf32> to vector<1x8x8xf32>
    %375 = vector.shape_cast %374 : vector<1x8x8xf32> to vector<8x8xf32>
    %376 = vector.extract_strided_slice %350 {offsets = [3, 0, 0], sizes = [1, 8, 8], strides = [1, 1, 1]} : vector<10x10x8xf32> to vector<1x8x8xf32>
    %377 = vector.shape_cast %376 : vector<1x8x8xf32> to vector<8x8xf32>
    %378 = vector.extract_strided_slice %350 {offsets = [2, 0, 0], sizes = [1, 8, 8], strides = [1, 1, 1]} : vector<10x10x8xf32> to vector<1x8x8xf32>
    %379 = vector.shape_cast %378 : vector<1x8x8xf32> to vector<8x8xf32>
    %380 = vector.extract_strided_slice %350 {offsets = [1, 0, 0], sizes = [1, 8, 8], strides = [1, 1, 1]} : vector<10x10x8xf32> to vector<1x8x8xf32>
    %381 = vector.shape_cast %380 : vector<1x8x8xf32> to vector<8x8xf32>
    %382 = tpu.concatenate %371, %373, %375, %377, %379, %381 in 1 : vector<8x8xf32>, vector<8x8xf32>, vector<8x8xf32>, vector<8x8xf32>, vector<8x8xf32>, vector<8x8xf32> -> vector<8x48xf32>
    %383 = arith.truncf %382 : vector<8x48xf32> to vector<8x48xbf16>
    %c0_614 = arith.constant 0 : index
    %c0_615 = arith.constant 0 : index
    %384 = vector.load %arg5[%c0_614, %c0_615] : memref<48x16xbf16, #tpu.memory_space<vmem>>, vector<48x16xbf16>
    %cst_616 = arith.constant dense<0.000000e+00> : vector<8x16xf32>
    %385 = tpu.matmul %383, %384, %cst_616 {dimension_numbers = #tpu.dot_dimension_numbers<[1], [0], [0], [1], [0, 0, 1, 1], [], []>} : vector<8x48xbf16>, vector<48x16xbf16>, vector<8x16xf32> -> vector<8x16xf32>
    %c0_617 = arith.constant 0 : index
    %c1_618 = arith.constant 1 : index
    %c0_619 = arith.constant 0 : index
    %c0_620 = arith.constant 0 : index
    %386 = vector.load %arg7[%c0_617, %c1_618, %c0_619, %c0_620] : memref<1x8x8x16xf32, #tpu.memory_space<vmem>>, vector<1x1x8x16xf32>
    %387 = vector.shape_cast %386 : vector<1x1x8x16xf32> to vector<8x16xf32>
    %388 = vector.shape_cast %385 : vector<8x16xf32> to vector<1x1x8x16xf32>
    tpu.vector_store %arg7[%c0_617, %c1_618, %c0_619, %c0_620], %388 {strides = array<i32>} : memref<1x8x8x16xf32, #tpu.memory_space<vmem>>, vector<1x1x8x16xf32>,
    %389 = vector.extract_strided_slice %350 {offsets = [4, 1, 0], sizes = [1, 8, 8], strides = [1, 1, 1]} : vector<10x10x8xf32> to vector<1x8x8xf32>
    %390 = vector.shape_cast %389 : vector<1x8x8xf32> to vector<8x8xf32>
    %391 = vector.extract_strided_slice %350 {offsets = [3, 1, 0], sizes = [1, 8, 8], strides = [1, 1, 1]} : vector<10x10x8xf32> to vector<1x8x8xf32>
    %392 = vector.shape_cast %391 : vector<1x8x8xf32> to vector<8x8xf32>
    %393 = vector.extract_strided_slice %350 {offsets = [2, 1, 0], sizes = [1, 8, 8], strides = [1, 1, 1]} : vector<10x10x8xf32> to vector<1x8x8xf32>
    %394 = vector.shape_cast %393 : vector<1x8x8xf32> to vector<8x8xf32>
    %395 = vector.extract_strided_slice %350 {offsets = [4, 0, 0], sizes = [1, 8, 8], strides = [1, 1, 1]} : vector<10x10x8xf32> to vector<1x8x8xf32>
    %396 = vector.shape_cast %395 : vector<1x8x8xf32> to vector<8x8xf32>
    %397 = vector.extract_strided_slice %350 {offsets = [3, 0, 0], sizes = [1, 8, 8], strides = [1, 1, 1]} : vector<10x10x8xf32> to vector<1x8x8xf32>
    %398 = vector.shape_cast %397 : vector<1x8x8xf32> to vector<8x8xf32>
    %399 = vector.extract_strided_slice %350 {offsets = [2, 0, 0], sizes = [1, 8, 8], strides = [1, 1, 1]} : vector<10x10x8xf32> to vector<1x8x8xf32>
    %400 = vector.shape_cast %399 : vector<1x8x8xf32> to vector<8x8xf32>
    %401 = tpu.concatenate %390, %392, %394, %396, %398, %400 in 1 : vector<8x8xf32>, vector<8x8xf32>, vector<8x8xf32>, vector<8x8xf32>, vector<8x8xf32>, vector<8x8xf32> -> vector<8x48xf32>
    %402 = arith.truncf %401 : vector<8x48xf32> to vector<8x48xbf16>
    %c0_621 = arith.constant 0 : index
    %c0_622 = arith.constant 0 : index
    %403 = vector.load %arg5[%c0_621, %c0_622] : memref<48x16xbf16, #tpu.memory_space<vmem>>, vector<48x16xbf16>
    %cst_623 = arith.constant dense<0.000000e+00> : vector<8x16xf32>
    %404 = tpu.matmul %402, %403, %cst_623 {dimension_numbers = #tpu.dot_dimension_numbers<[1], [0], [0], [1], [0, 0, 1, 1], [], []>} : vector<8x48xbf16>, vector<48x16xbf16>, vector<8x16xf32> -> vector<8x16xf32>
    %c0_624 = arith.constant 0 : index
    %c2_625 = arith.constant 2 : index
    %c0_626 = arith.constant 0 : index
    %c0_627 = arith.constant 0 : index
    %405 = vector.load %arg7[%c0_624, %c2_625, %c0_626, %c0_627] : memref<1x8x8x16xf32, #tpu.memory_space<vmem>>, vector<1x1x8x16xf32>
    %406 = vector.shape_cast %405 : vector<1x1x8x16xf32> to vector<8x16xf32>
    %407 = vector.shape_cast %404 : vector<8x16xf32> to vector<1x1x8x16xf32>
    tpu.vector_store %arg7[%c0_624, %c2_625, %c0_626, %c0_627], %407 {strides = array<i32>} : memref<1x8x8x16xf32, #tpu.memory_space<vmem>>, vector<1x1x8x16xf32>,
    %408 = vector.extract_strided_slice %350 {offsets = [5, 1, 0], sizes = [1, 8, 8], strides = [1, 1, 1]} : vector<10x10x8xf32> to vector<1x8x8xf32>
    %409 = vector.shape_cast %408 : vector<1x8x8xf32> to vector<8x8xf32>
    %410 = vector.extract_strided_slice %350 {offsets = [4, 1, 0], sizes = [1, 8, 8], strides = [1, 1, 1]} : vector<10x10x8xf32> to vector<1x8x8xf32>
    %411 = vector.shape_cast %410 : vector<1x8x8xf32> to vector<8x8xf32>
    %412 = vector.extract_strided_slice %350 {offsets = [3, 1, 0], sizes = [1, 8, 8], strides = [1, 1, 1]} : vector<10x10x8xf32> to vector<1x8x8xf32>
    %413 = vector.shape_cast %412 : vector<1x8x8xf32> to vector<8x8xf32>
    %414 = vector.extract_strided_slice %350 {offsets = [5, 0, 0], sizes = [1, 8, 8], strides = [1, 1, 1]} : vector<10x10x8xf32> to vector<1x8x8xf32>
    %415 = vector.shape_cast %414 : vector<1x8x8xf32> to vector<8x8xf32>
    %416 = vector.extract_strided_slice %350 {offsets = [4, 0, 0], sizes = [1, 8, 8], strides = [1, 1, 1]} : vector<10x10x8xf32> to vector<1x8x8xf32>
    %417 = vector.shape_cast %416 : vector<1x8x8xf32> to vector<8x8xf32>
    %418 = vector.extract_strided_slice %350 {offsets = [3, 0, 0], sizes = [1, 8, 8], strides = [1, 1, 1]} : vector<10x10x8xf32> to vector<1x8x8xf32>
    %419 = vector.shape_cast %418 : vector<1x8x8xf32> to vector<8x8xf32>
    %420 = tpu.concatenate %409, %411, %413, %415, %417, %419 in 1 : vector<8x8xf32>, vector<8x8xf32>, vector<8x8xf32>, vector<8x8xf32>, vector<8x8xf32>, vector<8x8xf32> -> vector<8x48xf32>
    %421 = arith.truncf %420 : vector<8x48xf32> to vector<8x48xbf16>
    %c0_628 = arith.constant 0 : index
    %c0_629 = arith.constant 0 : index
    %422 = vector.load %arg5[%c0_628, %c0_629] : memref<48x16xbf16, #tpu.memory_space<vmem>>, vector<48x16xbf16>
    %cst_630 = arith.constant dense<0.000000e+00> : vector<8x16xf32>
    %423 = tpu.matmul %421, %422, %cst_630 {dimension_numbers = #tpu.dot_dimension_numbers<[1], [0], [0], [1], [0, 0, 1, 1], [], []>} : vector<8x48xbf16>, vector<48x16xbf16>, vector<8x16xf32> -> vector<8x16xf32>
    %c0_631 = arith.constant 0 : index
    %c3_632 = arith.constant 3 : index
    %c0_633 = arith.constant 0 : index
    %c0_634 = arith.constant 0 : index
    %424 = vector.load %arg7[%c0_631, %c3_632, %c0_633, %c0_634] : memref<1x8x8x16xf32, #tpu.memory_space<vmem>>, vector<1x1x8x16xf32>
    %425 = vector.shape_cast %424 : vector<1x1x8x16xf32> to vector<8x16xf32>
    %426 = vector.shape_cast %423 : vector<8x16xf32> to vector<1x1x8x16xf32>
    tpu.vector_store %arg7[%c0_631, %c3_632, %c0_633, %c0_634], %426 {strides = array<i32>} : memref<1x8x8x16xf32, #tpu.memory_space<vmem>>, vector<1x1x8x16xf32>,
    %427 = vector.extract_strided_slice %350 {offsets = [6, 1, 0], sizes = [1, 8, 8], strides = [1, 1, 1]} : vector<10x10x8xf32> to vector<1x8x8xf32>
    %428 = vector.shape_cast %427 : vector<1x8x8xf32> to vector<8x8xf32>
    %429 = vector.extract_strided_slice %350 {offsets = [5, 1, 0], sizes = [1, 8, 8], strides = [1, 1, 1]} : vector<10x10x8xf32> to vector<1x8x8xf32>
    %430 = vector.shape_cast %429 : vector<1x8x8xf32> to vector<8x8xf32>
    %431 = vector.extract_strided_slice %350 {offsets = [4, 1, 0], sizes = [1, 8, 8], strides = [1, 1, 1]} : vector<10x10x8xf32> to vector<1x8x8xf32>
    %432 = vector.shape_cast %431 : vector<1x8x8xf32> to vector<8x8xf32>
    %433 = vector.extract_strided_slice %350 {offsets = [6, 0, 0], sizes = [1, 8, 8], strides = [1, 1, 1]} : vector<10x10x8xf32> to vector<1x8x8xf32>
    %434 = vector.shape_cast %433 : vector<1x8x8xf32> to vector<8x8xf32>
    %435 = vector.extract_strided_slice %350 {offsets = [5, 0, 0], sizes = [1, 8, 8], strides = [1, 1, 1]} : vector<10x10x8xf32> to vector<1x8x8xf32>
    %436 = vector.shape_cast %435 : vector<1x8x8xf32> to vector<8x8xf32>
    %437 = vector.extract_strided_slice %350 {offsets = [4, 0, 0], sizes = [1, 8, 8], strides = [1, 1, 1]} : vector<10x10x8xf32> to vector<1x8x8xf32>
    %438 = vector.shape_cast %437 : vector<1x8x8xf32> to vector<8x8xf32>
    %439 = tpu.concatenate %428, %430, %432, %434, %436, %438 in 1 : vector<8x8xf32>, vector<8x8xf32>, vector<8x8xf32>, vector<8x8xf32>, vector<8x8xf32>, vector<8x8xf32> -> vector<8x48xf32>
    %440 = arith.truncf %439 : vector<8x48xf32> to vector<8x48xbf16>
    %c0_635 = arith.constant 0 : index
    %c0_636 = arith.constant 0 : index
    %441 = vector.load %arg5[%c0_635, %c0_636] : memref<48x16xbf16, #tpu.memory_space<vmem>>, vector<48x16xbf16>
    %cst_637 = arith.constant dense<0.000000e+00> : vector<8x16xf32>
    %442 = tpu.matmul %440, %441, %cst_637 {dimension_numbers = #tpu.dot_dimension_numbers<[1], [0], [0], [1], [0, 0, 1, 1], [], []>} : vector<8x48xbf16>, vector<48x16xbf16>, vector<8x16xf32> -> vector<8x16xf32>
    %c0_638 = arith.constant 0 : index
    %c4_639 = arith.constant 4 : index
    %c0_640 = arith.constant 0 : index
    %c0_641 = arith.constant 0 : index
    %443 = vector.load %arg7[%c0_638, %c4_639, %c0_640, %c0_641] : memref<1x8x8x16xf32, #tpu.memory_space<vmem>>, vector<1x1x8x16xf32>
    %444 = vector.shape_cast %443 : vector<1x1x8x16xf32> to vector<8x16xf32>
    %445 = vector.shape_cast %442 : vector<8x16xf32> to vector<1x1x8x16xf32>
    tpu.vector_store %arg7[%c0_638, %c4_639, %c0_640, %c0_641], %445 {strides = array<i32>} : memref<1x8x8x16xf32, #tpu.memory_space<vmem>>, vector<1x1x8x16xf32>,
    %446 = vector.extract_strided_slice %350 {offsets = [7, 1, 0], sizes = [1, 8, 8], strides = [1, 1, 1]} : vector<10x10x8xf32> to vector<1x8x8xf32>
    %447 = vector.shape_cast %446 : vector<1x8x8xf32> to vector<8x8xf32>
    %448 = vector.extract_strided_slice %350 {offsets = [6, 1, 0], sizes = [1, 8, 8], strides = [1, 1, 1]} : vector<10x10x8xf32> to vector<1x8x8xf32>
    %449 = vector.shape_cast %448 : vector<1x8x8xf32> to vector<8x8xf32>
    %450 = vector.extract_strided_slice %350 {offsets = [5, 1, 0], sizes = [1, 8, 8], strides = [1, 1, 1]} : vector<10x10x8xf32> to vector<1x8x8xf32>
    %451 = vector.shape_cast %450 : vector<1x8x8xf32> to vector<8x8xf32>
    %452 = vector.extract_strided_slice %350 {offsets = [7, 0, 0], sizes = [1, 8, 8], strides = [1, 1, 1]} : vector<10x10x8xf32> to vector<1x8x8xf32>
    %453 = vector.shape_cast %452 : vector<1x8x8xf32> to vector<8x8xf32>
    %454 = vector.extract_strided_slice %350 {offsets = [6, 0, 0], sizes = [1, 8, 8], strides = [1, 1, 1]} : vector<10x10x8xf32> to vector<1x8x8xf32>
    %455 = vector.shape_cast %454 : vector<1x8x8xf32> to vector<8x8xf32>
    %456 = vector.extract_strided_slice %350 {offsets = [5, 0, 0], sizes = [1, 8, 8], strides = [1, 1, 1]} : vector<10x10x8xf32> to vector<1x8x8xf32>
    %457 = vector.shape_cast %456 : vector<1x8x8xf32> to vector<8x8xf32>
    %458 = tpu.concatenate %447, %449, %451, %453, %455, %457 in 1 : vector<8x8xf32>, vector<8x8xf32>, vector<8x8xf32>, vector<8x8xf32>, vector<8x8xf32>, vector<8x8xf32> -> vector<8x48xf32>
    %459 = arith.truncf %458 : vector<8x48xf32> to vector<8x48xbf16>
    %c0_642 = arith.constant 0 : index
    %c0_643 = arith.constant 0 : index
    %460 = vector.load %arg5[%c0_642, %c0_643] : memref<48x16xbf16, #tpu.memory_space<vmem>>, vector<48x16xbf16>
    %cst_644 = arith.constant dense<0.000000e+00> : vector<8x16xf32>
    %461 = tpu.matmul %459, %460, %cst_644 {dimension_numbers = #tpu.dot_dimension_numbers<[1], [0], [0], [1], [0, 0, 1, 1], [], []>} : vector<8x48xbf16>, vector<48x16xbf16>, vector<8x16xf32> -> vector<8x16xf32>
    %c0_645 = arith.constant 0 : index
    %c5_646 = arith.constant 5 : index
    %c0_647 = arith.constant 0 : index
    %c0_648 = arith.constant 0 : index
    %462 = vector.load %arg7[%c0_645, %c5_646, %c0_647, %c0_648] : memref<1x8x8x16xf32, #tpu.memory_space<vmem>>, vector<1x1x8x16xf32>
    %463 = vector.shape_cast %462 : vector<1x1x8x16xf32> to vector<8x16xf32>
    %464 = vector.shape_cast %461 : vector<8x16xf32> to vector<1x1x8x16xf32>
    tpu.vector_store %arg7[%c0_645, %c5_646, %c0_647, %c0_648], %464 {strides = array<i32>} : memref<1x8x8x16xf32, #tpu.memory_space<vmem>>, vector<1x1x8x16xf32>,
    %465 = vector.extract_strided_slice %350 {offsets = [8, 1, 0], sizes = [1, 8, 8], strides = [1, 1, 1]} : vector<10x10x8xf32> to vector<1x8x8xf32>
    %466 = vector.shape_cast %465 : vector<1x8x8xf32> to vector<8x8xf32>
    %467 = vector.extract_strided_slice %350 {offsets = [7, 1, 0], sizes = [1, 8, 8], strides = [1, 1, 1]} : vector<10x10x8xf32> to vector<1x8x8xf32>
    %468 = vector.shape_cast %467 : vector<1x8x8xf32> to vector<8x8xf32>
    %469 = vector.extract_strided_slice %350 {offsets = [6, 1, 0], sizes = [1, 8, 8], strides = [1, 1, 1]} : vector<10x10x8xf32> to vector<1x8x8xf32>
    %470 = vector.shape_cast %469 : vector<1x8x8xf32> to vector<8x8xf32>
    %471 = vector.extract_strided_slice %350 {offsets = [8, 0, 0], sizes = [1, 8, 8], strides = [1, 1, 1]} : vector<10x10x8xf32> to vector<1x8x8xf32>
    %472 = vector.shape_cast %471 : vector<1x8x8xf32> to vector<8x8xf32>
    %473 = vector.extract_strided_slice %350 {offsets = [7, 0, 0], sizes = [1, 8, 8], strides = [1, 1, 1]} : vector<10x10x8xf32> to vector<1x8x8xf32>
    %474 = vector.shape_cast %473 : vector<1x8x8xf32> to vector<8x8xf32>
    %475 = vector.extract_strided_slice %350 {offsets = [6, 0, 0], sizes = [1, 8, 8], strides = [1, 1, 1]} : vector<10x10x8xf32> to vector<1x8x8xf32>
    %476 = vector.shape_cast %475 : vector<1x8x8xf32> to vector<8x8xf32>
    %477 = tpu.concatenate %466, %468, %470, %472, %474, %476 in 1 : vector<8x8xf32>, vector<8x8xf32>, vector<8x8xf32>, vector<8x8xf32>, vector<8x8xf32>, vector<8x8xf32> -> vector<8x48xf32>
    %478 = arith.truncf %477 : vector<8x48xf32> to vector<8x48xbf16>
    %c0_649 = arith.constant 0 : index
    %c0_650 = arith.constant 0 : index
    %479 = vector.load %arg5[%c0_649, %c0_650] : memref<48x16xbf16, #tpu.memory_space<vmem>>, vector<48x16xbf16>
    %cst_651 = arith.constant dense<0.000000e+00> : vector<8x16xf32>
    %480 = tpu.matmul %478, %479, %cst_651 {dimension_numbers = #tpu.dot_dimension_numbers<[1], [0], [0], [1], [0, 0, 1, 1], [], []>} : vector<8x48xbf16>, vector<48x16xbf16>, vector<8x16xf32> -> vector<8x16xf32>
    %c0_652 = arith.constant 0 : index
    %c6_653 = arith.constant 6 : index
    %c0_654 = arith.constant 0 : index
    %c0_655 = arith.constant 0 : index
    %481 = vector.load %arg7[%c0_652, %c6_653, %c0_654, %c0_655] : memref<1x8x8x16xf32, #tpu.memory_space<vmem>>, vector<1x1x8x16xf32>
    %482 = vector.shape_cast %481 : vector<1x1x8x16xf32> to vector<8x16xf32>
    %483 = vector.shape_cast %480 : vector<8x16xf32> to vector<1x1x8x16xf32>
    tpu.vector_store %arg7[%c0_652, %c6_653, %c0_654, %c0_655], %483 {strides = array<i32>} : memref<1x8x8x16xf32, #tpu.memory_space<vmem>>, vector<1x1x8x16xf32>,
    %484 = vector.extract_strided_slice %350 {offsets = [9, 1, 0], sizes = [1, 8, 8], strides = [1, 1, 1]} : vector<10x10x8xf32> to vector<1x8x8xf32>
    %485 = vector.shape_cast %484 : vector<1x8x8xf32> to vector<8x8xf32>
    %486 = vector.extract_strided_slice %350 {offsets = [8, 1, 0], sizes = [1, 8, 8], strides = [1, 1, 1]} : vector<10x10x8xf32> to vector<1x8x8xf32>
    %487 = vector.shape_cast %486 : vector<1x8x8xf32> to vector<8x8xf32>
    %488 = vector.extract_strided_slice %350 {offsets = [7, 1, 0], sizes = [1, 8, 8], strides = [1, 1, 1]} : vector<10x10x8xf32> to vector<1x8x8xf32>
    %489 = vector.shape_cast %488 : vector<1x8x8xf32> to vector<8x8xf32>
    %490 = vector.extract_strided_slice %350 {offsets = [9, 0, 0], sizes = [1, 8, 8], strides = [1, 1, 1]} : vector<10x10x8xf32> to vector<1x8x8xf32>
    %491 = vector.shape_cast %490 : vector<1x8x8xf32> to vector<8x8xf32>
    %492 = vector.extract_strided_slice %350 {offsets = [8, 0, 0], sizes = [1, 8, 8], strides = [1, 1, 1]} : vector<10x10x8xf32> to vector<1x8x8xf32>
    %493 = vector.shape_cast %492 : vector<1x8x8xf32> to vector<8x8xf32>
    %494 = vector.extract_strided_slice %350 {offsets = [7, 0, 0], sizes = [1, 8, 8], strides = [1, 1, 1]} : vector<10x10x8xf32> to vector<1x8x8xf32>
    %495 = vector.shape_cast %494 : vector<1x8x8xf32> to vector<8x8xf32>
    %496 = tpu.concatenate %485, %487, %489, %491, %493, %495 in 1 : vector<8x8xf32>, vector<8x8xf32>, vector<8x8xf32>, vector<8x8xf32>, vector<8x8xf32>, vector<8x8xf32> -> vector<8x48xf32>
    %497 = arith.truncf %496 : vector<8x48xf32> to vector<8x48xbf16>
    %c0_656 = arith.constant 0 : index
    %c0_657 = arith.constant 0 : index
    %498 = vector.load %arg5[%c0_656, %c0_657] : memref<48x16xbf16, #tpu.memory_space<vmem>>, vector<48x16xbf16>
    %cst_658 = arith.constant dense<0.000000e+00> : vector<8x16xf32>
    %499 = tpu.matmul %497, %498, %cst_658 {dimension_numbers = #tpu.dot_dimension_numbers<[1], [0], [0], [1], [0, 0, 1, 1], [], []>} : vector<8x48xbf16>, vector<48x16xbf16>, vector<8x16xf32> -> vector<8x16xf32>
    %c0_659 = arith.constant 0 : index
    %c7_660 = arith.constant 7 : index
    %c0_661 = arith.constant 0 : index
    %c0_662 = arith.constant 0 : index
    %500 = vector.load %arg7[%c0_659, %c7_660, %c0_661, %c0_662] : memref<1x8x8x16xf32, #tpu.memory_space<vmem>>, vector<1x1x8x16xf32>
    %501 = vector.shape_cast %500 : vector<1x1x8x16xf32> to vector<8x16xf32>
    %502 = vector.shape_cast %499 : vector<8x16xf32> to vector<1x1x8x16xf32>
    tpu.vector_store %arg7[%c0_659, %c7_660, %c0_661, %c0_662], %502 {strides = array<i32>} : memref<1x8x8x16xf32, #tpu.memory_space<vmem>>, vector<1x1x8x16xf32>,
    return
  }
  func.func @transform_0(%arg0: i32) -> (i32, i32, i32, i32) {
    %c0_i32 = arith.constant 0 : i32
    %c0_i32_0 = arith.constant 0 : i32
    %c0_i32_1 = arith.constant 0 : i32
    %c0_i32_2 = arith.constant 0 : i32
    return %arg0, %c0_i32, %c0_i32_0, %c0_i32_1 : i32, i32, i32, i32
  }
  func.func @transform_1(%arg0: i32) -> (i32, i32) {
    %c0_i32 = arith.constant 0 : i32
    %c0_i32_0 = arith.constant 0 : i32
    %c0_i32_1 = arith.constant 0 : i32
    return %c0_i32, %c0_i32_0 : i32, i32
  }
  func.func @transform_2(%arg0: i32) -> (i32, i32) {
    %c0_i32 = arith.constant 0 : i32
    %c0_i32_0 = arith.constant 0 : i32
    %c0_i32_1 = arith.constant 0 : i32
    return %c0_i32, %c0_i32_0 : i32, i32
  }
  func.func @transform_3(%arg0: i32) -> (i32, i32) {
    %c0_i32 = arith.constant 0 : i32
    %c0_i32_0 = arith.constant 0 : i32
    %c0_i32_1 = arith.constant 0 : i32
    return %c0_i32, %c0_i32_0 : i32, i32
  }
  func.func @transform_4(%arg0: i32) -> (i32, i32) {
    %c0_i32 = arith.constant 0 : i32
    %c0_i32_0 = arith.constant 0 : i32
    %c0_i32_1 = arith.constant 0 : i32
    return %c0_i32, %c0_i32_0 : i32, i32
  }
  func.func @transform_5(%arg0: i32) -> (i32, i32, i32, i32) {
    %c0_i32 = arith.constant 0 : i32
    %c0_i32_0 = arith.constant 0 : i32
    %c0_i32_1 = arith.constant 0 : i32
    %c0_i32_2 = arith.constant 0 : i32
    return %arg0, %c0_i32, %c0_i32_0, %c0_i32_1 : i32, i32, i32, i32
  }
  func.func @transform_6(%arg0: i32) -> (i32, i32, i32, i32) {
    %c0_i32 = arith.constant 0 : i32
    %c0_i32_0 = arith.constant 0 : i32
    %c0_i32_1 = arith.constant 0 : i32
    %c0_i32_2 = arith.constant 0 : i32
    return %arg0, %c0_i32, %c0_i32_0, %c0_i32_1 : i32, i32, i32, i32
  }
}

</mosaic_0001>

<llo_original>
// kernel: _lambda_.3
$region0: #{_lambda_.3}
  #allocation0 [shape = 'u32[]', space=smem, size = 0x4, offset = 0x4, fixed_abs, tag = 'smem constant byte address 0x4 - core index']
  #allocation1 [shape = 'u32[72,128]{1,0:T(1,128)}', space=vmem, size = 0x9000, scoped, tag = 'internal scratch']
  %s0 = inlined_call_operand.vmem [shape: f32[2,10,10,8], index: 0, kind: input, shape index: {}]
  %s1 = inlined_call_operand.vmem [shape: bf16[72,16], index: 1, kind: input, shape index: {}]
  %s2 = inlined_call_operand.vmem [shape: f32[1,16], index: 2, kind: input, shape index: {}]
  %s3 = inlined_call_operand.vmem [shape: f32[16,64], index: 3, kind: input, shape index: {}]
  %s4 = inlined_call_operand.vmem [shape: bf16[96,16], index: 4, kind: input, shape index: {}]
  %s5 = inlined_call_operand.hbm [shape: f32[2,6,6,16], index: 5, kind: output, shape index: {0}]
  %s6 = inlined_call_operand.vmem [shape: f32[2,4,4,16], index: 6, kind: output, shape index: {1}]
  %7 = xla_tuple %s5, %s6
  %s8 = sld [smem:[#allocation0]]
  $region61: #{_lambda_.3} parent=0
    _
  %s10 = ssub.s32 1, %s8
  %s11 = scalar_select 0, %s10, %s8
  $region1: #{_lambda_.3} parent=0
    #allocation2 [shape = 'u8[49152]{0}', space=vmem, size = 0xc000, scoped, tag = 'output window, operand 0']
    #allocation3 [shape = 's32[2]{0}', space=sflag, size = 0x8, scoped, tag = 'scoped memory for _lambda_.3']
    %12 = vsyncpa [#allocation3], 0
    %s13 = scalar_lea.sflag [#allocation3], 1
    %14 = vsyncpa %s13, 0
    loop: start=0, step=1, limit=4
    $region2: #{_lambda_.3} parent=1 // loop_pre_header
      _
    $region3: #{_lambda_.3} parent=1 // loop_header
      %s16 = sphi 0, %s20
      %p17 = scmp.ge.s32.totalorder %s16, 4
      %s26 = sphi 0, %s28
      %s29 = sphi 0, %s26
      %s30 = sphi 0, %s29
      %s46 = sphi 0, %s30
      %s50 = sphi 0, %s50
      %s52 = sphi 0, %s50
      %s53 = sphi 0, %s52
      %s67 = sphi 0, %s53
      %s71 = sphi 0, %s71
      %s73 = sphi 0, %s71
      %s74 = sphi 0, %s73
      %s88 = sphi 0, %s74
      %s92 = sphi 0, %s92
      %s94 = sphi 0, %s92
      %s95 = sphi 0, %s94
      %s109 = sphi 0, %s95
      %s113 = sphi 0, %s113
      %s115 = sphi 0, %s113
      %s116 = sphi 0, %s115
      %s130 = sphi 0, %s116
      %s136 = sphi 0, %s138
      %s139 = sphi 0, %s136
      %s140 = sphi 0, %s139
      %s156 = sphi 0, %s140
      %s162 = sphi 0, %s164
      %s165 = sphi 0, %s162
      %s166 = sphi 0, %s165
      %s182 = sphi 0, %s166
    $region4: #{_lambda_.3} parent=1 // loop_header_branch
      %19 = sbr.rel (%p17) target = $region8
    $region5: #{_lambda_.3} parent=1 // loop_body
      %s21 = ssub.s32 %s16, 1
      %s22 = ssub.s32 %s16, 2
      %s23 = sadd.s32 %s16, 1
      %s24 = ssub.s32 %s16, %s23
      %p25 = scmp.eq.s32.totalorder %s24, 0
      %s27 = sadd.s32 %s26, 1
      %s28 = scalar_select %p25, %s26, %s27
      %p31 = pneg %p25
      %p32 = scmp.eq.s32.totalorder %s16, 1
      %p33 = por %p31, %p32
      %p34 = scmp.ne.s32.totalorder %s26, %s29
      %p35 = scmp.eq.s32.totalorder %s16, 0
      %p36 = por %p34, %p35
      %p37 = scmp.ne.s32.totalorder %s26, %s29
      %p38 = scmp.eq.s32.totalorder %s21, 1
      %p39 = por %p37, %p38
      %p40 = scmp.ne.s32.totalorder %s29, %s30
      %p41 = scmp.eq.s32.totalorder %s21, 0
      %p42 = por %p40, %p41
      %p43 = scmp.ne.s32.totalorder %s29, %s30
      %p44 = scmp.eq.s32.totalorder %s22, 1
      %p45 = por %p43, %p44
      %p47 = scmp.ne.s32.totalorder %s30, %s46
      %p48 = scmp.eq.s32.totalorder %s22, 0
      %p49 = por %p47, %p48
      %s51 = sadd.s32 %s50, 1
      %p54 = scmp.eq.s32.totalorder %s16, 1
      %p55 = scmp.ne.s32.totalorder %s50, %s52
      %p56 = scmp.eq.s32.totalorder %s16, 0
      %p57 = por %p55, %p56
      %p58 = scmp.ne.s32.totalorder %s50, %s52
      %p59 = scmp.eq.s32.totalorder %s21, 1
      %p60 = por %p58, %p59
      %p61 = scmp.ne.s32.totalorder %s52, %s53
      %p62 = scmp.eq.s32.totalorder %s21, 0
      %p63 = por %p61, %p62
      %p64 = scmp.ne.s32.totalorder %s52, %s53
      %p65 = scmp.eq.s32.totalorder %s22, 1
      %p66 = por %p64, %p65
      %p68 = scmp.ne.s32.totalorder %s53, %s67
      %p69 = scmp.eq.s32.totalorder %s22, 0
      %p70 = por %p68, %p69
      %s72 = sadd.s32 %s71, 1
      %p75 = scmp.eq.s32.totalorder %s16, 1
      %p76 = scmp.ne.s32.totalorder %s71, %s73
      %p77 = scmp.eq.s32.totalorder %s16, 0
      %p78 = por %p76, %p77
      %p79 = scmp.ne.s32.totalorder %s71, %s73
      %p80 = scmp.eq.s32.totalorder %s21, 1
      %p81 = por %p79, %p80
      %p82 = scmp.ne.s32.totalorder %s73, %s74
      %p83 = scmp.eq.s32.totalorder %s21, 0
      %p84 = por %p82, %p83
      %p85 = scmp.ne.s32.totalorder %s73, %s74
      %p86 = scmp.eq.s32.totalorder %s22, 1
      %p87 = por %p85, %p86
      %p89 = scmp.ne.s32.totalorder %s74, %s88
      %p90 = scmp.eq.s32.totalorder %s22, 0
      %p91 = por %p89, %p90
      %s93 = sadd.s32 %s92, 1
      %p96 = scmp.eq.s32.totalorder %s16, 1
      %p97 = scmp.ne.s32.totalorder %s92, %s94
      %p98 = scmp.eq.s32.totalorder %s16, 0
      %p99 = por %p97, %p98
      %p100 = scmp.ne.s32.totalorder %s92, %s94
      %p101 = scmp.eq.s32.totalorder %s21, 1
      %p102 = por %p100, %p101
      %p103 = scmp.ne.s32.totalorder %s94, %s95
      %p104 = scmp.eq.s32.totalorder %s21, 0
      %p105 = por %p103, %p104
      %p106 = scmp.ne.s32.totalorder %s94, %s95
      %p107 = scmp.eq.s32.totalorder %s22, 1
      %p108 = por %p106, %p107
      %p110 = scmp.ne.s32.totalorder %s95, %s109
      %p111 = scmp.eq.s32.totalorder %s22, 0
      %p112 = por %p110, %p111
      %s114 = sadd.s32 %s113, 1
      %p117 = scmp.eq.s32.totalorder %s16, 1
      %p118 = scmp.ne.s32.totalorder %s113, %s115
      %p119 = scmp.eq.s32.totalorder %s16, 0
      %p120 = por %p118, %p119
      %p121 = scmp.ne.s32.totalorder %s113, %s115
      %p122 = scmp.eq.s32.totalorder %s21, 1
      %p123 = por %p121, %p122
      %p124 = scmp.ne.s32.totalorder %s115, %s116
      %p125 = scmp.eq.s32.totalorder %s21, 0
      %p126 = por %p124, %p125
      %p127 = scmp.ne.s32.totalorder %s115, %s116
      %p128 = scmp.eq.s32.totalorder %s22, 1
      %p129 = por %p127, %p128
      %p131 = scmp.ne.s32.totalorder %s116, %s130
      %p132 = scmp.eq.s32.totalorder %s22, 0
      %p133 = por %p131, %p132
      %s134 = ssub.s32 %s16, %s23
      %p135 = scmp.eq.s32.totalorder %s134, 0
      %s137 = sadd.s32 %s136, 1
      %s138 = scalar_select %p135, %s136, %s137
      %p141 = pneg %p135
      %p142 = scmp.eq.s32.totalorder %s16, 1
      %p143 = por %p141, %p142
      %p144 = scmp.ne.s32.totalorder %s136, %s139
      %p145 = scmp.eq.s32.totalorder %s16, 0
      %p146 = por %p144, %p145
      %p147 = scmp.ne.s32.totalorder %s136, %s139
      %p148 = scmp.eq.s32.totalorder %s21, 1
      %p149 = por %p147, %p148
      %p150 = scmp.ne.s32.totalorder %s139, %s140
      %p151 = scmp.eq.s32.totalorder %s21, 0
      %p152 = por %p150, %p151
      %p153 = scmp.ne.s32.totalorder %s139, %s140
      %p154 = scmp.eq.s32.totalorder %s22, 1
      %p155 = por %p153, %p154
      %p157 = scmp.ne.s32.totalorder %s140, %s156
      %p158 = scmp.eq.s32.totalorder %s22, 0
      %p159 = por %p157, %p158
      %s160 = ssub.s32 %s16, %s23
      %p161 = scmp.eq.s32.totalorder %s160, 0
      %s163 = sadd.s32 %s162, 1
      %s164 = scalar_select %p161, %s162, %s163
      %p167 = pneg %p161
      %p168 = scmp.eq.s32.totalorder %s16, 1
      %p169 = por %p167, %p168
      %p170 = scmp.ne.s32.totalorder %s162, %s165
      %p171 = scmp.eq.s32.totalorder %s16, 0
      %p172 = por %p170, %p171
      %p173 = scmp.ne.s32.totalorder %s162, %s165
      %p174 = scmp.eq.s32.totalorder %s21, 1
      %p175 = por %p173, %p174
      %p176 = scmp.ne.s32.totalorder %s165, %s166
      %p177 = scmp.eq.s32.totalorder %s21, 0
      %p178 = por %p176, %p177
      %p179 = scmp.ne.s32.totalorder %s165, %s166
      %p180 = scmp.eq.s32.totalorder %s22, 1
      %p181 = por %p179, %p180
      %p183 = scmp.ne.s32.totalorder %s166, %s182
      %p184 = scmp.eq.s32.totalorder %s22, 0
      %p185 = por %p183, %p184
      %p186 = scmp.le.s32.totalorder 1, %s16
      %p187 = scmp.lt.s32.totalorder %s16, 3
      %p188 = pnand %p186, %p187
      %p189 = pneg %p188
      // Predicated region
      $region9: #{_lambda_.3} parent=5 // pred_check
        _
      $region10: #{_lambda_.3} parent=5 // pred_check_branch
        %191 = sbr.rel (%p188) target = $region12
      $region11: #{_lambda_.3} parent=5 // pred_region
        %s192 = ssub.s32 %s16, 1
        // Predicated region
        $region13: #{_lambda_.3} parent=11 // pred_check
          %p193 = pneg %p63
        $region14: #{_lambda_.3} parent=11 // pred_check_branch
          %195 = sbr.rel (%p193) target = $region16
        $region15: #{_lambda_.3} parent=11 // pred_region
          _
        $region16: #{_lambda_.3} parent=11 // pred_fallthru
          _
        // Predicated region
        $region17: #{_lambda_.3} parent=11 // pred_check
          %p196 = pneg %p84
        $region18: #{_lambda_.3} parent=11 // pred_check_branch
          %198 = sbr.rel (%p196) target = $region20
        $region19: #{_lambda_.3} parent=11 // pred_region
          _
        $region20: #{_lambda_.3} parent=11 // pred_fallthru
          _
        // Predicated region
        $region21: #{_lambda_.3} parent=11 // pred_check
          %p199 = pneg %p105
        $region22: #{_lambda_.3} parent=11 // pred_check_branch
          %201 = sbr.rel (%p199) target = $region24
        $region23: #{_lambda_.3} parent=11 // pred_region
          _
        $region24: #{_lambda_.3} parent=11 // pred_fallthru
          _
        // Predicated region
        $region25: #{_lambda_.3} parent=11 // pred_check
          %p202 = pneg %p126
        $region26: #{_lambda_.3} parent=11 // pred_check_branch
          %204 = sbr.rel (%p202) target = $region28
        $region27: #{_lambda_.3} parent=11 // pred_region
          _
        $region28: #{_lambda_.3} parent=11 // pred_fallthru
          _
      $region12: #{_lambda_.3} parent=5 // pred_fallthru
        _
      %p205 = scmp.lt.s32.totalorder %s16, 2
      // Predicated region
      $region29: #{_lambda_.3} parent=5 // pred_check
        %p206 = pneg %p205
      $region30: #{_lambda_.3} parent=5 // pred_check_branch
        %208 = sbr.rel (%p206) target = $region32
      $region31: #{_lambda_.3} parent=5 // pred_region
        // Predicated region
        $region33: #{_lambda_.3} parent=31 // pred_check
          %p209 = pneg %p36
        $region34: #{_lambda_.3} parent=31 // pred_check_branch
          %211 = sbr.rel (%p209) target = $region36
        $region35: #{_lambda_.3} parent=31 // pred_region
          %p212 = scmp.lt.s32.totalorder %s16, 1
          %s213 = scalar_select %p212, %s16, 1
          %s214 = smul.addr %s213, 20
          %s215 = smul.addr %s214, 8
          %s216 = scalar_lea.vmem %s0, %s215
        $region36: #{_lambda_.3} parent=31 // pred_fallthru
          _
      $region32: #{_lambda_.3} parent=5 // pred_fallthru
        _
      %p217 = scmp.le.s32.totalorder 1, %s16
      %p218 = scmp.lt.s32.totalorder %s16, 3
      %p219 = pnand %p217, %p218
      %p220 = pneg %p219
      // Predicated region
      $region37: #{_lambda_.3} parent=5 // pred_check
        _
      $region38: #{_lambda_.3} parent=5 // pred_check_branch
        %222 = sbr.rel (%p219) target = $region40
      $region39: #{_lambda_.3} parent=5 // pred_region
        %s223 = ssub.s32 %s16, 1
        %p224 = scmp.lt.s32.totalorder %s21, 1
        %s225 = scalar_select %p224, %s21, 1
        %s226 = smul.addr %s225, 20
        %s227 = smul.addr %s226, 8
        %s228 = scalar_lea.vmem %s0, %s227
        %p229 = pneg %p42
        %p230 = pneg %p39
        %p231 = pneg %p63
        %p232 = pneg %p60
        %p233 = pneg %p84
        %p234 = pneg %p81
        %p235 = pneg %p105
        %p236 = pneg %p102
        %p237 = pneg %p126
        %p238 = pneg %p123
        %p239 = pneg %p152
        %p240 = pneg %p149
        %s241 = sand.u32 %s139, 1
        %s242 = scalar_lea.sflag [#allocation3], %s241
        %s243 = sand.u32 %s139, 1
        %s244 = smul.addr %s243, 48
        %s245 = scalar_lea.vmem [#allocation2], %s244
        %p246 = pneg %p178
        %p247 = pneg %p175
        %p248 = scmp.lt.s32.totalorder %s21, 1
        %s249 = scalar_select %p248, %s21, 1
        %s250 = smul.addr %s249, 4
        %s251 = smul.addr %s250, 4
        %s252 = scalar_lea.vmem %s6, %s251
        %p253 = scmp.lt.s32.totalorder %s21, 1
        %s254 = scalar_select %p253, %s21, 1
        %s255 = smul.addr %s254, 20
        %s256 = smul.addr %s255, 8
        %s257 = scalar_lea.vmem %s0, %s256
        %p258 = scmp.lt.s32.totalorder %s21, 1
        %s259 = scalar_select %p258, %s21, 1
        %s260 = smul.addr %s259, 4
        %s261 = smul.addr %s260, 4
        %s262 = scalar_lea.vmem %s6, %s261
        %v264 = vld [vmem:[%s257] sm:$0xff]
        %v265 = vld [vmem:[%s257 + $0x1] sm:$0xff]
        %v266 = vld [vmem:[%s257 + $0x2] sm:$0xff]
        %s267 = scalar_lea.vmem %s257, 16
        %v268 = vld [vmem:[%s267] sm:$0xff]
        %v269 = vld [vmem:[%s267 + $0x1] sm:$0xff]
        %v270 = vld [vmem:[%s267 + $0x2] sm:$0xff]
        %s271 = scalar_lea.vmem %s257, 32
        %v272 = vld [vmem:[%s271] sm:$0xff]
        %v273 = vld [vmem:[%s271 + $0x1] sm:$0xff]
        %v274 = vld [vmem:[%s271 + $0x2] sm:$0xff]
        %276 = vrot.lane.b32.xlu0 %v265, 8
        %v277 = vpop.permute.xlu0 %276
        %280 = vrot.lane.b32.xlu0 %v266, 16
        %v281 = vpop.permute.xlu0 %280
        %284 = vrot.lane.b32.xlu0 %v268, 24
        %v285 = vpop.permute.xlu0 %284
        %288 = vrot.lane.b32.xlu0 %v269, 32
        %v289 = vpop.permute.xlu0 %288
        %292 = vrot.lane.b32.xlu0 %v270, 40
        %v293 = vpop.permute.xlu0 %292
        %296 = vrot.lane.b32.xlu0 %v272, 48
        %v297 = vpop.permute.xlu0 %296
        %300 = vrot.lane.b32.xlu0 %v273, 56
        %v301 = vpop.permute.xlu0 %300
        %304 = vrot.lane.b32.xlu0 %v274, 64
        %v305 = vpop.permute.xlu0 %304
        %vm307 = vcmask 64512
        %v308 = vsel %vm307, %v264, %v277
        %vm309 = vcmask 130048
        %v310 = vsel %vm309, %v308, %v281
        %vm311 = vcmask 195584
        %v312 = vsel %vm311, %v310, %v285
        %vm313 = vcmask 261120
        %v314 = vsel %vm313, %v312, %v289
        %vm315 = vcmask 326656
        %v316 = vsel %vm315, %v314, %v293
        %vm317 = vcmask 392192
        %v318 = vsel %vm317, %v316, %v297
        %vm319 = vcmask 457728
        %v320 = vsel %vm319, %v318, %v301
        %vm321 = vcmask 523264
        %v322 = vsel %vm321, %v320, %v305
        %s323 = scalar_lea.vmem %s257, 48
        %v324 = vld [vmem:[%s323] sm:$0xff]
        %v325 = vld [vmem:[%s323 + $0x1] sm:$0xff]
        %v326 = vld [vmem:[%s323 + $0x2] sm:$0xff]
        %327 = vrot.lane.b32.xlu0 %v269, 8
        %v328 = vpop.permute.xlu0 %327
        %330 = vrot.lane.b32.xlu0 %v270, 16
        %v331 = vpop.permute.xlu0 %330
        %333 = vrot.lane.b32.xlu0 %v272, 24
        %v334 = vpop.permute.xlu0 %333
        %336 = vrot.lane.b32.xlu0 %v273, 32
        %v337 = vpop.permute.xlu0 %336
        %339 = vrot.lane.b32.xlu0 %v274, 40
        %v340 = vpop.permute.xlu0 %339
        %343 = vrot.lane.b32.xlu0 %v324, 48
        %v344 = vpop.permute.xlu0 %343
        %347 = vrot.lane.b32.xlu0 %v325, 56
        %v348 = vpop.permute.xlu0 %347
        %351 = vrot.lane.b32.xlu0 %v326, 64
        %v352 = vpop.permute.xlu0 %351
        %v354 = vsel %vm307, %v268, %v328
        %v355 = vsel %vm309, %v354, %v331
        %v356 = vsel %vm311, %v355, %v334
        %v357 = vsel %vm313, %v356, %v337
        %v358 = vsel %vm315, %v357, %v340
        %v359 = vsel %vm317, %v358, %v344
        %v360 = vsel %vm319, %v359, %v348
        %v361 = vsel %vm321, %v360, %v352
        %s362 = scalar_lea.vmem %s257, 64
        %v363 = vld [vmem:[%s362] sm:$0xff]
        %v364 = vld [vmem:[%s362 + $0x1] sm:$0xff]
        %v365 = vld [vmem:[%s362 + $0x2] sm:$0xff]
        %366 = vrot.lane.b32.xlu0 %v273, 8
        %v367 = vpop.permute.xlu0 %366
        %369 = vrot.lane.b32.xlu0 %v274, 16
        %v370 = vpop.permute.xlu0 %369
        %372 = vrot.lane.b32.xlu0 %v324, 24
        %v373 = vpop.permute.xlu0 %372
        %375 = vrot.lane.b32.xlu0 %v325, 32
        %v376 = vpop.permute.xlu0 %375
        %378 = vrot.lane.b32.xlu0 %v326, 40
        %v379 = vpop.permute.xlu0 %378
        %382 = vrot.lane.b32.xlu0 %v363, 48
        %v383 = vpop.permute.xlu0 %382
        %386 = vrot.lane.b32.xlu0 %v364, 56
        %v387 = vpop.permute.xlu0 %386
        %390 = vrot.lane.b32.xlu0 %v365, 64
        %v391 = vpop.permute.xlu0 %390
        %v393 = vsel %vm307, %v272, %v367
        %v394 = vsel %vm309, %v393, %v370
        %v395 = vsel %vm311, %v394, %v373
        %v396 = vsel %vm313, %v395, %v376
        %v397 = vsel %vm315, %v396, %v379
        %v398 = vsel %vm317, %v397, %v383
        %v399 = vsel %vm319, %v398, %v387
        %v400 = vsel %vm321, %v399, %v391
        %s401 = scalar_lea.vmem %s257, 80
        %v402 = vld [vmem:[%s401] sm:$0xff]
        %v403 = vld [vmem:[%s401 + $0x1] sm:$0xff]
        %v404 = vld [vmem:[%s401 + $0x2] sm:$0xff]
        %405 = vrot.lane.b32.xlu0 %v325, 8
        %v406 = vpop.permute.xlu0 %405
        %408 = vrot.lane.b32.xlu0 %v326, 16
        %v409 = vpop.permute.xlu0 %408
        %411 = vrot.lane.b32.xlu0 %v363, 24
        %v412 = vpop.permute.xlu0 %411
        %414 = vrot.lane.b32.xlu0 %v364, 32
        %v415 = vpop.permute.xlu0 %414
        %417 = vrot.lane.b32.xlu0 %v365, 40
        %v418 = vpop.permute.xlu0 %417
        %421 = vrot.lane.b32.xlu0 %v402, 48
        %v422 = vpop.permute.xlu0 %421
        %425 = vrot.lane.b32.xlu0 %v403, 56
        %v426 = vpop.permute.xlu0 %425
        %429 = vrot.lane.b32.xlu0 %v404, 64
        %v430 = vpop.permute.xlu0 %429
        %v432 = vsel %vm307, %v324, %v406
        %v433 = vsel %vm309, %v432, %v409
        %v434 = vsel %vm311, %v433, %v412
        %v435 = vsel %vm313, %v434, %v415
        %v436 = vsel %vm315, %v435, %v418
        %v437 = vsel %vm317, %v436, %v422
        %v438 = vsel %vm319, %v437, %v426
        %v439 = vsel %vm321, %v438, %v430
        %s440 = scalar_lea.vmem %s257, 96
        %v441 = vld [vmem:[%s440] sm:$0xff]
        %v442 = vld [vmem:[%s440 + $0x1] sm:$0xff]
        %v443 = vld [vmem:[%s440 + $0x2] sm:$0xff]
        %444 = vrot.lane.b32.xlu0 %v364, 8
        %v445 = vpop.permute.xlu0 %444
        %447 = vrot.lane.b32.xlu0 %v365, 16
        %v448 = vpop.permute.xlu0 %447
        %450 = vrot.lane.b32.xlu0 %v402, 24
        %v451 = vpop.permute.xlu0 %450
        %453 = vrot.lane.b32.xlu0 %v403, 32
        %v454 = vpop.permute.xlu0 %453
        %456 = vrot.lane.b32.xlu0 %v404, 40
        %v457 = vpop.permute.xlu0 %456
        %460 = vrot.lane.b32.xlu0 %v441, 48
        %v461 = vpop.permute.xlu0 %460
        %464 = vrot.lane.b32.xlu0 %v442, 56
        %v465 = vpop.permute.xlu0 %464
        %468 = vrot.lane.b32.xlu0 %v443, 64
        %v469 = vpop.permute.xlu0 %468
        %v471 = vsel %vm307, %v363, %v445
        %v472 = vsel %vm309, %v471, %v448
        %v473 = vsel %vm311, %v472, %v451
        %v474 = vsel %vm313, %v473, %v454
        %v475 = vsel %vm315, %v474, %v457
        %v476 = vsel %vm317, %v475, %v461
        %v477 = vsel %vm319, %v476, %v465
        %v478 = vsel %vm321, %v477, %v469
        %s479 = scalar_lea.vmem %s257, 112
        %v480 = vld [vmem:[%s479] sm:$0xff]
        %v481 = vld [vmem:[%s479 + $0x1] sm:$0xff]
        %v482 = vld [vmem:[%s479 + $0x2] sm:$0xff]
        %483 = vrot.lane.b32.xlu0 %v403, 8
        %v484 = vpop.permute.xlu0 %483
        %486 = vrot.lane.b32.xlu0 %v404, 16
        %v487 = vpop.permute.xlu0 %486
        %489 = vrot.lane.b32.xlu0 %v441, 24
        %v490 = vpop.permute.xlu0 %489
        %492 = vrot.lane.b32.xlu0 %v442, 32
        %v493 = vpop.permute.xlu0 %492
        %495 = vrot.lane.b32.xlu0 %v443, 40
        %v496 = vpop.permute.xlu0 %495
        %499 = vrot.lane.b32.xlu0 %v480, 48
        %v500 = vpop.permute.xlu0 %499
        %503 = vrot.lane.b32.xlu0 %v481, 56
        %v504 = vpop.permute.xlu0 %503
        %507 = vrot.lane.b32.xlu0 %v482, 64
        %v508 = vpop.permute.xlu0 %507
        %v510 = vsel %vm307, %v402, %v484
        %v511 = vsel %vm309, %v510, %v487
        %v512 = vsel %vm311, %v511, %v490
        %v513 = vsel %vm313, %v512, %v493
        %v514 = vsel %vm315, %v513, %v496
        %v515 = vsel %vm317, %v514, %v500
        %v516 = vsel %vm319, %v515, %v504
        %v517 = vsel %vm321, %v516, %v508
        %s518 = scalar_lea.vmem %s257, 128
        %v519 = vld [vmem:[%s518] sm:$0xff]
        %v520 = vld [vmem:[%s518 + $0x1] sm:$0xff]
        %v521 = vld [vmem:[%s518 + $0x2] sm:$0xff]
        %522 = vrot.lane.b32.xlu0 %v442, 8
        %v523 = vpop.permute.xlu0 %522
        %525 = vrot.lane.b32.xlu0 %v443, 16
        %v526 = vpop.permute.xlu0 %525
        %528 = vrot.lane.b32.xlu0 %v480, 24
        %v529 = vpop.permute.xlu0 %528
        %531 = vrot.lane.b32.xlu0 %v481, 32
        %v532 = vpop.permute.xlu0 %531
        %534 = vrot.lane.b32.xlu0 %v482, 40
        %v535 = vpop.permute.xlu0 %534
        %538 = vrot.lane.b32.xlu0 %v519, 48
        %v539 = vpop.permute.xlu0 %538
        %542 = vrot.lane.b32.xlu0 %v520, 56
        %v543 = vpop.permute.xlu0 %542
        %546 = vrot.lane.b32.xlu0 %v521, 64
        %v547 = vpop.permute.xlu0 %546
        %v549 = vsel %vm307, %v441, %v523
        %v550 = vsel %vm309, %v549, %v526
        %v551 = vsel %vm311, %v550, %v529
        %v552 = vsel %vm313, %v551, %v532
        %v553 = vsel %vm315, %v552, %v535
        %v554 = vsel %vm317, %v553, %v539
        %v555 = vsel %vm319, %v554, %v543
        %v556 = vsel %vm321, %v555, %v547
        %s557 = scalar_lea.vmem %s257, 144
        %v558 = vld [vmem:[%s557] sm:$0xff]
        %v559 = vld [vmem:[%s557 + $0x1] sm:$0xff]
        %v560 = vld [vmem:[%s557 + $0x2] sm:$0xff]
        %561 = vrot.lane.b32.xlu0 %v481, 8
        %v562 = vpop.permute.xlu0 %561
        %564 = vrot.lane.b32.xlu0 %v482, 16
        %v565 = vpop.permute.xlu0 %564
        %567 = vrot.lane.b32.xlu0 %v519, 24
        %v568 = vpop.permute.xlu0 %567
        %570 = vrot.lane.b32.xlu0 %v520, 32
        %v571 = vpop.permute.xlu0 %570
        %573 = vrot.lane.b32.xlu0 %v521, 40
        %v574 = vpop.permute.xlu0 %573
        %577 = vrot.lane.b32.xlu0 %v558, 48
        %v578 = vpop.permute.xlu0 %577
        %581 = vrot.lane.b32.xlu0 %v559, 56
        %v582 = vpop.permute.xlu0 %581
        %585 = vrot.lane.b32.xlu0 %v560, 64
        %v586 = vpop.permute.xlu0 %585
        %v588 = vsel %vm307, %v480, %v562
        %v589 = vsel %vm309, %v588, %v565
        %v590 = vsel %vm311, %v589, %v568
        %v591 = vsel %vm313, %v590, %v571
        %v592 = vsel %vm315, %v591, %v574
        %v593 = vsel %vm317, %v592, %v578
        %v594 = vsel %vm319, %v593, %v582
        %v595 = vsel %vm321, %v594, %v586
        %v596 = vpack.c.bf16 %v361, %v322
        %v597 = vpack.c.bf16 %v439, %v400
        %v598 = vpack.c.bf16 %v517, %v478
        %v599 = vpack.c.bf16 %v595, %v556
        %v600 = vld [vmem:[%s1] sm:$0xf]
        %v601 = vld [vmem:[%s1 + $0x4] sm:$0xf]
        %v602 = vld [vmem:[%s1 + $0x8] sm:$0xf]
        %v603 = vld [vmem:[%s1 + $0xc] sm:$0xf]
        %v604 = vld [vmem:[%s1 + $0x10] sm:$0xf]
        %v605 = vld [vmem:[%s1 + $0x14] sm:$0xf]
        %v606 = vld [vmem:[%s1 + $0x18] sm:$0xf]
        %v607 = vld [vmem:[%s1 + $0x1c] sm:$0xf]
        %v608 = vld [vmem:[%s1 + $0x20] sm:$0xf]
        %v609 = vld [vmem:[%s2] sm:$0x1]
        %v611 = vperm.slane %v609, 0
        %v622 = vunpack.c.l.b16 %v600
        %v623 = vunpack.c.l.b16 %v601
        %v624 = vunpack.c.l.b16 %v602
        %v625 = vunpack.c.l.b16 %v603
        %v626 = vunpack.c.l.b16 %v604
        %v627 = vunpack.c.l.b16 %v605
        %v628 = vunpack.c.l.b16 %v606
        %v629 = vunpack.c.l.b16 %v607
        %v630 = vunpack.c.l.b16 %v608
        %v631 = vpack.c.b16 %v623, %v622
        %v632 = vpack.c.b16 %v625, %v624
        %v633 = vpack.c.b16 %v627, %v626
        %v634 = vpack.c.b16 %v629, %v628
        %v635 = vpack.c.b16 %v630, %v630
        %vm640 = vcmask 588800
        %v642 = vsel %vm640, %v596, 0
        %v645 = vsel %vm640, %v597, 0
        %v648 = vsel %vm640, %v598, 0
        %v651 = vsel %vm640, %v599, 0
        %vm653 = vcmask 1043456
        %v655 = vsel %vm653, %v635, 0
        %657 = vmatpush.bf16.msra.mxu0 0
        %658 = vmatpush.bf16.msra.mxu0 0
        %659 = vmatpush.bf16.msra.mxu0 0
        %660 = vmatpush.bf16.msra.mxu0 %v655
        %661 = vmatpush.bf16.msra.mxu0 %v634
        %662 = vmatpush.bf16.msra.mxu0 %v633
        %663 = vmatpush.bf16.msra.mxu0 %v632
        %664 = vmatpush.bf16.msra.mxu0 %v631
        %665 = vmatmul.bf16.gmra.mxu0 %v642
        %v666 = vpop.f32.mrf.mxu0
        %v667 = vadd.f32 %v611, %v666
        %v668 = vpop.f32.mrf.mxu0
        %v669 = vadd.f32 %v611, %v668
        %670 = vmatmul.bf16.gmra.mxu0 %v645
        %v671 = vpop.f32.mrf.mxu0
        %v672 = vadd.f32 %v611, %v671
        %v673 = vpop.f32.mrf.mxu0
        %v674 = vadd.f32 %v611, %v673
        %675 = vmatmul.bf16.gmra.mxu0 %v648
        %v676 = vpop.f32.mrf.mxu0
        %v677 = vadd.f32 %v611, %v676
        %v678 = vpop.f32.mrf.mxu0
        %v679 = vadd.f32 %v611, %v678
        %680 = vmatmul.bf16.gmra.mxu0 %v651
        %v681 = vpop.f32.mrf.mxu0
        %v682 = vadd.f32 %v611, %v681
        %v683 = vpop.f32.mrf.mxu0
        %v684 = vadd.f32 %v611, %v683
        %685 = vdwg.mxu0
        %v686 = vmax.f32 %v667, 0.0
        %v687 = vmax.f32 %v669, 0.0
        %v688 = vmax.f32 %v672, 0.0
        %v689 = vmax.f32 %v674, 0.0
        %v690 = vmax.f32 %v677, 0.0
        %v691 = vmax.f32 %v679, 0.0
        %v692 = vmax.f32 %v682, 0.0
        %v693 = vmax.f32 %v684, 0.0
        %v694 = vld [vmem:[%s3] sm:$0xff]
        %v695 = vld [vmem:[%s3 + $0x8] sm:$0xff]
        %v697 = vsel %vm321, %v694, 0
        %v700 = vsel %vm321, %v695, 0
        %702 = vmatpush.msra.mxu0 0.0
        %703 = vmatpush.msra.mxu0 0.0
        %704 = vmatpush.msra.mxu0 0.0
        %705 = vmatpush.msra.mxu0 0.0
        %706 = vmatpush.msra.mxu0 0.0
        %707 = vmatpush.msra.mxu0 0.0
        %708 = vmatpush.msra.mxu0 0.0
        %709 = vmatpush.msra.mxu0 0.0
        %710 = vmatpush.msra.mxu0 %v693
        %711 = vmatpush.msra.mxu0 %v692
        %712 = vmatpush.msra.mxu0 %v691
        %713 = vmatpush.msra.mxu0 %v690
        %714 = vmatpush.msra.mxu0 %v689
        %715 = vmatpush.msra.mxu0 %v688
        %716 = vmatpush.msra.mxu0 %v687
        %717 = vmatpush.msra.mxu0 %v686
        %718 = vmatmul.f32.gmra.mxu0 %v697
        %v719 = vpop.f32.mrf.mxu0
        %v720 = vadd.f32 0.0, %v719
        %721 = vmatmul.f32.gmra.mxu0 %v700
        %v722 = vpop.f32.mrf.mxu0
        %v723 = vadd.f32 0.0, %v722
        %724 = vdwg.mxu0
        %vm725 = vcmask 128000
        %726 = vst.msk [vmem:[%s245] sm:$0x3f] %vm725, 0.0
        %727 = vst.msk [vmem:[%s245 + $0x8] sm:$0x3f] %vm725, 0.0
        %728 = vst.msk [vmem:[%s245 + $0x10] sm:$0x3f] %vm725, 0.0
        %729 = vst.msk [vmem:[%s245 + $0x18] sm:$0x3f] %vm725, 0.0
        %730 = vst.msk [vmem:[%s245 + $0x20] sm:$0x3f] %vm725, 0.0
        %731 = vst.msk [vmem:[%s245 + $0x28] sm:$0x3f] %vm725, 0.0
        %s732 = scalar_lea.vmem %s245, 8 [#allocation2]
        %vm733 = vcmask 125952
        %734 = vst.msk [vmem:[%s732 + $0x1] sm:$0xf] %vm733, %v720
        %s735 = scalar_lea.vmem %s245, 16 [#allocation2]
        %vm736 = vcmask 130052
        %737 = vst.msk [vmem:[%s735 - $0x3] sm:$0xf0] %vm736, %v720
        %s738 = scalar_lea.vmem %s245, 24 [#allocation2]
        %739 = vst.msk [vmem:[%s738 + $0x1] sm:$0xf] %vm733, %v723
        %s740 = scalar_lea.vmem %s245, 32 [#allocation2]
        %741 = vst.msk [vmem:[%s740 - $0x3] sm:$0xf0] %vm736, %v723
        %v742 = vld [vmem:[%s245] sm:$0x3f]
        %v743 = vld [vmem:[%s245 + $0x8] sm:$0x3f]
        %v744 = vld [vmem:[%s245 + $0x10] sm:$0x3f]
        %v745 = vld [vmem:[%s245 + $0x18] sm:$0x3f]
        %v746 = vld [vmem:[%s245 + $0x20] sm:$0x3f]
        %v747 = vld [vmem:[%s245 + $0x28] sm:$0x3f]
        %749 = vrot.lane.b32.xlu0 %v743, 16
        %v750 = vpop.permute.xlu0 %749
        %753 = vrot.lane.b32.xlu0 %v742, 32
        %v754 = vpop.permute.xlu0 %753
        %v757 = vrot.slane %v744, 7
        %758 = vrot.lane.b32.xlu0 %v757, 48
        %v759 = vpop.permute.xlu0 %758
        %v761 = vrot.slane %v743, 7
        %762 = vrot.lane.b32.xlu0 %v761, 64
        %v763 = vpop.permute.xlu0 %762
        %v765 = vrot.slane %v742, 7
        %766 = vrot.lane.b32.xlu0 %v765, 80
        %v767 = vpop.permute.xlu0 %766
        %v769 = vsel %vm309, %v744, %v750
        %v770 = vsel %vm313, %v769, %v754
        %v771 = vsel %vm317, %v770, %v759
        %v772 = vsel %vm321, %v771, %v763
        %vm773 = vcmask 654336
        %v774 = vsel %vm773, %v772, %v767
        %v775 = vpack.c.bf16 %v774, %v774
        %v776 = vld [vmem:[%s4] sm:$0xf]
        %v777 = vld [vmem:[%s4 + $0x4] sm:$0xf]
        %v778 = vld [vmem:[%s4 + $0x8] sm:$0xf]
        %v779 = vld [vmem:[%s4 + $0xc] sm:$0xf]
        %v780 = vld [vmem:[%s4 + $0x10] sm:$0xf]
        %v781 = vld [vmem:[%s4 + $0x14] sm:$0xf]
        %v782 = vld [vmem:[%s4 + $0x18] sm:$0xf]
        %v783 = vld [vmem:[%s4 + $0x1c] sm:$0xf]
        %v784 = vld [vmem:[%s4 + $0x20] sm:$0xf]
        %v785 = vld [vmem:[%s4 + $0x24] sm:$0xf]
        %v786 = vld [vmem:[%s4 + $0x28] sm:$0xf]
        %v787 = vld [vmem:[%s4 + $0x2c] sm:$0xf]
        %v789 = vshrl.u32 %v775, 16
        %v791 = vshll.u32 %v775, 16
        %v793 = vrot.slane %v791, 1
        %v794 = vor.u32 %v789, %v793
        %v807 = vunpack.c.l.b16 %v776
        %v808 = vunpack.c.l.b16 %v777
        %v809 = vunpack.c.l.b16 %v778
        %v810 = vunpack.c.l.b16 %v779
        %v811 = vunpack.c.l.b16 %v780
        %v812 = vunpack.c.l.b16 %v781
        %v813 = vunpack.c.l.b16 %v782
        %v814 = vunpack.c.l.b16 %v783
        %v815 = vunpack.c.l.b16 %v784
        %v816 = vunpack.c.l.b16 %v785
        %v817 = vunpack.c.l.b16 %v786
        %v818 = vunpack.c.l.b16 %v787
        %v819 = vpack.c.b16 %v808, %v807
        %v820 = vpack.c.b16 %v810, %v809
        %v821 = vpack.c.b16 %v812, %v811
        %v822 = vpack.c.b16 %v814, %v813
        %v823 = vpack.c.b16 %v816, %v815
        %v824 = vpack.c.b16 %v818, %v817
        %vm831 = vcmask 785408
        %v833 = vsel %vm831, %v794, 0
        %835 = vmatpush.bf16.msra.mxu0 0
        %836 = vmatpush.bf16.msra.mxu0 0
        %837 = vmatpush.bf16.msra.mxu0 %v824
        %838 = vmatpush.bf16.msra.mxu0 %v823
        %839 = vmatpush.bf16.msra.mxu0 %v822
        %840 = vmatpush.bf16.msra.mxu0 %v821
        %841 = vmatpush.bf16.msra.mxu0 %v820
        %842 = vmatpush.bf16.msra.mxu0 %v819
        %843 = vmatmul.bf16.gmra.mxu0 %v833
        %v844 = vpop.f32.mrf.mxu0
        %v845 = vadd.f32 0.0, %v844
        %v846 = vpop.f32.mrf.mxu0
        %847 = vdwg.mxu0
        %848 = vst.msk [vmem:[%s262] sm:$0xf] %vm733, %v845
        %849 = vrot.lane.b32.xlu0 %v744, 16
        %v850 = vpop.permute.xlu0 %849
        %852 = vrot.lane.b32.xlu0 %v743, 32
        %v853 = vpop.permute.xlu0 %852
        %v856 = vrot.slane %v745, 7
        %857 = vrot.lane.b32.xlu0 %v856, 48
        %v858 = vpop.permute.xlu0 %857
        %860 = vrot.lane.b32.xlu0 %v757, 64
        %v861 = vpop.permute.xlu0 %860
        %863 = vrot.lane.b32.xlu0 %v761, 80
        %v864 = vpop.permute.xlu0 %863
        %v866 = vsel %vm309, %v745, %v850
        %v867 = vsel %vm313, %v866, %v853
        %v868 = vsel %vm317, %v867, %v858
        %v869 = vsel %vm321, %v868, %v861
        %v870 = vsel %vm773, %v869, %v864
        %v871 = vpack.c.bf16 %v870, %v870
        %v872 = vld [vmem:[%s4] sm:$0xf]
        %v873 = vld [vmem:[%s4 + $0x4] sm:$0xf]
        %v874 = vld [vmem:[%s4 + $0x8] sm:$0xf]
        %v875 = vld [vmem:[%s4 + $0xc] sm:$0xf]
        %v876 = vld [vmem:[%s4 + $0x10] sm:$0xf]
        %v877 = vld [vmem:[%s4 + $0x14] sm:$0xf]
        %v878 = vld [vmem:[%s4 + $0x18] sm:$0xf]
        %v879 = vld [vmem:[%s4 + $0x1c] sm:$0xf]
        %v880 = vld [vmem:[%s4 + $0x20] sm:$0xf]
        %v881 = vld [vmem:[%s4 + $0x24] sm:$0xf]
        %v882 = vld [vmem:[%s4 + $0x28] sm:$0xf]
        %v883 = vld [vmem:[%s4 + $0x2c] sm:$0xf]
        %v885 = vshrl.u32 %v871, 16
        %v887 = vshll.u32 %v871, 16
        %v889 = vrot.slane %v887, 1
        %v890 = vor.u32 %v885, %v889
        %v903 = vunpack.c.l.b16 %v872
        %v904 = vunpack.c.l.b16 %v873
        %v905 = vunpack.c.l.b16 %v874
        %v906 = vunpack.c.l.b16 %v875
        %v907 = vunpack.c.l.b16 %v876
        %v908 = vunpack.c.l.b16 %v877
        %v909 = vunpack.c.l.b16 %v878
        %v910 = vunpack.c.l.b16 %v879
        %v911 = vunpack.c.l.b16 %v880
        %v912 = vunpack.c.l.b16 %v881
        %v913 = vunpack.c.l.b16 %v882
        %v914 = vunpack.c.l.b16 %v883
        %v915 = vpack.c.b16 %v904, %v903
        %v916 = vpack.c.b16 %v906, %v905
        %v917 = vpack.c.b16 %v908, %v907
        %v918 = vpack.c.b16 %v910, %v909
        %v919 = vpack.c.b16 %v912, %v911
        %v920 = vpack.c.b16 %v914, %v913
        %v928 = vsel %vm831, %v890, 0
        %930 = vmatpush.bf16.msra.mxu0 0
        %931 = vmatpush.bf16.msra.mxu0 0
        %932 = vmatpush.bf16.msra.mxu0 %v920
        %933 = vmatpush.bf16.msra.mxu0 %v919
        %934 = vmatpush.bf16.msra.mxu0 %v918
        %935 = vmatpush.bf16.msra.mxu0 %v917
        %936 = vmatpush.bf16.msra.mxu0 %v916
        %937 = vmatpush.bf16.msra.mxu0 %v915
        %938 = vmatmul.bf16.gmra.mxu0 %v928
        %v939 = vpop.f32.mrf.mxu0
        %v940 = vadd.f32 0.0, %v939
        %v941 = vpop.f32.mrf.mxu0
        %942 = vdwg.mxu0
        %s943 = scalar_lea.vmem %s262, 4
        %944 = vst.msk [vmem:[%s943] sm:$0xf] %vm733, %v940
        %945 = vrot.lane.b32.xlu0 %v745, 16
        %v946 = vpop.permute.xlu0 %945
        %948 = vrot.lane.b32.xlu0 %v744, 32
        %v949 = vpop.permute.xlu0 %948
        %v952 = vrot.slane %v746, 7
        %953 = vrot.lane.b32.xlu0 %v952, 48
        %v954 = vpop.permute.xlu0 %953
        %956 = vrot.lane.b32.xlu0 %v856, 64
        %v957 = vpop.permute.xlu0 %956
        %959 = vrot.lane.b32.xlu0 %v757, 80
        %v960 = vpop.permute.xlu0 %959
        %v962 = vsel %vm309, %v746, %v946
        %v963 = vsel %vm313, %v962, %v949
        %v964 = vsel %vm317, %v963, %v954
        %v965 = vsel %vm321, %v964, %v957
        %v966 = vsel %vm773, %v965, %v960
        %v967 = vpack.c.bf16 %v966, %v966
        %v968 = vld [vmem:[%s4] sm:$0xf]
        %v969 = vld [vmem:[%s4 + $0x4] sm:$0xf]
        %v970 = vld [vmem:[%s4 + $0x8] sm:$0xf]
        %v971 = vld [vmem:[%s4 + $0xc] sm:$0xf]
        %v972 = vld [vmem:[%s4 + $0x10] sm:$0xf]
        %v973 = vld [vmem:[%s4 + $0x14] sm:$0xf]
        %v974 = vld [vmem:[%s4 + $0x18] sm:$0xf]
        %v975 = vld [vmem:[%s4 + $0x1c] sm:$0xf]
        %v976 = vld [vmem:[%s4 + $0x20] sm:$0xf]
        %v977 = vld [vmem:[%s4 + $0x24] sm:$0xf]
        %v978 = vld [vmem:[%s4 + $0x28] sm:$0xf]
        %v979 = vld [vmem:[%s4 + $0x2c] sm:$0xf]
        %v981 = vshrl.u32 %v967, 16
        %v983 = vshll.u32 %v967, 16
        %v985 = vrot.slane %v983, 1
        %v986 = vor.u32 %v981, %v985
        %v999 = vunpack.c.l.b16 %v968
        %v1000 = vunpack.c.l.b16 %v969
        %v1001 = vunpack.c.l.b16 %v970
        %v1002 = vunpack.c.l.b16 %v971
        %v1003 = vunpack.c.l.b16 %v972
        %v1004 = vunpack.c.l.b16 %v973
        %v1005 = vunpack.c.l.b16 %v974
        %v1006 = vunpack.c.l.b16 %v975
        %v1007 = vunpack.c.l.b16 %v976
        %v1008 = vunpack.c.l.b16 %v977
        %v1009 = vunpack.c.l.b16 %v978
        %v1010 = vunpack.c.l.b16 %v979
        %v1011 = vpack.c.b16 %v1000, %v999
        %v1012 = vpack.c.b16 %v1002, %v1001
        %v1013 = vpack.c.b16 %v1004, %v1003
        %v1014 = vpack.c.b16 %v1006, %v1005
        %v1015 = vpack.c.b16 %v1008, %v1007
        %v1016 = vpack.c.b16 %v1010, %v1009
        %v1024 = vsel %vm831, %v986, 0
        %1026 = vmatpush.bf16.msra.mxu0 0
        %1027 = vmatpush.bf16.msra.mxu0 0
        %1028 = vmatpush.bf16.msra.mxu0 %v1016
        %1029 = vmatpush.bf16.msra.mxu0 %v1015
        %1030 = vmatpush.bf16.msra.mxu0 %v1014
        %1031 = vmatpush.bf16.msra.mxu0 %v1013
        %1032 = vmatpush.bf16.msra.mxu0 %v1012
        %1033 = vmatpush.bf16.msra.mxu0 %v1011
        %1034 = vmatmul.bf16.gmra.mxu0 %v1024
        %v1035 = vpop.f32.mrf.mxu0
        %v1036 = vadd.f32 0.0, %v1035
        %v1037 = vpop.f32.mrf.mxu0
        %1038 = vdwg.mxu0
        %s1039 = scalar_lea.vmem %s262, 8
        %1040 = vst.msk [vmem:[%s1039] sm:$0xf] %vm733, %v1036
        %1041 = vrot.lane.b32.xlu0 %v746, 16
        %v1042 = vpop.permute.xlu0 %1041
        %1044 = vrot.lane.b32.xlu0 %v745, 32
        %v1045 = vpop.permute.xlu0 %1044
        %v1048 = vrot.slane %v747, 7
        %1049 = vrot.lane.b32.xlu0 %v1048, 48
        %v1050 = vpop.permute.xlu0 %1049
        %1052 = vrot.lane.b32.xlu0 %v952, 64
        %v1053 = vpop.permute.xlu0 %1052
        %1055 = vrot.lane.b32.xlu0 %v856, 80
        %v1056 = vpop.permute.xlu0 %1055
        %v1058 = vsel %vm309, %v747, %v1042
        %v1059 = vsel %vm313, %v1058, %v1045
        %v1060 = vsel %vm317, %v1059, %v1050
        %v1061 = vsel %vm321, %v1060, %v1053
        %v1062 = vsel %vm773, %v1061, %v1056
        %v1063 = vpack.c.bf16 %v1062, %v1062
        %v1064 = vld [vmem:[%s4] sm:$0xf]
        %v1065 = vld [vmem:[%s4 + $0x4] sm:$0xf]
        %v1066 = vld [vmem:[%s4 + $0x8] sm:$0xf]
        %v1067 = vld [vmem:[%s4 + $0xc] sm:$0xf]
        %v1068 = vld [vmem:[%s4 + $0x10] sm:$0xf]
        %v1069 = vld [vmem:[%s4 + $0x14] sm:$0xf]
        %v1070 = vld [vmem:[%s4 + $0x18] sm:$0xf]
        %v1071 = vld [vmem:[%s4 + $0x1c] sm:$0xf]
        %v1072 = vld [vmem:[%s4 + $0x20] sm:$0xf]
        %v1073 = vld [vmem:[%s4 + $0x24] sm:$0xf]
        %v1074 = vld [vmem:[%s4 + $0x28] sm:$0xf]
        %v1075 = vld [vmem:[%s4 + $0x2c] sm:$0xf]
        %v1077 = vshrl.u32 %v1063, 16
        %v1079 = vshll.u32 %v1063, 16
        %v1081 = vrot.slane %v1079, 1
        %v1082 = vor.u32 %v1077, %v1081
        %v1095 = vunpack.c.l.b16 %v1064
        %v1096 = vunpack.c.l.b16 %v1065
        %v1097 = vunpack.c.l.b16 %v1066
        %v1098 = vunpack.c.l.b16 %v1067
        %v1099 = vunpack.c.l.b16 %v1068
        %v1100 = vunpack.c.l.b16 %v1069
        %v1101 = vunpack.c.l.b16 %v1070
        %v1102 = vunpack.c.l.b16 %v1071
        %v1103 = vunpack.c.l.b16 %v1072
        %v1104 = vunpack.c.l.b16 %v1073
        %v1105 = vunpack.c.l.b16 %v1074
        %v1106 = vunpack.c.l.b16 %v1075
        %v1107 = vpack.c.b16 %v1096, %v1095
        %v1108 = vpack.c.b16 %v1098, %v1097
        %v1109 = vpack.c.b16 %v1100, %v1099
        %v1110 = vpack.c.b16 %v1102, %v1101
        %v1111 = vpack.c.b16 %v1104, %v1103
        %v1112 = vpack.c.b16 %v1106, %v1105
        %v1120 = vsel %vm831, %v1082, 0
        %1122 = vmatpush.bf16.msra.mxu0 0
        %1123 = vmatpush.bf16.msra.mxu0 0
        %1124 = vmatpush.bf16.msra.mxu0 %v1112
        %1125 = vmatpush.bf16.msra.mxu0 %v1111
        %1126 = vmatpush.bf16.msra.mxu0 %v1110
        %1127 = vmatpush.bf16.msra.mxu0 %v1109
        %1128 = vmatpush.bf16.msra.mxu0 %v1108
        %1129 = vmatpush.bf16.msra.mxu0 %v1107
        %1130 = vmatmul.bf16.gmra.mxu0 %v1120
        %v1131 = vpop.f32.mrf.mxu0
        %v1132 = vadd.f32 0.0, %v1131
        %v1133 = vpop.f32.mrf.mxu0
        %1134 = vdwg.mxu0
        %s1135 = scalar_lea.vmem %s262, 12
        %1136 = vst.msk [vmem:[%s1135] sm:$0xf] %vm733, %v1132
        %s1137 = sand.u32 %s139, 1
        %s1138 = scalar_lea.sflag [#allocation3], %s1137
        %s1139 = sand.u32 %s139, 1
        %s1140 = smul.addr %s1139, 48
        %s1141 = scalar_lea.vmem [#allocation2], %s1140
        %p1142 = scmp.lt.s32.totalorder %s21, 1
        %s1143 = scalar_select %p1142, %s21, 1
        %s1144 = smul.addr %s1143, 4
        %s1145 = smul.addr %s1144, 4
        %s1146 = scalar_lea.vmem %s6, %s1145
        // Predicated region
        $region41: #{_lambda_.3} parent=39 // pred_check
          %p1147 = pneg %p149
        $region42: #{_lambda_.3} parent=39 // pred_check_branch
          %1149 = sbr.rel (%p1147) target = $region44
        $region43: #{_lambda_.3} parent=39 // pred_region
          %1151 = vsyncadd %s1138, 0
          %s1152 = smul.addr %s21, 6
          %s1153 = smul.addr %s1152, 8
          %s1154 = scalar_lea.hbm %s5, %s1153
          %s1155 = sshll.u32 %s1141, 4
          %s1156 = int_to_ptr.vmem [resolvable:$true] %s1155
          %s1157 = sshll.u32 %s1154, 4
          %s1158 = int_to_ptr.hbm [resolvable:$true] %s1157
          %1163 = dma.vmem_to_hbm [thread:$0]  %s1156, 768, %s1158, %s1138, 128, 128, 8
        $region44: #{_lambda_.3} parent=39 // pred_fallthru
          _
        // Predicated region
        $region45: #{_lambda_.3} parent=39 // pred_check
          %p1164 = pneg %p175
        $region46: #{_lambda_.3} parent=39 // pred_check_branch
          %1166 = sbr.rel (%p1164) target = $region48
        $region47: #{_lambda_.3} parent=39 // pred_region
          _
        $region48: #{_lambda_.3} parent=39 // pred_fallthru
          _
      $region40: #{_lambda_.3} parent=5 // pred_fallthru
        _
      %p1167 = scmp.le.s32.totalorder 2, %s16
      // Predicated region
      $region49: #{_lambda_.3} parent=5 // pred_check
        %p1168 = pneg %p1167
      $region50: #{_lambda_.3} parent=5 // pred_check_branch
        %1170 = sbr.rel (%p1168) target = $region52
      $region51: #{_lambda_.3} parent=5 // pred_region
        %s1171 = ssub.s32 %s16, 2
        // Predicated region
        $region53: #{_lambda_.3} parent=51 // pred_check
          %p1172 = pneg %p155
        $region54: #{_lambda_.3} parent=51 // pred_check_branch
          %1174 = sbr.rel (%p1172) target = $region56
        $region55: #{_lambda_.3} parent=51 // pred_region
          %s1175 = sand.u32 %s140, 1
          %s1176 = scalar_lea.sflag [#allocation3], %s1175
          %s1177 = sand.u32 %s140, 1
          %s1178 = smul.addr %s1177, 48
          %s1179 = scalar_lea.vmem [#allocation2], %s1178
          %1181 = dma.done %s1176, 768
        $region56: #{_lambda_.3} parent=51 // pred_fallthru
          _
        // Predicated region
        $region57: #{_lambda_.3} parent=51 // pred_check
          %p1182 = pneg %p181
        $region58: #{_lambda_.3} parent=51 // pred_check_branch
          %1184 = sbr.rel (%p1182) target = $region60
        $region59: #{_lambda_.3} parent=51 // pred_region
          %p1185 = scmp.lt.s32.totalorder %s22, 1
          %s1186 = scalar_select %p1185, %s22, 1
          %s1187 = smul.addr %s1186, 4
          %s1188 = smul.addr %s1187, 4
          %s1189 = scalar_lea.vmem %s6, %s1188
        $region60: #{_lambda_.3} parent=51 // pred_fallthru
          _
      $region52: #{_lambda_.3} parent=5 // pred_fallthru
        _
    $region6: #{_lambda_.3} parent=1 // loop_footer
      %s20 = sadd.s32 1, %s16
    $region7: #{_lambda_.3} parent=1 // loop_footer_branch
      %15 = sbr.rel target = $region3
    $region8: #{_lambda_.3} parent=1 // loop_exit
      _
    %1190 = vsyncpa [#allocation3], 1
    %s1191 = scalar_lea.sflag [#allocation3], 1
    %1192 = vsyncpa %s1191, 1

// kernel: _lambda_.2
$region0: #{_lambda_.2}
  #allocation0 [shape = 'u32[]', space=smem, size = 0x4, offset = 0x4, fixed_abs, tag = 'smem constant byte address 0x4 - core index']
  #allocation1 [shape = 'u32[72,128]{1,0:T(1,128)}', space=vmem, size = 0x9000, scoped, tag = 'internal scratch']
  %s0 = inlined_call_operand.vmem [shape: f32[2,18,18,4], index: 0, kind: input, shape index: {}]
  %s1 = inlined_call_operand.vmem [shape: bf16[36,8], index: 1, kind: input, shape index: {}]
  %s2 = inlined_call_operand.vmem [shape: f32[1,8], index: 2, kind: input, shape index: {}]
  %s3 = inlined_call_operand.vmem [shape: f32[64,256], index: 3, kind: input, shape index: {}]
  %s4 = inlined_call_operand.vmem [shape: bf16[48,16], index: 4, kind: input, shape index: {}]
  %s5 = inlined_call_operand.vmem [shape: f32[2,10,10,8], index: 5, kind: output, shape index: {0}]
  %s6 = inlined_call_operand.vmem [shape: f32[2,8,8,16], index: 6, kind: output, shape index: {1}]
  %7 = xla_tuple %s5, %s6
  %s8 = sld [smem:[#allocation0]]
  $region61: #{_lambda_.2} parent=0
    _
  %s10 = ssub.s32 1, %s8
  %s11 = scalar_select 0, %s10, %s8
  loop: start=0, step=1, limit=4
  $region2: #{_lambda_.2} parent=0 // loop_pre_header
    _
  $region3: #{_lambda_.2} parent=0 // loop_header
    %s13 = sphi 0, %s17
    %p14 = scmp.ge.s32.totalorder %s13, 4
    %s23 = sphi 0, %s25
    %s26 = sphi 0, %s23
    %s27 = sphi 0, %s26
    %s43 = sphi 0, %s27
    %s47 = sphi 0, %s47
    %s49 = sphi 0, %s47
    %s50 = sphi 0, %s49
    %s64 = sphi 0, %s50
    %s68 = sphi 0, %s68
    %s70 = sphi 0, %s68
    %s71 = sphi 0, %s70
    %s85 = sphi 0, %s71
    %s89 = sphi 0, %s89
    %s91 = sphi 0, %s89
    %s92 = sphi 0, %s91
    %s106 = sphi 0, %s92
    %s110 = sphi 0, %s110
    %s112 = sphi 0, %s110
    %s113 = sphi 0, %s112
    %s127 = sphi 0, %s113
    %s133 = sphi 0, %s135
    %s136 = sphi 0, %s133
    %s137 = sphi 0, %s136
    %s153 = sphi 0, %s137
    %s159 = sphi 0, %s161
    %s162 = sphi 0, %s159
    %s163 = sphi 0, %s162
    %s179 = sphi 0, %s163
  $region4: #{_lambda_.2} parent=0 // loop_header_branch
    %16 = sbr.rel (%p14) target = $region8
  $region5: #{_lambda_.2} parent=0 // loop_body
    %s18 = ssub.s32 %s13, 1
    %s19 = ssub.s32 %s13, 2
    %s20 = sadd.s32 %s13, 1
    %s21 = ssub.s32 %s13, %s20
    %p22 = scmp.eq.s32.totalorder %s21, 0
    %s24 = sadd.s32 %s23, 1
    %s25 = scalar_select %p22, %s23, %s24
    %p28 = pneg %p22
    %p29 = scmp.eq.s32.totalorder %s13, 1
    %p30 = por %p28, %p29
    %p31 = scmp.ne.s32.totalorder %s23, %s26
    %p32 = scmp.eq.s32.totalorder %s13, 0
    %p33 = por %p31, %p32
    %p34 = scmp.ne.s32.totalorder %s23, %s26
    %p35 = scmp.eq.s32.totalorder %s18, 1
    %p36 = por %p34, %p35
    %p37 = scmp.ne.s32.totalorder %s26, %s27
    %p38 = scmp.eq.s32.totalorder %s18, 0
    %p39 = por %p37, %p38
    %p40 = scmp.ne.s32.totalorder %s26, %s27
    %p41 = scmp.eq.s32.totalorder %s19, 1
    %p42 = por %p40, %p41
    %p44 = scmp.ne.s32.totalorder %s27, %s43
    %p45 = scmp.eq.s32.totalorder %s19, 0
    %p46 = por %p44, %p45
    %s48 = sadd.s32 %s47, 1
    %p51 = scmp.eq.s32.totalorder %s13, 1
    %p52 = scmp.ne.s32.totalorder %s47, %s49
    %p53 = scmp.eq.s32.totalorder %s13, 0
    %p54 = por %p52, %p53
    %p55 = scmp.ne.s32.totalorder %s47, %s49
    %p56 = scmp.eq.s32.totalorder %s18, 1
    %p57 = por %p55, %p56
    %p58 = scmp.ne.s32.totalorder %s49, %s50
    %p59 = scmp.eq.s32.totalorder %s18, 0
    %p60 = por %p58, %p59
    %p61 = scmp.ne.s32.totalorder %s49, %s50
    %p62 = scmp.eq.s32.totalorder %s19, 1
    %p63 = por %p61, %p62
    %p65 = scmp.ne.s32.totalorder %s50, %s64
    %p66 = scmp.eq.s32.totalorder %s19, 0
    %p67 = por %p65, %p66
    %s69 = sadd.s32 %s68, 1
    %p72 = scmp.eq.s32.totalorder %s13, 1
    %p73 = scmp.ne.s32.totalorder %s68, %s70
    %p74 = scmp.eq.s32.totalorder %s13, 0
    %p75 = por %p73, %p74
    %p76 = scmp.ne.s32.totalorder %s68, %s70
    %p77 = scmp.eq.s32.totalorder %s18, 1
    %p78 = por %p76, %p77
    %p79 = scmp.ne.s32.totalorder %s70, %s71
    %p80 = scmp.eq.s32.totalorder %s18, 0
    %p81 = por %p79, %p80
    %p82 = scmp.ne.s32.totalorder %s70, %s71
    %p83 = scmp.eq.s32.totalorder %s19, 1
    %p84 = por %p82, %p83
    %p86 = scmp.ne.s32.totalorder %s71, %s85
    %p87 = scmp.eq.s32.totalorder %s19, 0
    %p88 = por %p86, %p87
    %s90 = sadd.s32 %s89, 1
    %p93 = scmp.eq.s32.totalorder %s13, 1
    %p94 = scmp.ne.s32.totalorder %s89, %s91
    %p95 = scmp.eq.s32.totalorder %s13, 0
    %p96 = por %p94, %p95
    %p97 = scmp.ne.s32.totalorder %s89, %s91
    %p98 = scmp.eq.s32.totalorder %s18, 1
    %p99 = por %p97, %p98
    %p100 = scmp.ne.s32.totalorder %s91, %s92
    %p101 = scmp.eq.s32.totalorder %s18, 0
    %p102 = por %p100, %p101
    %p103 = scmp.ne.s32.totalorder %s91, %s92
    %p104 = scmp.eq.s32.totalorder %s19, 1
    %p105 = por %p103, %p104
    %p107 = scmp.ne.s32.totalorder %s92, %s106
    %p108 = scmp.eq.s32.totalorder %s19, 0
    %p109 = por %p107, %p108
    %s111 = sadd.s32 %s110, 1
    %p114 = scmp.eq.s32.totalorder %s13, 1
    %p115 = scmp.ne.s32.totalorder %s110, %s112
    %p116 = scmp.eq.s32.totalorder %s13, 0
    %p117 = por %p115, %p116
    %p118 = scmp.ne.s32.totalorder %s110, %s112
    %p119 = scmp.eq.s32.totalorder %s18, 1
    %p120 = por %p118, %p119
    %p121 = scmp.ne.s32.totalorder %s112, %s113
    %p122 = scmp.eq.s32.totalorder %s18, 0
    %p123 = por %p121, %p122
    %p124 = scmp.ne.s32.totalorder %s112, %s113
    %p125 = scmp.eq.s32.totalorder %s19, 1
    %p126 = por %p124, %p125
    %p128 = scmp.ne.s32.totalorder %s113, %s127
    %p129 = scmp.eq.s32.totalorder %s19, 0
    %p130 = por %p128, %p129
    %s131 = ssub.s32 %s13, %s20
    %p132 = scmp.eq.s32.totalorder %s131, 0
    %s134 = sadd.s32 %s133, 1
    %s135 = scalar_select %p132, %s133, %s134
    %p138 = pneg %p132
    %p139 = scmp.eq.s32.totalorder %s13, 1
    %p140 = por %p138, %p139
    %p141 = scmp.ne.s32.totalorder %s133, %s136
    %p142 = scmp.eq.s32.totalorder %s13, 0
    %p143 = por %p141, %p142
    %p144 = scmp.ne.s32.totalorder %s133, %s136
    %p145 = scmp.eq.s32.totalorder %s18, 1
    %p146 = por %p144, %p145
    %p147 = scmp.ne.s32.totalorder %s136, %s137
    %p148 = scmp.eq.s32.totalorder %s18, 0
    %p149 = por %p147, %p148
    %p150 = scmp.ne.s32.totalorder %s136, %s137
    %p151 = scmp.eq.s32.totalorder %s19, 1
    %p152 = por %p150, %p151
    %p154 = scmp.ne.s32.totalorder %s137, %s153
    %p155 = scmp.eq.s32.totalorder %s19, 0
    %p156 = por %p154, %p155
    %s157 = ssub.s32 %s13, %s20
    %p158 = scmp.eq.s32.totalorder %s157, 0
    %s160 = sadd.s32 %s159, 1
    %s161 = scalar_select %p158, %s159, %s160
    %p164 = pneg %p158
    %p165 = scmp.eq.s32.totalorder %s13, 1
    %p166 = por %p164, %p165
    %p167 = scmp.ne.s32.totalorder %s159, %s162
    %p168 = scmp.eq.s32.totalorder %s13, 0
    %p169 = por %p167, %p168
    %p170 = scmp.ne.s32.totalorder %s159, %s162
    %p171 = scmp.eq.s32.totalorder %s18, 1
    %p172 = por %p170, %p171
    %p173 = scmp.ne.s32.totalorder %s162, %s163
    %p174 = scmp.eq.s32.totalorder %s18, 0
    %p175 = por %p173, %p174
    %p176 = scmp.ne.s32.totalorder %s162, %s163
    %p177 = scmp.eq.s32.totalorder %s19, 1
    %p178 = por %p176, %p177
    %p180 = scmp.ne.s32.totalorder %s163, %s179
    %p181 = scmp.eq.s32.totalorder %s19, 0
    %p182 = por %p180, %p181
    %p183 = scmp.le.s32.totalorder 1, %s13
    %p184 = scmp.lt.s32.totalorder %s13, 3
    %p185 = pnand %p183, %p184
    %p186 = pneg %p185
    // Predicated region
    $region9: #{_lambda_.2} parent=5 // pred_check
      _
    $region10: #{_lambda_.2} parent=5 // pred_check_branch
      %188 = sbr.rel (%p185) target = $region12
    $region11: #{_lambda_.2} parent=5 // pred_region
      %s189 = ssub.s32 %s13, 1
      // Predicated region
      $region13: #{_lambda_.2} parent=11 // pred_check
        %p190 = pneg %p60
      $region14: #{_lambda_.2} parent=11 // pred_check_branch
        %192 = sbr.rel (%p190) target = $region16
      $region15: #{_lambda_.2} parent=11 // pred_region
        _
      $region16: #{_lambda_.2} parent=11 // pred_fallthru
        _
      // Predicated region
      $region17: #{_lambda_.2} parent=11 // pred_check
        %p193 = pneg %p81
      $region18: #{_lambda_.2} parent=11 // pred_check_branch
        %195 = sbr.rel (%p193) target = $region20
      $region19: #{_lambda_.2} parent=11 // pred_region
        _
      $region20: #{_lambda_.2} parent=11 // pred_fallthru
        _
      // Predicated region
      $region21: #{_lambda_.2} parent=11 // pred_check
        %p196 = pneg %p102
      $region22: #{_lambda_.2} parent=11 // pred_check_branch
        %198 = sbr.rel (%p196) target = $region24
      $region23: #{_lambda_.2} parent=11 // pred_region
        _
      $region24: #{_lambda_.2} parent=11 // pred_fallthru
        _
      // Predicated region
      $region25: #{_lambda_.2} parent=11 // pred_check
        %p199 = pneg %p123
      $region26: #{_lambda_.2} parent=11 // pred_check_branch
        %201 = sbr.rel (%p199) target = $region28
      $region27: #{_lambda_.2} parent=11 // pred_region
        _
      $region28: #{_lambda_.2} parent=11 // pred_fallthru
        _
    $region12: #{_lambda_.2} parent=5 // pred_fallthru
      _
    %p202 = scmp.lt.s32.totalorder %s13, 2
    // Predicated region
    $region29: #{_lambda_.2} parent=5 // pred_check
      %p203 = pneg %p202
    $region30: #{_lambda_.2} parent=5 // pred_check_branch
      %205 = sbr.rel (%p203) target = $region32
    $region31: #{_lambda_.2} parent=5 // pred_region
      // Predicated region
      $region33: #{_lambda_.2} parent=31 // pred_check
        %p206 = pneg %p33
      $region34: #{_lambda_.2} parent=31 // pred_check_branch
        %208 = sbr.rel (%p206) target = $region36
      $region35: #{_lambda_.2} parent=31 // pred_region
        %p209 = scmp.lt.s32.totalorder %s13, 1
        %s210 = scalar_select %p209, %s13, 1
        %s211 = smul.addr %s210, 54
        %s212 = smul.addr %s211, 8
        %s213 = scalar_lea.vmem %s0, %s212
      $region36: #{_lambda_.2} parent=31 // pred_fallthru
        _
    $region32: #{_lambda_.2} parent=5 // pred_fallthru
      _
    %p214 = scmp.le.s32.totalorder 1, %s13
    %p215 = scmp.lt.s32.totalorder %s13, 3
    %p216 = pnand %p214, %p215
    %p217 = pneg %p216
    // Predicated region
    $region37: #{_lambda_.2} parent=5 // pred_check
      _
    $region38: #{_lambda_.2} parent=5 // pred_check_branch
      %219 = sbr.rel (%p216) target = $region40
    $region39: #{_lambda_.2} parent=5 // pred_region
      %s220 = ssub.s32 %s13, 1
      %p221 = scmp.lt.s32.totalorder %s18, 1
      %s222 = scalar_select %p221, %s18, 1
      %s223 = smul.addr %s222, 54
      %s224 = smul.addr %s223, 8
      %s225 = scalar_lea.vmem %s0, %s224
      %p226 = pneg %p39
      %p227 = pneg %p36
      %p228 = pneg %p60
      %p229 = pneg %p57
      %p230 = pneg %p81
      %p231 = pneg %p78
      %p232 = pneg %p102
      %p233 = pneg %p99
      %p234 = pneg %p123
      %p235 = pneg %p120
      %p236 = pneg %p149
      %p237 = pneg %p146
      %p238 = scmp.lt.s32.totalorder %s18, 1
      %s239 = scalar_select %p238, %s18, 1
      %s240 = smul.addr %s239, 20
      %s241 = smul.addr %s240, 8
      %s242 = scalar_lea.vmem %s5, %s241
      %p243 = pneg %p175
      %p244 = pneg %p172
      %p245 = scmp.lt.s32.totalorder %s18, 1
      %s246 = scalar_select %p245, %s18, 1
      %s247 = smul.addr %s246, 8
      %s248 = smul.addr %s247, 8
      %s249 = scalar_lea.vmem %s6, %s248
      %p250 = scmp.lt.s32.totalorder %s18, 1
      %s251 = scalar_select %p250, %s18, 1
      %s252 = smul.addr %s251, 54
      %s253 = smul.addr %s252, 8
      %s254 = scalar_lea.vmem %s0, %s253
      %p255 = scmp.lt.s32.totalorder %s18, 1
      %s256 = scalar_select %p255, %s18, 1
      %s257 = smul.addr %s256, 20
      %s258 = smul.addr %s257, 8
      %s259 = scalar_lea.vmem %s5, %s258
      %p260 = scmp.lt.s32.totalorder %s18, 1
      %s261 = scalar_select %p260, %s18, 1
      %s262 = smul.addr %s261, 8
      %s263 = smul.addr %s262, 8
      %s264 = scalar_lea.vmem %s6, %s263
      %v266 = vld [vmem:[%s254] sm:$0xff]
      %v267 = vld [vmem:[%s254 + $0x8] sm:$0xff]
      %v268 = vld [vmem:[%s254 + $0x1] sm:$0xff]
      %v269 = vld [vmem:[%s254 + $0x9] sm:$0xff]
      %v270 = vld [vmem:[%s254 + $0x2] sm:$0xff]
      %v271 = vld [vmem:[%s254 + $0xa] sm:$0xff]
      %s272 = scalar_lea.vmem %s254, 24
      %v273 = vld [vmem:[%s272] sm:$0xff]
      %v274 = vld [vmem:[%s272 + $0x8] sm:$0xff]
      %v275 = vld [vmem:[%s272 + $0x1] sm:$0xff]
      %v276 = vld [vmem:[%s272 + $0x9] sm:$0xff]
      %v277 = vld [vmem:[%s272 + $0x2] sm:$0xff]
      %v278 = vld [vmem:[%s272 + $0xa] sm:$0xff]
      %s279 = scalar_lea.vmem %s254, 48
      %v280 = vld [vmem:[%s279] sm:$0xff]
      %v281 = vld [vmem:[%s279 + $0x8] sm:$0xff]
      %v282 = vld [vmem:[%s279 + $0x1] sm:$0xff]
      %v283 = vld [vmem:[%s279 + $0x9] sm:$0xff]
      %v284 = vld [vmem:[%s279 + $0x2] sm:$0xff]
      %v285 = vld [vmem:[%s279 + $0xa] sm:$0xff]
      %288 = vrot.lane.b32.xlu0 %v268, 4
      %v289 = vpop.permute.xlu0 %288
      %290 = vrot.lane.b32.xlu0 %v269, 4
      %v291 = vpop.permute.xlu0 %290
      %296 = vrot.lane.b32.xlu0 %v270, 8
      %v297 = vpop.permute.xlu0 %296
      %298 = vrot.lane.b32.xlu0 %v271, 8
      %v299 = vpop.permute.xlu0 %298
      %304 = vrot.lane.b32.xlu0 %v273, 12
      %v305 = vpop.permute.xlu0 %304
      %306 = vrot.lane.b32.xlu0 %v274, 12
      %v307 = vpop.permute.xlu0 %306
      %312 = vrot.lane.b32.xlu0 %v275, 16
      %v313 = vpop.permute.xlu0 %312
      %314 = vrot.lane.b32.xlu0 %v276, 16
      %v315 = vpop.permute.xlu0 %314
      %320 = vrot.lane.b32.xlu0 %v277, 20
      %v321 = vpop.permute.xlu0 %320
      %322 = vrot.lane.b32.xlu0 %v278, 20
      %v323 = vpop.permute.xlu0 %322
      %328 = vrot.lane.b32.xlu0 %v280, 24
      %v329 = vpop.permute.xlu0 %328
      %330 = vrot.lane.b32.xlu0 %v281, 24
      %v331 = vpop.permute.xlu0 %330
      %336 = vrot.lane.b32.xlu0 %v282, 28
      %v337 = vpop.permute.xlu0 %336
      %338 = vrot.lane.b32.xlu0 %v283, 28
      %v339 = vpop.permute.xlu0 %338
      %344 = vrot.lane.b32.xlu0 %v284, 32
      %v345 = vpop.permute.xlu0 %344
      %346 = vrot.lane.b32.xlu0 %v285, 32
      %v347 = vpop.permute.xlu0 %346
      %vm350 = vcmask 31744
      %v351 = vsel %vm350, %v266, %v289
      %v352 = vsel %vm350, %v267, %v291
      %vm353 = vcmask 64512
      %v354 = vsel %vm353, %v351, %v297
      %v355 = vsel %vm353, %v352, %v299
      %vm356 = vcmask 97280
      %v357 = vsel %vm356, %v354, %v305
      %v358 = vsel %vm356, %v355, %v307
      %vm359 = vcmask 130048
      %v360 = vsel %vm359, %v357, %v313
      %v361 = vsel %vm359, %v358, %v315
      %vm362 = vcmask 162816
      %v363 = vsel %vm362, %v360, %v321
      %v364 = vsel %vm362, %v361, %v323
      %vm365 = vcmask 195584
      %v366 = vsel %vm365, %v363, %v329
      %v367 = vsel %vm365, %v364, %v331
      %vm368 = vcmask 228352
      %v369 = vsel %vm368, %v366, %v337
      %v370 = vsel %vm368, %v367, %v339
      %vm371 = vcmask 261120
      %v372 = vsel %vm371, %v369, %v345
      %v373 = vsel %vm371, %v370, %v347
      %s374 = scalar_lea.vmem %s254, 72
      %v375 = vld [vmem:[%s374] sm:$0xff]
      %v376 = vld [vmem:[%s374 + $0x8] sm:$0xff]
      %v377 = vld [vmem:[%s374 + $0x1] sm:$0xff]
      %v378 = vld [vmem:[%s374 + $0x9] sm:$0xff]
      %v379 = vld [vmem:[%s374 + $0x2] sm:$0xff]
      %v380 = vld [vmem:[%s374 + $0xa] sm:$0xff]
      %381 = vrot.lane.b32.xlu0 %v275, 4
      %v382 = vpop.permute.xlu0 %381
      %383 = vrot.lane.b32.xlu0 %v276, 4
      %v384 = vpop.permute.xlu0 %383
      %387 = vrot.lane.b32.xlu0 %v277, 8
      %v388 = vpop.permute.xlu0 %387
      %389 = vrot.lane.b32.xlu0 %v278, 8
      %v390 = vpop.permute.xlu0 %389
      %393 = vrot.lane.b32.xlu0 %v280, 12
      %v394 = vpop.permute.xlu0 %393
      %395 = vrot.lane.b32.xlu0 %v281, 12
      %v396 = vpop.permute.xlu0 %395
      %399 = vrot.lane.b32.xlu0 %v282, 16
      %v400 = vpop.permute.xlu0 %399
      %401 = vrot.lane.b32.xlu0 %v283, 16
      %v402 = vpop.permute.xlu0 %401
      %405 = vrot.lane.b32.xlu0 %v284, 20
      %v406 = vpop.permute.xlu0 %405
      %407 = vrot.lane.b32.xlu0 %v285, 20
      %v408 = vpop.permute.xlu0 %407
      %413 = vrot.lane.b32.xlu0 %v375, 24
      %v414 = vpop.permute.xlu0 %413
      %415 = vrot.lane.b32.xlu0 %v376, 24
      %v416 = vpop.permute.xlu0 %415
      %421 = vrot.lane.b32.xlu0 %v377, 28
      %v422 = vpop.permute.xlu0 %421
      %423 = vrot.lane.b32.xlu0 %v378, 28
      %v424 = vpop.permute.xlu0 %423
      %429 = vrot.lane.b32.xlu0 %v379, 32
      %v430 = vpop.permute.xlu0 %429
      %431 = vrot.lane.b32.xlu0 %v380, 32
      %v432 = vpop.permute.xlu0 %431
      %v435 = vsel %vm350, %v273, %v382
      %v436 = vsel %vm350, %v274, %v384
      %v437 = vsel %vm353, %v435, %v388
      %v438 = vsel %vm353, %v436, %v390
      %v439 = vsel %vm356, %v437, %v394
      %v440 = vsel %vm356, %v438, %v396
      %v441 = vsel %vm359, %v439, %v400
      %v442 = vsel %vm359, %v440, %v402
      %v443 = vsel %vm362, %v441, %v406
      %v444 = vsel %vm362, %v442, %v408
      %v445 = vsel %vm365, %v443, %v414
      %v446 = vsel %vm365, %v444, %v416
      %v447 = vsel %vm368, %v445, %v422
      %v448 = vsel %vm368, %v446, %v424
      %v449 = vsel %vm371, %v447, %v430
      %v450 = vsel %vm371, %v448, %v432
      %s451 = scalar_lea.vmem %s254, 96
      %v452 = vld [vmem:[%s451] sm:$0xff]
      %v453 = vld [vmem:[%s451 + $0x8] sm:$0xff]
      %v454 = vld [vmem:[%s451 + $0x1] sm:$0xff]
      %v455 = vld [vmem:[%s451 + $0x9] sm:$0xff]
      %v456 = vld [vmem:[%s451 + $0x2] sm:$0xff]
      %v457 = vld [vmem:[%s451 + $0xa] sm:$0xff]
      %458 = vrot.lane.b32.xlu0 %v282, 4
      %v459 = vpop.permute.xlu0 %458
      %460 = vrot.lane.b32.xlu0 %v283, 4
      %v461 = vpop.permute.xlu0 %460
      %464 = vrot.lane.b32.xlu0 %v284, 8
      %v465 = vpop.permute.xlu0 %464
      %466 = vrot.lane.b32.xlu0 %v285, 8
      %v467 = vpop.permute.xlu0 %466
      %470 = vrot.lane.b32.xlu0 %v375, 12
      %v471 = vpop.permute.xlu0 %470
      %472 = vrot.lane.b32.xlu0 %v376, 12
      %v473 = vpop.permute.xlu0 %472
      %476 = vrot.lane.b32.xlu0 %v377, 16
      %v477 = vpop.permute.xlu0 %476
      %478 = vrot.lane.b32.xlu0 %v378, 16
      %v479 = vpop.permute.xlu0 %478
      %482 = vrot.lane.b32.xlu0 %v379, 20
      %v483 = vpop.permute.xlu0 %482
      %484 = vrot.lane.b32.xlu0 %v380, 20
      %v485 = vpop.permute.xlu0 %484
      %490 = vrot.lane.b32.xlu0 %v452, 24
      %v491 = vpop.permute.xlu0 %490
      %492 = vrot.lane.b32.xlu0 %v453, 24
      %v493 = vpop.permute.xlu0 %492
      %498 = vrot.lane.b32.xlu0 %v454, 28
      %v499 = vpop.permute.xlu0 %498
      %500 = vrot.lane.b32.xlu0 %v455, 28
      %v501 = vpop.permute.xlu0 %500
      %506 = vrot.lane.b32.xlu0 %v456, 32
      %v507 = vpop.permute.xlu0 %506
      %508 = vrot.lane.b32.xlu0 %v457, 32
      %v509 = vpop.permute.xlu0 %508
      %v512 = vsel %vm350, %v280, %v459
      %v513 = vsel %vm350, %v281, %v461
      %v514 = vsel %vm353, %v512, %v465
      %v515 = vsel %vm353, %v513, %v467
      %v516 = vsel %vm356, %v514, %v471
      %v517 = vsel %vm356, %v515, %v473
      %v518 = vsel %vm359, %v516, %v477
      %v519 = vsel %vm359, %v517, %v479
      %v520 = vsel %vm362, %v518, %v483
      %v521 = vsel %vm362, %v519, %v485
      %v522 = vsel %vm365, %v520, %v491
      %v523 = vsel %vm365, %v521, %v493
      %v524 = vsel %vm368, %v522, %v499
      %v525 = vsel %vm368, %v523, %v501
      %v526 = vsel %vm371, %v524, %v507
      %v527 = vsel %vm371, %v525, %v509
      %s528 = scalar_lea.vmem %s254, 120
      %v529 = vld [vmem:[%s528] sm:$0xff]
      %v530 = vld [vmem:[%s528 + $0x8] sm:$0xff]
      %v531 = vld [vmem:[%s528 + $0x1] sm:$0xff]
      %v532 = vld [vmem:[%s528 + $0x9] sm:$0xff]
      %v533 = vld [vmem:[%s528 + $0x2] sm:$0xff]
      %v534 = vld [vmem:[%s528 + $0xa] sm:$0xff]
      %535 = vrot.lane.b32.xlu0 %v377, 4
      %v536 = vpop.permute.xlu0 %535
      %537 = vrot.lane.b32.xlu0 %v378, 4
      %v538 = vpop.permute.xlu0 %537
      %541 = vrot.lane.b32.xlu0 %v379, 8
      %v542 = vpop.permute.xlu0 %541
      %543 = vrot.lane.b32.xlu0 %v380, 8
      %v544 = vpop.permute.xlu0 %543
      %547 = vrot.lane.b32.xlu0 %v452, 12
      %v548 = vpop.permute.xlu0 %547
      %549 = vrot.lane.b32.xlu0 %v453, 12
      %v550 = vpop.permute.xlu0 %549
      %553 = vrot.lane.b32.xlu0 %v454, 16
      %v554 = vpop.permute.xlu0 %553
      %555 = vrot.lane.b32.xlu0 %v455, 16
      %v556 = vpop.permute.xlu0 %555
      %559 = vrot.lane.b32.xlu0 %v456, 20
      %v560 = vpop.permute.xlu0 %559
      %561 = vrot.lane.b32.xlu0 %v457, 20
      %v562 = vpop.permute.xlu0 %561
      %567 = vrot.lane.b32.xlu0 %v529, 24
      %v568 = vpop.permute.xlu0 %567
      %569 = vrot.lane.b32.xlu0 %v530, 24
      %v570 = vpop.permute.xlu0 %569
      %575 = vrot.lane.b32.xlu0 %v531, 28
      %v576 = vpop.permute.xlu0 %575
      %577 = vrot.lane.b32.xlu0 %v532, 28
      %v578 = vpop.permute.xlu0 %577
      %583 = vrot.lane.b32.xlu0 %v533, 32
      %v584 = vpop.permute.xlu0 %583
      %585 = vrot.lane.b32.xlu0 %v534, 32
      %v586 = vpop.permute.xlu0 %585
      %v589 = vsel %vm350, %v375, %v536
      %v590 = vsel %vm350, %v376, %v538
      %v591 = vsel %vm353, %v589, %v542
      %v592 = vsel %vm353, %v590, %v544
      %v593 = vsel %vm356, %v591, %v548
      %v594 = vsel %vm356, %v592, %v550
      %v595 = vsel %vm359, %v593, %v554
      %v596 = vsel %vm359, %v594, %v556
      %v597 = vsel %vm362, %v595, %v560
      %v598 = vsel %vm362, %v596, %v562
      %v599 = vsel %vm365, %v597, %v568
      %v600 = vsel %vm365, %v598, %v570
      %v601 = vsel %vm368, %v599, %v576
      %v602 = vsel %vm368, %v600, %v578
      %v603 = vsel %vm371, %v601, %v584
      %v604 = vsel %vm371, %v602, %v586
      %s605 = scalar_lea.vmem %s254, 144
      %v606 = vld [vmem:[%s605] sm:$0xff]
      %v607 = vld [vmem:[%s605 + $0x8] sm:$0xff]
      %v608 = vld [vmem:[%s605 + $0x1] sm:$0xff]
      %v609 = vld [vmem:[%s605 + $0x9] sm:$0xff]
      %v610 = vld [vmem:[%s605 + $0x2] sm:$0xff]
      %v611 = vld [vmem:[%s605 + $0xa] sm:$0xff]
      %612 = vrot.lane.b32.xlu0 %v454, 4
      %v613 = vpop.permute.xlu0 %612
      %614 = vrot.lane.b32.xlu0 %v455, 4
      %v615 = vpop.permute.xlu0 %614
      %618 = vrot.lane.b32.xlu0 %v456, 8
      %v619 = vpop.permute.xlu0 %618
      %620 = vrot.lane.b32.xlu0 %v457, 8
      %v621 = vpop.permute.xlu0 %620
      %624 = vrot.lane.b32.xlu0 %v529, 12
      %v625 = vpop.permute.xlu0 %624
      %626 = vrot.lane.b32.xlu0 %v530, 12
      %v627 = vpop.permute.xlu0 %626
      %630 = vrot.lane.b32.xlu0 %v531, 16
      %v631 = vpop.permute.xlu0 %630
      %632 = vrot.lane.b32.xlu0 %v532, 16
      %v633 = vpop.permute.xlu0 %632
      %636 = vrot.lane.b32.xlu0 %v533, 20
      %v637 = vpop.permute.xlu0 %636
      %638 = vrot.lane.b32.xlu0 %v534, 20
      %v639 = vpop.permute.xlu0 %638
      %644 = vrot.lane.b32.xlu0 %v606, 24
      %v645 = vpop.permute.xlu0 %644
      %646 = vrot.lane.b32.xlu0 %v607, 24
      %v647 = vpop.permute.xlu0 %646
      %652 = vrot.lane.b32.xlu0 %v608, 28
      %v653 = vpop.permute.xlu0 %652
      %654 = vrot.lane.b32.xlu0 %v609, 28
      %v655 = vpop.permute.xlu0 %654
      %660 = vrot.lane.b32.xlu0 %v610, 32
      %v661 = vpop.permute.xlu0 %660
      %662 = vrot.lane.b32.xlu0 %v611, 32
      %v663 = vpop.permute.xlu0 %662
      %v666 = vsel %vm350, %v452, %v613
      %v667 = vsel %vm350, %v453, %v615
      %v668 = vsel %vm353, %v666, %v619
      %v669 = vsel %vm353, %v667, %v621
      %v670 = vsel %vm356, %v668, %v625
      %v671 = vsel %vm356, %v669, %v627
      %v672 = vsel %vm359, %v670, %v631
      %v673 = vsel %vm359, %v671, %v633
      %v674 = vsel %vm362, %v672, %v637
      %v675 = vsel %vm362, %v673, %v639
      %v676 = vsel %vm365, %v674, %v645
      %v677 = vsel %vm365, %v675, %v647
      %v678 = vsel %vm368, %v676, %v653
      %v679 = vsel %vm368, %v677, %v655
      %v680 = vsel %vm371, %v678, %v661
      %v681 = vsel %vm371, %v679, %v663
      %s682 = scalar_lea.vmem %s254, 168
      %v683 = vld [vmem:[%s682] sm:$0xff]
      %v684 = vld [vmem:[%s682 + $0x8] sm:$0xff]
      %v685 = vld [vmem:[%s682 + $0x1] sm:$0xff]
      %v686 = vld [vmem:[%s682 + $0x9] sm:$0xff]
      %v687 = vld [vmem:[%s682 + $0x2] sm:$0xff]
      %v688 = vld [vmem:[%s682 + $0xa] sm:$0xff]
      %689 = vrot.lane.b32.xlu0 %v531, 4
      %v690 = vpop.permute.xlu0 %689
      %691 = vrot.lane.b32.xlu0 %v532, 4
      %v692 = vpop.permute.xlu0 %691
      %695 = vrot.lane.b32.xlu0 %v533, 8
      %v696 = vpop.permute.xlu0 %695
      %697 = vrot.lane.b32.xlu0 %v534, 8
      %v698 = vpop.permute.xlu0 %697
      %701 = vrot.lane.b32.xlu0 %v606, 12
      %v702 = vpop.permute.xlu0 %701
      %703 = vrot.lane.b32.xlu0 %v607, 12
      %v704 = vpop.permute.xlu0 %703
      %707 = vrot.lane.b32.xlu0 %v608, 16
      %v708 = vpop.permute.xlu0 %707
      %709 = vrot.lane.b32.xlu0 %v609, 16
      %v710 = vpop.permute.xlu0 %709
      %713 = vrot.lane.b32.xlu0 %v610, 20
      %v714 = vpop.permute.xlu0 %713
      %715 = vrot.lane.b32.xlu0 %v611, 20
      %v716 = vpop.permute.xlu0 %715
      %721 = vrot.lane.b32.xlu0 %v683, 24
      %v722 = vpop.permute.xlu0 %721
      %723 = vrot.lane.b32.xlu0 %v684, 24
      %v724 = vpop.permute.xlu0 %723
      %729 = vrot.lane.b32.xlu0 %v685, 28
      %v730 = vpop.permute.xlu0 %729
      %731 = vrot.lane.b32.xlu0 %v686, 28
      %v732 = vpop.permute.xlu0 %731
      %737 = vrot.lane.b32.xlu0 %v687, 32
      %v738 = vpop.permute.xlu0 %737
      %739 = vrot.lane.b32.xlu0 %v688, 32
      %v740 = vpop.permute.xlu0 %739
      %v743 = vsel %vm350, %v529, %v690
      %v744 = vsel %vm350, %v530, %v692
      %v745 = vsel %vm353, %v743, %v696
      %v746 = vsel %vm353, %v744, %v698
      %v747 = vsel %vm356, %v745, %v702
      %v748 = vsel %vm356, %v746, %v704
      %v749 = vsel %vm359, %v747, %v708
      %v750 = vsel %vm359, %v748, %v710
      %v751 = vsel %vm362, %v749, %v714
      %v752 = vsel %vm362, %v750, %v716
      %v753 = vsel %vm365, %v751, %v722
      %v754 = vsel %vm365, %v752, %v724
      %v755 = vsel %vm368, %v753, %v730
      %v756 = vsel %vm368, %v754, %v732
      %v757 = vsel %vm371, %v755, %v738
      %v758 = vsel %vm371, %v756, %v740
      %s759 = scalar_lea.vmem %s254, 192
      %v760 = vld [vmem:[%s759] sm:$0xff]
      %v761 = vld [vmem:[%s759 + $0x8] sm:$0xff]
      %v762 = vld [vmem:[%s759 + $0x1] sm:$0xff]
      %v763 = vld [vmem:[%s759 + $0x9] sm:$0xff]
      %v764 = vld [vmem:[%s759 + $0x2] sm:$0xff]
      %v765 = vld [vmem:[%s759 + $0xa] sm:$0xff]
      %766 = vrot.lane.b32.xlu0 %v608, 4
      %v767 = vpop.permute.xlu0 %766
      %768 = vrot.lane.b32.xlu0 %v609, 4
      %v769 = vpop.permute.xlu0 %768
      %772 = vrot.lane.b32.xlu0 %v610, 8
      %v773 = vpop.permute.xlu0 %772
      %774 = vrot.lane.b32.xlu0 %v611, 8
      %v775 = vpop.permute.xlu0 %774
      %778 = vrot.lane.b32.xlu0 %v683, 12
      %v779 = vpop.permute.xlu0 %778
      %780 = vrot.lane.b32.xlu0 %v684, 12
      %v781 = vpop.permute.xlu0 %780
      %784 = vrot.lane.b32.xlu0 %v685, 16
      %v785 = vpop.permute.xlu0 %784
      %786 = vrot.lane.b32.xlu0 %v686, 16
      %v787 = vpop.permute.xlu0 %786
      %790 = vrot.lane.b32.xlu0 %v687, 20
      %v791 = vpop.permute.xlu0 %790
      %792 = vrot.lane.b32.xlu0 %v688, 20
      %v793 = vpop.permute.xlu0 %792
      %798 = vrot.lane.b32.xlu0 %v760, 24
      %v799 = vpop.permute.xlu0 %798
      %800 = vrot.lane.b32.xlu0 %v761, 24
      %v801 = vpop.permute.xlu0 %800
      %806 = vrot.lane.b32.xlu0 %v762, 28
      %v807 = vpop.permute.xlu0 %806
      %808 = vrot.lane.b32.xlu0 %v763, 28
      %v809 = vpop.permute.xlu0 %808
      %814 = vrot.lane.b32.xlu0 %v764, 32
      %v815 = vpop.permute.xlu0 %814
      %816 = vrot.lane.b32.xlu0 %v765, 32
      %v817 = vpop.permute.xlu0 %816
      %v820 = vsel %vm350, %v606, %v767
      %v821 = vsel %vm350, %v607, %v769
      %v822 = vsel %vm353, %v820, %v773
      %v823 = vsel %vm353, %v821, %v775
      %v824 = vsel %vm356, %v822, %v779
      %v825 = vsel %vm356, %v823, %v781
      %v826 = vsel %vm359, %v824, %v785
      %v827 = vsel %vm359, %v825, %v787
      %v828 = vsel %vm362, %v826, %v791
      %v829 = vsel %vm362, %v827, %v793
      %v830 = vsel %vm365, %v828, %v799
      %v831 = vsel %vm365, %v829, %v801
      %v832 = vsel %vm368, %v830, %v807
      %v833 = vsel %vm368, %v831, %v809
      %v834 = vsel %vm371, %v832, %v815
      %v835 = vsel %vm371, %v833, %v817
      %s836 = scalar_lea.vmem %s254, 216
      %v837 = vld [vmem:[%s836] sm:$0xff]
      %v838 = vld [vmem:[%s836 + $0x8] sm:$0xff]
      %v839 = vld [vmem:[%s836 + $0x1] sm:$0xff]
      %v840 = vld [vmem:[%s836 + $0x9] sm:$0xff]
      %v841 = vld [vmem:[%s836 + $0x2] sm:$0xff]
      %v842 = vld [vmem:[%s836 + $0xa] sm:$0xff]
      %843 = vrot.lane.b32.xlu0 %v685, 4
      %v844 = vpop.permute.xlu0 %843
      %845 = vrot.lane.b32.xlu0 %v686, 4
      %v846 = vpop.permute.xlu0 %845
      %849 = vrot.lane.b32.xlu0 %v687, 8
      %v850 = vpop.permute.xlu0 %849
      %851 = vrot.lane.b32.xlu0 %v688, 8
      %v852 = vpop.permute.xlu0 %851
      %855 = vrot.lane.b32.xlu0 %v760, 12
      %v856 = vpop.permute.xlu0 %855
      %857 = vrot.lane.b32.xlu0 %v761, 12
      %v858 = vpop.permute.xlu0 %857
      %861 = vrot.lane.b32.xlu0 %v762, 16
      %v862 = vpop.permute.xlu0 %861
      %863 = vrot.lane.b32.xlu0 %v763, 16
      %v864 = vpop.permute.xlu0 %863
      %867 = vrot.lane.b32.xlu0 %v764, 20
      %v868 = vpop.permute.xlu0 %867
      %869 = vrot.lane.b32.xlu0 %v765, 20
      %v870 = vpop.permute.xlu0 %869
      %875 = vrot.lane.b32.xlu0 %v837, 24
      %v876 = vpop.permute.xlu0 %875
      %877 = vrot.lane.b32.xlu0 %v838, 24
      %v878 = vpop.permute.xlu0 %877
      %883 = vrot.lane.b32.xlu0 %v839, 28
      %v884 = vpop.permute.xlu0 %883
      %885 = vrot.lane.b32.xlu0 %v840, 28
      %v886 = vpop.permute.xlu0 %885
      %891 = vrot.lane.b32.xlu0 %v841, 32
      %v892 = vpop.permute.xlu0 %891
      %893 = vrot.lane.b32.xlu0 %v842, 32
      %v894 = vpop.permute.xlu0 %893
      %v897 = vsel %vm350, %v683, %v844
      %v898 = vsel %vm350, %v684, %v846
      %v899 = vsel %vm353, %v897, %v850
      %v900 = vsel %vm353, %v898, %v852
      %v901 = vsel %vm356, %v899, %v856
      %v902 = vsel %vm356, %v900, %v858
      %v903 = vsel %vm359, %v901, %v862
      %v904 = vsel %vm359, %v902, %v864
      %v905 = vsel %vm362, %v903, %v868
      %v906 = vsel %vm362, %v904, %v870
      %v907 = vsel %vm365, %v905, %v876
      %v908 = vsel %vm365, %v906, %v878
      %v909 = vsel %vm368, %v907, %v884
      %v910 = vsel %vm368, %v908, %v886
      %v911 = vsel %vm371, %v909, %v892
      %v912 = vsel %vm371, %v910, %v894
      %s913 = scalar_lea.vmem %s254, 240
      %v914 = vld [vmem:[%s913] sm:$0xff]
      %v915 = vld [vmem:[%s913 + $0x8] sm:$0xff]
      %v916 = vld [vmem:[%s913 + $0x1] sm:$0xff]
      %v917 = vld [vmem:[%s913 + $0x9] sm:$0xff]
      %v918 = vld [vmem:[%s913 + $0x2] sm:$0xff]
      %v919 = vld [vmem:[%s913 + $0xa] sm:$0xff]
      %920 = vrot.lane.b32.xlu0 %v762, 4
      %v921 = vpop.permute.xlu0 %920
      %922 = vrot.lane.b32.xlu0 %v763, 4
      %v923 = vpop.permute.xlu0 %922
      %926 = vrot.lane.b32.xlu0 %v764, 8
      %v927 = vpop.permute.xlu0 %926
      %928 = vrot.lane.b32.xlu0 %v765, 8
      %v929 = vpop.permute.xlu0 %928
      %932 = vrot.lane.b32.xlu0 %v837, 12
      %v933 = vpop.permute.xlu0 %932
      %934 = vrot.lane.b32.xlu0 %v838, 12
      %v935 = vpop.permute.xlu0 %934
      %938 = vrot.lane.b32.xlu0 %v839, 16
      %v939 = vpop.permute.xlu0 %938
      %940 = vrot.lane.b32.xlu0 %v840, 16
      %v941 = vpop.permute.xlu0 %940
      %944 = vrot.lane.b32.xlu0 %v841, 20
      %v945 = vpop.permute.xlu0 %944
      %946 = vrot.lane.b32.xlu0 %v842, 20
      %v947 = vpop.permute.xlu0 %946
      %952 = vrot.lane.b32.xlu0 %v914, 24
      %v953 = vpop.permute.xlu0 %952
      %954 = vrot.lane.b32.xlu0 %v915, 24
      %v955 = vpop.permute.xlu0 %954
      %960 = vrot.lane.b32.xlu0 %v916, 28
      %v961 = vpop.permute.xlu0 %960
      %962 = vrot.lane.b32.xlu0 %v917, 28
      %v963 = vpop.permute.xlu0 %962
      %968 = vrot.lane.b32.xlu0 %v918, 32
      %v969 = vpop.permute.xlu0 %968
      %970 = vrot.lane.b32.xlu0 %v919, 32
      %v971 = vpop.permute.xlu0 %970
      %v974 = vsel %vm350, %v760, %v921
      %v975 = vsel %vm350, %v761, %v923
      %v976 = vsel %vm353, %v974, %v927
      %v977 = vsel %vm353, %v975, %v929
      %v978 = vsel %vm356, %v976, %v933
      %v979 = vsel %vm356, %v977, %v935
      %v980 = vsel %vm359, %v978, %v939
      %v981 = vsel %vm359, %v979, %v941
      %v982 = vsel %vm362, %v980, %v945
      %v983 = vsel %vm362, %v981, %v947
      %v984 = vsel %vm365, %v982, %v953
      %v985 = vsel %vm365, %v983, %v955
      %v986 = vsel %vm368, %v984, %v961
      %v987 = vsel %vm368, %v985, %v963
      %v988 = vsel %vm371, %v986, %v969
      %v989 = vsel %vm371, %v987, %v971
      %s990 = scalar_lea.vmem %s254, 264
      %v991 = vld [vmem:[%s990] sm:$0xff]
      %v992 = vld [vmem:[%s990 + $0x8] sm:$0xff]
      %v993 = vld [vmem:[%s990 + $0x1] sm:$0xff]
      %v994 = vld [vmem:[%s990 + $0x9] sm:$0xff]
      %v995 = vld [vmem:[%s990 + $0x2] sm:$0xff]
      %v996 = vld [vmem:[%s990 + $0xa] sm:$0xff]
      %997 = vrot.lane.b32.xlu0 %v839, 4
      %v998 = vpop.permute.xlu0 %997
      %999 = vrot.lane.b32.xlu0 %v840, 4
      %v1000 = vpop.permute.xlu0 %999
      %1003 = vrot.lane.b32.xlu0 %v841, 8
      %v1004 = vpop.permute.xlu0 %1003
      %1005 = vrot.lane.b32.xlu0 %v842, 8
      %v1006 = vpop.permute.xlu0 %1005
      %1009 = vrot.lane.b32.xlu0 %v914, 12
      %v1010 = vpop.permute.xlu0 %1009
      %1011 = vrot.lane.b32.xlu0 %v915, 12
      %v1012 = vpop.permute.xlu0 %1011
      %1015 = vrot.lane.b32.xlu0 %v916, 16
      %v1016 = vpop.permute.xlu0 %1015
      %1017 = vrot.lane.b32.xlu0 %v917, 16
      %v1018 = vpop.permute.xlu0 %1017
      %1021 = vrot.lane.b32.xlu0 %v918, 20
      %v1022 = vpop.permute.xlu0 %1021
      %1023 = vrot.lane.b32.xlu0 %v919, 20
      %v1024 = vpop.permute.xlu0 %1023
      %1029 = vrot.lane.b32.xlu0 %v991, 24
      %v1030 = vpop.permute.xlu0 %1029
      %1031 = vrot.lane.b32.xlu0 %v992, 24
      %v1032 = vpop.permute.xlu0 %1031
      %1037 = vrot.lane.b32.xlu0 %v993, 28
      %v1038 = vpop.permute.xlu0 %1037
      %1039 = vrot.lane.b32.xlu0 %v994, 28
      %v1040 = vpop.permute.xlu0 %1039
      %1045 = vrot.lane.b32.xlu0 %v995, 32
      %v1046 = vpop.permute.xlu0 %1045
      %1047 = vrot.lane.b32.xlu0 %v996, 32
      %v1048 = vpop.permute.xlu0 %1047
      %v1051 = vsel %vm350, %v837, %v998
      %v1052 = vsel %vm350, %v838, %v1000
      %v1053 = vsel %vm353, %v1051, %v1004
      %v1054 = vsel %vm353, %v1052, %v1006
      %v1055 = vsel %vm356, %v1053, %v1010
      %v1056 = vsel %vm356, %v1054, %v1012
      %v1057 = vsel %vm359, %v1055, %v1016
      %v1058 = vsel %vm359, %v1056, %v1018
      %v1059 = vsel %vm362, %v1057, %v1022
      %v1060 = vsel %vm362, %v1058, %v1024
      %v1061 = vsel %vm365, %v1059, %v1030
      %v1062 = vsel %vm365, %v1060, %v1032
      %v1063 = vsel %vm368, %v1061, %v1038
      %v1064 = vsel %vm368, %v1062, %v1040
      %v1065 = vsel %vm371, %v1063, %v1046
      %v1066 = vsel %vm371, %v1064, %v1048
      %s1067 = scalar_lea.vmem %s254, 288
      %v1068 = vld [vmem:[%s1067] sm:$0xff]
      %v1069 = vld [vmem:[%s1067 + $0x8] sm:$0xff]
      %v1070 = vld [vmem:[%s1067 + $0x1] sm:$0xff]
      %v1071 = vld [vmem:[%s1067 + $0x9] sm:$0xff]
      %v1072 = vld [vmem:[%s1067 + $0x2] sm:$0xff]
      %v1073 = vld [vmem:[%s1067 + $0xa] sm:$0xff]
      %1074 = vrot.lane.b32.xlu0 %v916, 4
      %v1075 = vpop.permute.xlu0 %1074
      %1076 = vrot.lane.b32.xlu0 %v917, 4
      %v1077 = vpop.permute.xlu0 %1076
      %1080 = vrot.lane.b32.xlu0 %v918, 8
      %v1081 = vpop.permute.xlu0 %1080
      %1082 = vrot.lane.b32.xlu0 %v919, 8
      %v1083 = vpop.permute.xlu0 %1082
      %1086 = vrot.lane.b32.xlu0 %v991, 12
      %v1087 = vpop.permute.xlu0 %1086
      %1088 = vrot.lane.b32.xlu0 %v992, 12
      %v1089 = vpop.permute.xlu0 %1088
      %1092 = vrot.lane.b32.xlu0 %v993, 16
      %v1093 = vpop.permute.xlu0 %1092
      %1094 = vrot.lane.b32.xlu0 %v994, 16
      %v1095 = vpop.permute.xlu0 %1094
      %1098 = vrot.lane.b32.xlu0 %v995, 20
      %v1099 = vpop.permute.xlu0 %1098
      %1100 = vrot.lane.b32.xlu0 %v996, 20
      %v1101 = vpop.permute.xlu0 %1100
      %1106 = vrot.lane.b32.xlu0 %v1068, 24
      %v1107 = vpop.permute.xlu0 %1106
      %1108 = vrot.lane.b32.xlu0 %v1069, 24
      %v1109 = vpop.permute.xlu0 %1108
      %1114 = vrot.lane.b32.xlu0 %v1070, 28
      %v1115 = vpop.permute.xlu0 %1114
      %1116 = vrot.lane.b32.xlu0 %v1071, 28
      %v1117 = vpop.permute.xlu0 %1116
      %1122 = vrot.lane.b32.xlu0 %v1072, 32
      %v1123 = vpop.permute.xlu0 %1122
      %1124 = vrot.lane.b32.xlu0 %v1073, 32
      %v1125 = vpop.permute.xlu0 %1124
      %v1128 = vsel %vm350, %v914, %v1075
      %v1129 = vsel %vm350, %v915, %v1077
      %v1130 = vsel %vm353, %v1128, %v1081
      %v1131 = vsel %vm353, %v1129, %v1083
      %v1132 = vsel %vm356, %v1130, %v1087
      %v1133 = vsel %vm356, %v1131, %v1089
      %v1134 = vsel %vm359, %v1132, %v1093
      %v1135 = vsel %vm359, %v1133, %v1095
      %v1136 = vsel %vm362, %v1134, %v1099
      %v1137 = vsel %vm362, %v1135, %v1101
      %v1138 = vsel %vm365, %v1136, %v1107
      %v1139 = vsel %vm365, %v1137, %v1109
      %v1140 = vsel %vm368, %v1138, %v1115
      %v1141 = vsel %vm368, %v1139, %v1117
      %v1142 = vsel %vm371, %v1140, %v1123
      %v1143 = vsel %vm371, %v1141, %v1125
      %s1144 = scalar_lea.vmem %s254, 312
      %v1145 = vld [vmem:[%s1144] sm:$0xff]
      %v1146 = vld [vmem:[%s1144 + $0x8] sm:$0xff]
      %v1147 = vld [vmem:[%s1144 + $0x1] sm:$0xff]
      %v1148 = vld [vmem:[%s1144 + $0x9] sm:$0xff]
      %v1149 = vld [vmem:[%s1144 + $0x2] sm:$0xff]
      %v1150 = vld [vmem:[%s1144 + $0xa] sm:$0xff]
      %1151 = vrot.lane.b32.xlu0 %v993, 4
      %v1152 = vpop.permute.xlu0 %1151
      %1153 = vrot.lane.b32.xlu0 %v994, 4
      %v1154 = vpop.permute.xlu0 %1153
      %1157 = vrot.lane.b32.xlu0 %v995, 8
      %v1158 = vpop.permute.xlu0 %1157
      %1159 = vrot.lane.b32.xlu0 %v996, 8
      %v1160 = vpop.permute.xlu0 %1159
      %1163 = vrot.lane.b32.xlu0 %v1068, 12
      %v1164 = vpop.permute.xlu0 %1163
      %1165 = vrot.lane.b32.xlu0 %v1069, 12
      %v1166 = vpop.permute.xlu0 %1165
      %1169 = vrot.lane.b32.xlu0 %v1070, 16
      %v1170 = vpop.permute.xlu0 %1169
      %1171 = vrot.lane.b32.xlu0 %v1071, 16
      %v1172 = vpop.permute.xlu0 %1171
      %1175 = vrot.lane.b32.xlu0 %v1072, 20
      %v1176 = vpop.permute.xlu0 %1175
      %1177 = vrot.lane.b32.xlu0 %v1073, 20
      %v1178 = vpop.permute.xlu0 %1177
      %1183 = vrot.lane.b32.xlu0 %v1145, 24
      %v1184 = vpop.permute.xlu0 %1183
      %1185 = vrot.lane.b32.xlu0 %v1146, 24
      %v1186 = vpop.permute.xlu0 %1185
      %1191 = vrot.lane.b32.xlu0 %v1147, 28
      %v1192 = vpop.permute.xlu0 %1191
      %1193 = vrot.lane.b32.xlu0 %v1148, 28
      %v1194 = vpop.permute.xlu0 %1193
      %1199 = vrot.lane.b32.xlu0 %v1149, 32
      %v1200 = vpop.permute.xlu0 %1199
      %1201 = vrot.lane.b32.xlu0 %v1150, 32
      %v1202 = vpop.permute.xlu0 %1201
      %v1205 = vsel %vm350, %v991, %v1152
      %v1206 = vsel %vm350, %v992, %v1154
      %v1207 = vsel %vm353, %v1205, %v1158
      %v1208 = vsel %vm353, %v1206, %v1160
      %v1209 = vsel %vm356, %v1207, %v1164
      %v1210 = vsel %vm356, %v1208, %v1166
      %v1211 = vsel %vm359, %v1209, %v1170
      %v1212 = vsel %vm359, %v1210, %v1172
      %v1213 = vsel %vm362, %v1211, %v1176
      %v1214 = vsel %vm362, %v1212, %v1178
      %v1215 = vsel %vm365, %v1213, %v1184
      %v1216 = vsel %vm365, %v1214, %v1186
      %v1217 = vsel %vm368, %v1215, %v1192
      %v1218 = vsel %vm368, %v1216, %v1194
      %v1219 = vsel %vm371, %v1217, %v1200
      %v1220 = vsel %vm371, %v1218, %v1202
      %s1221 = scalar_lea.vmem %s254, 336
      %v1222 = vld [vmem:[%s1221] sm:$0xff]
      %v1223 = vld [vmem:[%s1221 + $0x8] sm:$0xff]
      %v1224 = vld [vmem:[%s1221 + $0x1] sm:$0xff]
      %v1225 = vld [vmem:[%s1221 + $0x9] sm:$0xff]
      %v1226 = vld [vmem:[%s1221 + $0x2] sm:$0xff]
      %v1227 = vld [vmem:[%s1221 + $0xa] sm:$0xff]
      %1228 = vrot.lane.b32.xlu0 %v1070, 4
      %v1229 = vpop.permute.xlu0 %1228
      %1230 = vrot.lane.b32.xlu0 %v1071, 4
      %v1231 = vpop.permute.xlu0 %1230
      %1234 = vrot.lane.b32.xlu0 %v1072, 8
      %v1235 = vpop.permute.xlu0 %1234
      %1236 = vrot.lane.b32.xlu0 %v1073, 8
      %v1237 = vpop.permute.xlu0 %1236
      %1240 = vrot.lane.b32.xlu0 %v1145, 12
      %v1241 = vpop.permute.xlu0 %1240
      %1242 = vrot.lane.b32.xlu0 %v1146, 12
      %v1243 = vpop.permute.xlu0 %1242
      %1246 = vrot.lane.b32.xlu0 %v1147, 16
      %v1247 = vpop.permute.xlu0 %1246
      %1248 = vrot.lane.b32.xlu0 %v1148, 16
      %v1249 = vpop.permute.xlu0 %1248
      %1252 = vrot.lane.b32.xlu0 %v1149, 20
      %v1253 = vpop.permute.xlu0 %1252
      %1254 = vrot.lane.b32.xlu0 %v1150, 20
      %v1255 = vpop.permute.xlu0 %1254
      %1260 = vrot.lane.b32.xlu0 %v1222, 24
      %v1261 = vpop.permute.xlu0 %1260
      %1262 = vrot.lane.b32.xlu0 %v1223, 24
      %v1263 = vpop.permute.xlu0 %1262
      %1268 = vrot.lane.b32.xlu0 %v1224, 28
      %v1269 = vpop.permute.xlu0 %1268
      %1270 = vrot.lane.b32.xlu0 %v1225, 28
      %v1271 = vpop.permute.xlu0 %1270
      %1276 = vrot.lane.b32.xlu0 %v1226, 32
      %v1277 = vpop.permute.xlu0 %1276
      %1278 = vrot.lane.b32.xlu0 %v1227, 32
      %v1279 = vpop.permute.xlu0 %1278
      %v1282 = vsel %vm350, %v1068, %v1229
      %v1283 = vsel %vm350, %v1069, %v1231
      %v1284 = vsel %vm353, %v1282, %v1235
      %v1285 = vsel %vm353, %v1283, %v1237
      %v1286 = vsel %vm356, %v1284, %v1241
      %v1287 = vsel %vm356, %v1285, %v1243
      %v1288 = vsel %vm359, %v1286, %v1247
      %v1289 = vsel %vm359, %v1287, %v1249
      %v1290 = vsel %vm362, %v1288, %v1253
      %v1291 = vsel %vm362, %v1289, %v1255
      %v1292 = vsel %vm365, %v1290, %v1261
      %v1293 = vsel %vm365, %v1291, %v1263
      %v1294 = vsel %vm368, %v1292, %v1269
      %v1295 = vsel %vm368, %v1293, %v1271
      %v1296 = vsel %vm371, %v1294, %v1277
      %v1297 = vsel %vm371, %v1295, %v1279
      %s1298 = scalar_lea.vmem %s254, 360
      %v1299 = vld [vmem:[%s1298] sm:$0xff]
      %v1300 = vld [vmem:[%s1298 + $0x8] sm:$0xff]
      %v1301 = vld [vmem:[%s1298 + $0x1] sm:$0xff]
      %v1302 = vld [vmem:[%s1298 + $0x9] sm:$0xff]
      %v1303 = vld [vmem:[%s1298 + $0x2] sm:$0xff]
      %v1304 = vld [vmem:[%s1298 + $0xa] sm:$0xff]
      %1305 = vrot.lane.b32.xlu0 %v1147, 4
      %v1306 = vpop.permute.xlu0 %1305
      %1307 = vrot.lane.b32.xlu0 %v1148, 4
      %v1308 = vpop.permute.xlu0 %1307
      %1311 = vrot.lane.b32.xlu0 %v1149, 8
      %v1312 = vpop.permute.xlu0 %1311
      %1313 = vrot.lane.b32.xlu0 %v1150, 8
      %v1314 = vpop.permute.xlu0 %1313
      %1317 = vrot.lane.b32.xlu0 %v1222, 12
      %v1318 = vpop.permute.xlu0 %1317
      %1319 = vrot.lane.b32.xlu0 %v1223, 12
      %v1320 = vpop.permute.xlu0 %1319
      %1323 = vrot.lane.b32.xlu0 %v1224, 16
      %v1324 = vpop.permute.xlu0 %1323
      %1325 = vrot.lane.b32.xlu0 %v1225, 16
      %v1326 = vpop.permute.xlu0 %1325
      %1329 = vrot.lane.b32.xlu0 %v1226, 20
      %v1330 = vpop.permute.xlu0 %1329
      %1331 = vrot.lane.b32.xlu0 %v1227, 20
      %v1332 = vpop.permute.xlu0 %1331
      %1337 = vrot.lane.b32.xlu0 %v1299, 24
      %v1338 = vpop.permute.xlu0 %1337
      %1339 = vrot.lane.b32.xlu0 %v1300, 24
      %v1340 = vpop.permute.xlu0 %1339
      %1345 = vrot.lane.b32.xlu0 %v1301, 28
      %v1346 = vpop.permute.xlu0 %1345
      %1347 = vrot.lane.b32.xlu0 %v1302, 28
      %v1348 = vpop.permute.xlu0 %1347
      %1353 = vrot.lane.b32.xlu0 %v1303, 32
      %v1354 = vpop.permute.xlu0 %1353
      %1355 = vrot.lane.b32.xlu0 %v1304, 32
      %v1356 = vpop.permute.xlu0 %1355
      %v1359 = vsel %vm350, %v1145, %v1306
      %v1360 = vsel %vm350, %v1146, %v1308
      %v1361 = vsel %vm353, %v1359, %v1312
      %v1362 = vsel %vm353, %v1360, %v1314
      %v1363 = vsel %vm356, %v1361, %v1318
      %v1364 = vsel %vm356, %v1362, %v1320
      %v1365 = vsel %vm359, %v1363, %v1324
      %v1366 = vsel %vm359, %v1364, %v1326
      %v1367 = vsel %vm362, %v1365, %v1330
      %v1368 = vsel %vm362, %v1366, %v1332
      %v1369 = vsel %vm365, %v1367, %v1338
      %v1370 = vsel %vm365, %v1368, %v1340
      %v1371 = vsel %vm368, %v1369, %v1346
      %v1372 = vsel %vm368, %v1370, %v1348
      %v1373 = vsel %vm371, %v1371, %v1354
      %v1374 = vsel %vm371, %v1372, %v1356
      %s1375 = scalar_lea.vmem %s254, 384
      %v1376 = vld [vmem:[%s1375] sm:$0xff]
      %v1377 = vld [vmem:[%s1375 + $0x8] sm:$0xff]
      %v1378 = vld [vmem:[%s1375 + $0x1] sm:$0xff]
      %v1379 = vld [vmem:[%s1375 + $0x9] sm:$0xff]
      %v1380 = vld [vmem:[%s1375 + $0x2] sm:$0xff]
      %v1381 = vld [vmem:[%s1375 + $0xa] sm:$0xff]
      %1382 = vrot.lane.b32.xlu0 %v1224, 4
      %v1383 = vpop.permute.xlu0 %1382
      %1384 = vrot.lane.b32.xlu0 %v1225, 4
      %v1385 = vpop.permute.xlu0 %1384
      %1388 = vrot.lane.b32.xlu0 %v1226, 8
      %v1389 = vpop.permute.xlu0 %1388
      %1390 = vrot.lane.b32.xlu0 %v1227, 8
      %v1391 = vpop.permute.xlu0 %1390
      %1394 = vrot.lane.b32.xlu0 %v1299, 12
      %v1395 = vpop.permute.xlu0 %1394
      %1396 = vrot.lane.b32.xlu0 %v1300, 12
      %v1397 = vpop.permute.xlu0 %1396
      %1400 = vrot.lane.b32.xlu0 %v1301, 16
      %v1401 = vpop.permute.xlu0 %1400
      %1402 = vrot.lane.b32.xlu0 %v1302, 16
      %v1403 = vpop.permute.xlu0 %1402
      %1406 = vrot.lane.b32.xlu0 %v1303, 20
      %v1407 = vpop.permute.xlu0 %1406
      %1408 = vrot.lane.b32.xlu0 %v1304, 20
      %v1409 = vpop.permute.xlu0 %1408
      %1414 = vrot.lane.b32.xlu0 %v1376, 24
      %v1415 = vpop.permute.xlu0 %1414
      %1416 = vrot.lane.b32.xlu0 %v1377, 24
      %v1417 = vpop.permute.xlu0 %1416
      %1422 = vrot.lane.b32.xlu0 %v1378, 28
      %v1423 = vpop.permute.xlu0 %1422
      %1424 = vrot.lane.b32.xlu0 %v1379, 28
      %v1425 = vpop.permute.xlu0 %1424
      %1430 = vrot.lane.b32.xlu0 %v1380, 32
      %v1431 = vpop.permute.xlu0 %1430
      %1432 = vrot.lane.b32.xlu0 %v1381, 32
      %v1433 = vpop.permute.xlu0 %1432
      %v1436 = vsel %vm350, %v1222, %v1383
      %v1437 = vsel %vm350, %v1223, %v1385
      %v1438 = vsel %vm353, %v1436, %v1389
      %v1439 = vsel %vm353, %v1437, %v1391
      %v1440 = vsel %vm356, %v1438, %v1395
      %v1441 = vsel %vm356, %v1439, %v1397
      %v1442 = vsel %vm359, %v1440, %v1401
      %v1443 = vsel %vm359, %v1441, %v1403
      %v1444 = vsel %vm362, %v1442, %v1407
      %v1445 = vsel %vm362, %v1443, %v1409
      %v1446 = vsel %vm365, %v1444, %v1415
      %v1447 = vsel %vm365, %v1445, %v1417
      %v1448 = vsel %vm368, %v1446, %v1423
      %v1449 = vsel %vm368, %v1447, %v1425
      %v1450 = vsel %vm371, %v1448, %v1431
      %v1451 = vsel %vm371, %v1449, %v1433
      %s1452 = scalar_lea.vmem %s254, 408
      %v1453 = vld [vmem:[%s1452] sm:$0xff]
      %v1454 = vld [vmem:[%s1452 + $0x8] sm:$0xff]
      %v1455 = vld [vmem:[%s1452 + $0x1] sm:$0xff]
      %v1456 = vld [vmem:[%s1452 + $0x9] sm:$0xff]
      %v1457 = vld [vmem:[%s1452 + $0x2] sm:$0xff]
      %v1458 = vld [vmem:[%s1452 + $0xa] sm:$0xff]
      %1459 = vrot.lane.b32.xlu0 %v1301, 4
      %v1460 = vpop.permute.xlu0 %1459
      %1461 = vrot.lane.b32.xlu0 %v1302, 4
      %v1462 = vpop.permute.xlu0 %1461
      %1465 = vrot.lane.b32.xlu0 %v1303, 8
      %v1466 = vpop.permute.xlu0 %1465
      %1467 = vrot.lane.b32.xlu0 %v1304, 8
      %v1468 = vpop.permute.xlu0 %1467
      %1471 = vrot.lane.b32.xlu0 %v1376, 12
      %v1472 = vpop.permute.xlu0 %1471
      %1473 = vrot.lane.b32.xlu0 %v1377, 12
      %v1474 = vpop.permute.xlu0 %1473
      %1477 = vrot.lane.b32.xlu0 %v1378, 16
      %v1478 = vpop.permute.xlu0 %1477
      %1479 = vrot.lane.b32.xlu0 %v1379, 16
      %v1480 = vpop.permute.xlu0 %1479
      %1483 = vrot.lane.b32.xlu0 %v1380, 20
      %v1484 = vpop.permute.xlu0 %1483
      %1485 = vrot.lane.b32.xlu0 %v1381, 20
      %v1486 = vpop.permute.xlu0 %1485
      %1491 = vrot.lane.b32.xlu0 %v1453, 24
      %v1492 = vpop.permute.xlu0 %1491
      %1493 = vrot.lane.b32.xlu0 %v1454, 24
      %v1494 = vpop.permute.xlu0 %1493
      %1499 = vrot.lane.b32.xlu0 %v1455, 28
      %v1500 = vpop.permute.xlu0 %1499
      %1501 = vrot.lane.b32.xlu0 %v1456, 28
      %v1502 = vpop.permute.xlu0 %1501
      %1507 = vrot.lane.b32.xlu0 %v1457, 32
      %v1508 = vpop.permute.xlu0 %1507
      %1509 = vrot.lane.b32.xlu0 %v1458, 32
      %v1510 = vpop.permute.xlu0 %1509
      %v1513 = vsel %vm350, %v1299, %v1460
      %v1514 = vsel %vm350, %v1300, %v1462
      %v1515 = vsel %vm353, %v1513, %v1466
      %v1516 = vsel %vm353, %v1514, %v1468
      %v1517 = vsel %vm356, %v1515, %v1472
      %v1518 = vsel %vm356, %v1516, %v1474
      %v1519 = vsel %vm359, %v1517, %v1478
      %v1520 = vsel %vm359, %v1518, %v1480
      %v1521 = vsel %vm362, %v1519, %v1484
      %v1522 = vsel %vm362, %v1520, %v1486
      %v1523 = vsel %vm365, %v1521, %v1492
      %v1524 = vsel %vm365, %v1522, %v1494
      %v1525 = vsel %vm368, %v1523, %v1500
      %v1526 = vsel %vm368, %v1524, %v1502
      %v1527 = vsel %vm371, %v1525, %v1508
      %v1528 = vsel %vm371, %v1526, %v1510
      %v1529 = vpack.c.bf16 %v373, %v372
      %v1530 = vpack.c.bf16 %v450, %v449
      %v1531 = vpack.c.bf16 %v527, %v526
      %v1532 = vpack.c.bf16 %v604, %v603
      %v1533 = vpack.c.bf16 %v681, %v680
      %v1534 = vpack.c.bf16 %v758, %v757
      %v1535 = vpack.c.bf16 %v835, %v834
      %v1536 = vpack.c.bf16 %v912, %v911
      %v1537 = vpack.c.bf16 %v989, %v988
      %v1538 = vpack.c.bf16 %v1066, %v1065
      %v1539 = vpack.c.bf16 %v1143, %v1142
      %v1540 = vpack.c.bf16 %v1220, %v1219
      %v1541 = vpack.c.bf16 %v1297, %v1296
      %v1542 = vpack.c.bf16 %v1374, %v1373
      %v1543 = vpack.c.bf16 %v1451, %v1450
      %v1544 = vpack.c.bf16 %v1528, %v1527
      %v1545 = vld [vmem:[%s1] sm:$0xf]
      %v1546 = vld [vmem:[%s1 + $0x4] sm:$0xf]
      %v1547 = vld [vmem:[%s1 + $0x8] sm:$0xf]
      %v1548 = vld [vmem:[%s1 + $0xc] sm:$0xf]
      %v1549 = vld [vmem:[%s1 + $0x10] sm:$0x3]
      %v1550 = vld [vmem:[%s2] sm:$0x1]
      %v1552 = vperm.slane %v1550, 0
      %v1559 = vunpack.c.l.b16 %v1545
      %v1560 = vunpack.c.l.b16 %v1546
      %v1561 = vunpack.c.l.b16 %v1547
      %v1562 = vunpack.c.l.b16 %v1548
      %v1563 = vunpack.c.l.b16 %v1549
      %v1564 = vpack.c.b16 %v1560, %v1559
      %v1565 = vpack.c.b16 %v1562, %v1561
      %v1566 = vpack.c.b16 %v1563, %v1563
      %vm1569 = vcmask 293888
      %v1571 = vsel %vm1569, %v1529, 0
      %v1574 = vsel %vm1569, %v1530, 0
      %v1577 = vsel %vm1569, %v1531, 0
      %v1580 = vsel %vm1569, %v1532, 0
      %v1583 = vsel %vm1569, %v1533, 0
      %v1586 = vsel %vm1569, %v1534, 0
      %v1589 = vsel %vm1569, %v1535, 0
      %v1592 = vsel %vm1569, %v1536, 0
      %v1595 = vsel %vm1569, %v1537, 0
      %v1598 = vsel %vm1569, %v1538, 0
      %v1601 = vsel %vm1569, %v1539, 0
      %v1604 = vsel %vm1569, %v1540, 0
      %v1607 = vsel %vm1569, %v1541, 0
      %v1610 = vsel %vm1569, %v1542, 0
      %v1613 = vsel %vm1569, %v1543, 0
      %v1616 = vsel %vm1569, %v1544, 0
      %vm1618 = vcmask 1041408
      %v1620 = vsel %vm1618, %v1566, 0
      %1622 = vmatpush.bf16.msra.mxu0 0
      %1623 = vmatpush.bf16.msra.mxu0 0
      %1624 = vmatpush.bf16.msra.mxu0 0
      %1625 = vmatpush.bf16.msra.mxu0 0
      %1626 = vmatpush.bf16.msra.mxu0 0
      %1627 = vmatpush.bf16.msra.mxu0 %v1620
      %1628 = vmatpush.bf16.msra.mxu0 %v1565
      %1629 = vmatpush.bf16.msra.mxu0 %v1564
      %1630 = vmatmul.bf16.gmra.mxu0 %v1571
      %v1631 = vpop.f32.mrf.mxu0
      %v1632 = vadd.f32 %v1552, %v1631
      %v1633 = vpop.f32.mrf.mxu0
      %v1634 = vadd.f32 %v1552, %v1633
      %1635 = vmatmul.bf16.gmra.mxu0 %v1574
      %v1636 = vpop.f32.mrf.mxu0
      %v1637 = vadd.f32 %v1552, %v1636
      %v1638 = vpop.f32.mrf.mxu0
      %v1639 = vadd.f32 %v1552, %v1638
      %1640 = vmatmul.bf16.gmra.mxu0 %v1577
      %v1641 = vpop.f32.mrf.mxu0
      %v1642 = vadd.f32 %v1552, %v1641
      %v1643 = vpop.f32.mrf.mxu0
      %v1644 = vadd.f32 %v1552, %v1643
      %1645 = vmatmul.bf16.gmra.mxu0 %v1580
      %v1646 = vpop.f32.mrf.mxu0
      %v1647 = vadd.f32 %v1552, %v1646
      %v1648 = vpop.f32.mrf.mxu0
      %v1649 = vadd.f32 %v1552, %v1648
      %1650 = vmatmul.bf16.gmra.mxu0 %v1583
      %v1651 = vpop.f32.mrf.mxu0
      %v1652 = vadd.f32 %v1552, %v1651
      %v1653 = vpop.f32.mrf.mxu0
      %v1654 = vadd.f32 %v1552, %v1653
      %1655 = vmatmul.bf16.gmra.mxu0 %v1586
      %v1656 = vpop.f32.mrf.mxu0
      %v1657 = vadd.f32 %v1552, %v1656
      %v1658 = vpop.f32.mrf.mxu0
      %v1659 = vadd.f32 %v1552, %v1658
      %1660 = vmatmul.bf16.gmra.mxu0 %v1589
      %v1661 = vpop.f32.mrf.mxu0
      %v1662 = vadd.f32 %v1552, %v1661
      %v1663 = vpop.f32.mrf.mxu0
      %v1664 = vadd.f32 %v1552, %v1663
      %1665 = vmatmul.bf16.gmra.mxu0 %v1592
      %v1666 = vpop.f32.mrf.mxu0
      %v1667 = vadd.f32 %v1552, %v1666
      %v1668 = vpop.f32.mrf.mxu0
      %v1669 = vadd.f32 %v1552, %v1668
      %1670 = vmatmul.bf16.gmra.mxu0 %v1595
      %v1671 = vpop.f32.mrf.mxu0
      %v1672 = vadd.f32 %v1552, %v1671
      %v1673 = vpop.f32.mrf.mxu0
      %v1674 = vadd.f32 %v1552, %v1673
      %1675 = vmatmul.bf16.gmra.mxu0 %v1598
      %v1676 = vpop.f32.mrf.mxu0
      %v1677 = vadd.f32 %v1552, %v1676
      %v1678 = vpop.f32.mrf.mxu0
      %v1679 = vadd.f32 %v1552, %v1678
      %1680 = vmatmul.bf16.gmra.mxu0 %v1601
      %v1681 = vpop.f32.mrf.mxu0
      %v1682 = vadd.f32 %v1552, %v1681
      %v1683 = vpop.f32.mrf.mxu0
      %v1684 = vadd.f32 %v1552, %v1683
      %1685 = vmatmul.bf16.gmra.mxu0 %v1604
      %v1686 = vpop.f32.mrf.mxu0
      %v1687 = vadd.f32 %v1552, %v1686
      %v1688 = vpop.f32.mrf.mxu0
      %v1689 = vadd.f32 %v1552, %v1688
      %1690 = vmatmul.bf16.gmra.mxu0 %v1607
      %v1691 = vpop.f32.mrf.mxu0
      %v1692 = vadd.f32 %v1552, %v1691
      %v1693 = vpop.f32.mrf.mxu0
      %v1694 = vadd.f32 %v1552, %v1693
      %1695 = vmatmul.bf16.gmra.mxu0 %v1610
      %v1696 = vpop.f32.mrf.mxu0
      %v1697 = vadd.f32 %v1552, %v1696
      %v1698 = vpop.f32.mrf.mxu0
      %v1699 = vadd.f32 %v1552, %v1698
      %1700 = vmatmul.bf16.gmra.mxu0 %v1613
      %v1701 = vpop.f32.mrf.mxu0
      %v1702 = vadd.f32 %v1552, %v1701
      %v1703 = vpop.f32.mrf.mxu0
      %v1704 = vadd.f32 %v1552, %v1703
      %1705 = vmatmul.bf16.gmra.mxu0 %v1616
      %v1706 = vpop.f32.mrf.mxu0
      %v1707 = vadd.f32 %v1552, %v1706
      %v1708 = vpop.f32.mrf.mxu0
      %v1709 = vadd.f32 %v1552, %v1708
      %1710 = vdwg.mxu0
      %v1711 = vmax.f32 %v1632, 0.0
      %v1712 = vmax.f32 %v1634, 0.0
      %v1713 = vmax.f32 %v1637, 0.0
      %v1714 = vmax.f32 %v1639, 0.0
      %v1715 = vmax.f32 %v1642, 0.0
      %v1716 = vmax.f32 %v1644, 0.0
      %v1717 = vmax.f32 %v1647, 0.0
      %v1718 = vmax.f32 %v1649, 0.0
      %v1719 = vmax.f32 %v1652, 0.0
      %v1720 = vmax.f32 %v1654, 0.0
      %v1721 = vmax.f32 %v1657, 0.0
      %v1722 = vmax.f32 %v1659, 0.0
      %v1723 = vmax.f32 %v1662, 0.0
      %v1724 = vmax.f32 %v1664, 0.0
      %v1725 = vmax.f32 %v1667, 0.0
      %v1726 = vmax.f32 %v1669, 0.0
      %v1727 = vmax.f32 %v1672, 0.0
      %v1728 = vmax.f32 %v1674, 0.0
      %v1729 = vmax.f32 %v1677, 0.0
      %v1730 = vmax.f32 %v1679, 0.0
      %v1731 = vmax.f32 %v1682, 0.0
      %v1732 = vmax.f32 %v1684, 0.0
      %v1733 = vmax.f32 %v1687, 0.0
      %v1734 = vmax.f32 %v1689, 0.0
      %v1735 = vmax.f32 %v1692, 0.0
      %v1736 = vmax.f32 %v1694, 0.0
      %v1737 = vmax.f32 %v1697, 0.0
      %v1738 = vmax.f32 %v1699, 0.0
      %v1739 = vmax.f32 %v1702, 0.0
      %v1740 = vmax.f32 %v1704, 0.0
      %v1741 = vmax.f32 %v1707, 0.0
      %v1742 = vmax.f32 %v1709, 0.0
      %v1743 = vld [vmem:[%s3] sm:$0xff]
      %v1744 = vld [vmem:[%s3 + $0x8] sm:$0xff]
      %v1745 = vld [vmem:[%s3 + $0x10] sm:$0xff]
      %v1746 = vld [vmem:[%s3 + $0x18] sm:$0xff]
      %v1747 = vld [vmem:[%s3 + $0x20] sm:$0xff]
      %v1748 = vld [vmem:[%s3 + $0x28] sm:$0xff]
      %v1749 = vld [vmem:[%s3 + $0x30] sm:$0xff]
      %v1750 = vld [vmem:[%s3 + $0x38] sm:$0xff]
      %v1751 = vld [vmem:[%s3 + $0x40] sm:$0xff]
      %v1752 = vld [vmem:[%s3 + $0x48] sm:$0xff]
      %v1753 = vld [vmem:[%s3 + $0x50] sm:$0xff]
      %v1754 = vld [vmem:[%s3 + $0x58] sm:$0xff]
      %v1755 = vld [vmem:[%s3 + $0x60] sm:$0xff]
      %v1756 = vld [vmem:[%s3 + $0x68] sm:$0xff]
      %v1757 = vld [vmem:[%s3 + $0x70] sm:$0xff]
      %v1758 = vld [vmem:[%s3 + $0x78] sm:$0xff]
      %1759 = vmatpush.msra.mxu0 %v1726
      %1760 = vmatpush.msra.mxu0 %v1725
      %1761 = vmatpush.msra.mxu0 %v1724
      %1762 = vmatpush.msra.mxu0 %v1723
      %1763 = vmatpush.msra.mxu0 %v1722
      %1764 = vmatpush.msra.mxu0 %v1721
      %1765 = vmatpush.msra.mxu0 %v1720
      %1766 = vmatpush.msra.mxu0 %v1719
      %1767 = vmatpush.msra.mxu0 %v1718
      %1768 = vmatpush.msra.mxu0 %v1717
      %1769 = vmatpush.msra.mxu0 %v1716
      %1770 = vmatpush.msra.mxu0 %v1715
      %1771 = vmatpush.msra.mxu0 %v1714
      %1772 = vmatpush.msra.mxu0 %v1713
      %1773 = vmatpush.msra.mxu0 %v1712
      %1774 = vmatpush.msra.mxu0 %v1711
      %1775 = vmatmul.f32.gmra.mxu0 %v1743
      %v1776 = vpop.f32.mrf.mxu0
      %v1777 = vadd.f32 0.0, %v1776
      %1778 = vmatmul.f32.gmra.mxu0 %v1745
      %v1779 = vpop.f32.mrf.mxu0
      %v1780 = vadd.f32 0.0, %v1779
      %1781 = vmatmul.f32.gmra.mxu0 %v1747
      %v1782 = vpop.f32.mrf.mxu0
      %v1783 = vadd.f32 0.0, %v1782
      %1784 = vmatmul.f32.gmra.mxu0 %v1749
      %v1785 = vpop.f32.mrf.mxu0
      %v1786 = vadd.f32 0.0, %v1785
      %1787 = vmatmul.f32.gmra.mxu0 %v1751
      %v1788 = vpop.f32.mrf.mxu0
      %v1789 = vadd.f32 0.0, %v1788
      %1790 = vmatmul.f32.gmra.mxu0 %v1753
      %v1791 = vpop.f32.mrf.mxu0
      %v1792 = vadd.f32 0.0, %v1791
      %1793 = vmatmul.f32.gmra.mxu0 %v1755
      %v1794 = vpop.f32.mrf.mxu0
      %v1795 = vadd.f32 0.0, %v1794
      %1796 = vmatmul.f32.gmra.mxu0 %v1757
      %v1797 = vpop.f32.mrf.mxu0
      %v1798 = vadd.f32 0.0, %v1797
      %1799 = vdwg.mxu0
      %1800 = vmatpush.msra.mxu0 %v1742
      %1801 = vmatpush.msra.mxu0 %v1741
      %1802 = vmatpush.msra.mxu0 %v1740
      %1803 = vmatpush.msra.mxu0 %v1739
      %1804 = vmatpush.msra.mxu0 %v1738
      %1805 = vmatpush.msra.mxu0 %v1737
      %1806 = vmatpush.msra.mxu0 %v1736
      %1807 = vmatpush.msra.mxu0 %v1735
      %1808 = vmatpush.msra.mxu0 %v1734
      %1809 = vmatpush.msra.mxu0 %v1733
      %1810 = vmatpush.msra.mxu0 %v1732
      %1811 = vmatpush.msra.mxu0 %v1731
      %1812 = vmatpush.msra.mxu0 %v1730
      %1813 = vmatpush.msra.mxu0 %v1729
      %1814 = vmatpush.msra.mxu0 %v1728
      %1815 = vmatpush.msra.mxu0 %v1727
      %1816 = vmatmul.f32.gmra.mxu0 %v1744
      %v1817 = vpop.f32.mrf.mxu0
      %v1818 = vadd.f32 %v1777, %v1817
      %1819 = vmatmul.f32.gmra.mxu0 %v1746
      %v1820 = vpop.f32.mrf.mxu0
      %v1821 = vadd.f32 %v1780, %v1820
      %1822 = vmatmul.f32.gmra.mxu0 %v1748
      %v1823 = vpop.f32.mrf.mxu0
      %v1824 = vadd.f32 %v1783, %v1823
      %1825 = vmatmul.f32.gmra.mxu0 %v1750
      %v1826 = vpop.f32.mrf.mxu0
      %v1827 = vadd.f32 %v1786, %v1826
      %1828 = vmatmul.f32.gmra.mxu0 %v1752
      %v1829 = vpop.f32.mrf.mxu0
      %v1830 = vadd.f32 %v1789, %v1829
      %1831 = vmatmul.f32.gmra.mxu0 %v1754
      %v1832 = vpop.f32.mrf.mxu0
      %v1833 = vadd.f32 %v1792, %v1832
      %1834 = vmatmul.f32.gmra.mxu0 %v1756
      %v1835 = vpop.f32.mrf.mxu0
      %v1836 = vadd.f32 %v1795, %v1835
      %1837 = vmatmul.f32.gmra.mxu0 %v1758
      %v1838 = vpop.f32.mrf.mxu0
      %v1839 = vadd.f32 %v1798, %v1838
      %1840 = vdwg.mxu0
      %1841 = vst.msk [vmem:[%s259] sm:$0xff] %vm353, 0.0
      %vm1842 = vcmask 58368
      %1843 = vst.msk [vmem:[%s259 + $0x8] sm:$0x3] %vm1842, 0.0
      %1844 = vst.msk [vmem:[%s259 + $0x10] sm:$0xff] %vm353, 0.0
      %1845 = vst.msk [vmem:[%s259 + $0x18] sm:$0x3] %vm1842, 0.0
      %1846 = vst.msk [vmem:[%s259 + $0x20] sm:$0xff] %vm353, 0.0
      %1847 = vst.msk [vmem:[%s259 + $0x28] sm:$0x3] %vm1842, 0.0
      %1848 = vst.msk [vmem:[%s259 + $0x30] sm:$0xff] %vm353, 0.0
      %1849 = vst.msk [vmem:[%s259 + $0x38] sm:$0x3] %vm1842, 0.0
      %1850 = vst.msk [vmem:[%s259 + $0x40] sm:$0xff] %vm353, 0.0
      %1851 = vst.msk [vmem:[%s259 + $0x48] sm:$0x3] %vm1842, 0.0
      %1852 = vst.msk [vmem:[%s259 + $0x50] sm:$0xff] %vm353, 0.0
      %1853 = vst.msk [vmem:[%s259 + $0x58] sm:$0x3] %vm1842, 0.0
      %1854 = vst.msk [vmem:[%s259 + $0x60] sm:$0xff] %vm353, 0.0
      %1855 = vst.msk [vmem:[%s259 + $0x68] sm:$0x3] %vm1842, 0.0
      %1856 = vst.msk [vmem:[%s259 + $0x70] sm:$0xff] %vm353, 0.0
      %1857 = vst.msk [vmem:[%s259 + $0x78] sm:$0x3] %vm1842, 0.0
      %1858 = vst.msk [vmem:[%s259 + $0x80] sm:$0xff] %vm353, 0.0
      %1859 = vst.msk [vmem:[%s259 + $0x88] sm:$0x3] %vm1842, 0.0
      %1860 = vst.msk [vmem:[%s259 + $0x90] sm:$0xff] %vm353, 0.0
      %1861 = vst.msk [vmem:[%s259 + $0x98] sm:$0x3] %vm1842, 0.0
      %s1862 = scalar_lea.vmem %s259, 16
      %1863 = vst.msk [vmem:[%s1862 + $0x1] sm:$0xff] %vm353, %v1818
      %s1864 = scalar_lea.vmem %s259, 32
      %1865 = vst.msk [vmem:[%s1864 + $0x1] sm:$0xff] %vm353, %v1821
      %s1866 = scalar_lea.vmem %s259, 48
      %1867 = vst.msk [vmem:[%s1866 + $0x1] sm:$0xff] %vm353, %v1824
      %s1868 = scalar_lea.vmem %s259, 64
      %1869 = vst.msk [vmem:[%s1868 + $0x1] sm:$0xff] %vm353, %v1827
      %s1870 = scalar_lea.vmem %s259, 80
      %1871 = vst.msk [vmem:[%s1870 + $0x1] sm:$0xff] %vm353, %v1830
      %s1872 = scalar_lea.vmem %s259, 96
      %1873 = vst.msk [vmem:[%s1872 + $0x1] sm:$0xff] %vm353, %v1833
      %s1874 = scalar_lea.vmem %s259, 112
      %1875 = vst.msk [vmem:[%s1874 + $0x1] sm:$0xff] %vm353, %v1836
      %s1876 = scalar_lea.vmem %s259, 128
      %1877 = vst.msk [vmem:[%s1876 + $0x1] sm:$0xff] %vm353, %v1839
      %v1878 = vld [vmem:[%s259] sm:$0xff]
      %v1879 = vld [vmem:[%s259 + $0x8] sm:$0x3]
      %v1880 = vld [vmem:[%s259 + $0x10] sm:$0xff]
      %v1881 = vld [vmem:[%s259 + $0x18] sm:$0x3]
      %v1882 = vld [vmem:[%s259 + $0x20] sm:$0xff]
      %v1883 = vld [vmem:[%s259 + $0x28] sm:$0x3]
      %v1884 = vld [vmem:[%s259 + $0x30] sm:$0xff]
      %v1885 = vld [vmem:[%s259 + $0x38] sm:$0x3]
      %v1886 = vld [vmem:[%s259 + $0x40] sm:$0xff]
      %v1887 = vld [vmem:[%s259 + $0x48] sm:$0x3]
      %v1888 = vld [vmem:[%s259 + $0x50] sm:$0xff]
      %v1889 = vld [vmem:[%s259 + $0x58] sm:$0x3]
      %v1890 = vld [vmem:[%s259 + $0x60] sm:$0xff]
      %v1891 = vld [vmem:[%s259 + $0x68] sm:$0x3]
      %v1892 = vld [vmem:[%s259 + $0x70] sm:$0xff]
      %v1893 = vld [vmem:[%s259 + $0x78] sm:$0x3]
      %v1894 = vld [vmem:[%s259 + $0x80] sm:$0xff]
      %v1895 = vld [vmem:[%s259 + $0x88] sm:$0x3]
      %v1896 = vld [vmem:[%s259 + $0x90] sm:$0xff]
      %v1897 = vld [vmem:[%s259 + $0x98] sm:$0x3]
      %1900 = vrot.lane.b32.xlu0 %v1880, 8
      %v1901 = vpop.permute.xlu0 %1900
      %1902 = vrot.lane.b32.xlu0 %v1881, 8
      %v1903 = vpop.permute.xlu0 %1902
      %1908 = vrot.lane.b32.xlu0 %v1878, 16
      %v1909 = vpop.permute.xlu0 %1908
      %1910 = vrot.lane.b32.xlu0 %v1879, 16
      %v1911 = vpop.permute.xlu0 %1910
      %v1915 = vrot.slane %v1882, 7
      %1916 = vrot.lane.b32.xlu0 %v1915, 24
      %v1917 = vpop.permute.xlu0 %1916
      %v1919 = vrot.slane %v1880, 7
      %1920 = vrot.lane.b32.xlu0 %v1919, 32
      %v1921 = vpop.permute.xlu0 %1920
      %v1923 = vrot.slane %v1878, 7
      %1924 = vrot.lane.b32.xlu0 %v1923, 40
      %v1925 = vpop.permute.xlu0 %1924
      %v1927 = vsel %vm353, %v1882, %v1901
      %v1928 = vsel %vm353, %v1883, %v1903
      %v1929 = vsel %vm359, %v1927, %v1909
      %v1930 = vsel %vm359, %v1928, %v1911
      %v1931 = vsel %vm365, %v1929, %v1917
      %v1932 = vsel %vm365, %v1930, %v1917
      %v1933 = vsel %vm371, %v1931, %v1921
      %v1934 = vsel %vm371, %v1932, %v1921
      %vm1935 = vcmask 326656
      %v1936 = vsel %vm1935, %v1933, %v1925
      %v1937 = vsel %vm1935, %v1934, %v1925
      %v1938 = vpack.c.bf16 %v1937, %v1936
      %v1939 = vld [vmem:[%s4] sm:$0xf]
      %v1940 = vld [vmem:[%s4 + $0x4] sm:$0xf]
      %v1941 = vld [vmem:[%s4 + $0x8] sm:$0xf]
      %v1942 = vld [vmem:[%s4 + $0xc] sm:$0xf]
      %v1943 = vld [vmem:[%s4 + $0x10] sm:$0xf]
      %v1944 = vld [vmem:[%s4 + $0x14] sm:$0xf]
      %v1946 = vshrl.u32 %v1938, 16
      %v1948 = vshll.u32 %v1938, 16
      %v1950 = vrot.slane %v1948, 1
      %v1951 = vor.u32 %v1946, %v1950
      %v1958 = vunpack.c.l.b16 %v1939
      %v1959 = vunpack.c.l.b16 %v1940
      %v1960 = vunpack.c.l.b16 %v1941
      %v1961 = vunpack.c.l.b16 %v1942
      %v1962 = vunpack.c.l.b16 %v1943
      %v1963 = vunpack.c.l.b16 %v1944
      %v1964 = vpack.c.b16 %v1959, %v1958
      %v1965 = vpack.c.b16 %v1961, %v1960
      %v1966 = vpack.c.b16 %v1963, %v1962
      %vm1970 = vcmask 392192
      %v1972 = vsel %vm1970, %v1951, 0
      %1974 = vmatpush.bf16.msra.mxu0 0
      %1975 = vmatpush.bf16.msra.mxu0 0
      %1976 = vmatpush.bf16.msra.mxu0 0
      %1977 = vmatpush.bf16.msra.mxu0 0
      %1978 = vmatpush.bf16.msra.mxu0 0
      %1979 = vmatpush.bf16.msra.mxu0 %v1966
      %1980 = vmatpush.bf16.msra.mxu0 %v1965
      %1981 = vmatpush.bf16.msra.mxu0 %v1964
      %1982 = vmatmul.bf16.gmra.mxu0 %v1972
      %v1983 = vpop.f32.mrf.mxu0
      %v1984 = vadd.f32 0.0, %v1983
      %v1985 = vpop.f32.mrf.mxu0
      %1986 = vdwg.mxu0
      %1987 = vst.msk [vmem:[%s264] sm:$0xff] %vm359, %v1984
      %1989 = vrot.lane.b32.xlu0 %v1882, 8
      %v1990 = vpop.permute.xlu0 %1989
      %1991 = vrot.lane.b32.xlu0 %v1883, 8
      %v1992 = vpop.permute.xlu0 %1991
      %1995 = vrot.lane.b32.xlu0 %v1880, 16
      %v1996 = vpop.permute.xlu0 %1995
      %1997 = vrot.lane.b32.xlu0 %v1881, 16
      %v1998 = vpop.permute.xlu0 %1997
      %v2002 = vrot.slane %v1884, 7
      %2003 = vrot.lane.b32.xlu0 %v2002, 24
      %v2004 = vpop.permute.xlu0 %2003
      %2006 = vrot.lane.b32.xlu0 %v1915, 32
      %v2007 = vpop.permute.xlu0 %2006
      %2009 = vrot.lane.b32.xlu0 %v1919, 40
      %v2010 = vpop.permute.xlu0 %2009
      %v2012 = vsel %vm353, %v1884, %v1990
      %v2013 = vsel %vm353, %v1885, %v1992
      %v2014 = vsel %vm359, %v2012, %v1996
      %v2015 = vsel %vm359, %v2013, %v1998
      %v2016 = vsel %vm365, %v2014, %v2004
      %v2017 = vsel %vm365, %v2015, %v2004
      %v2018 = vsel %vm371, %v2016, %v2007
      %v2019 = vsel %vm371, %v2017, %v2007
      %v2020 = vsel %vm1935, %v2018, %v2010
      %v2021 = vsel %vm1935, %v2019, %v2010
      %v2022 = vpack.c.bf16 %v2021, %v2020
      %v2023 = vld [vmem:[%s4] sm:$0xf]
      %v2024 = vld [vmem:[%s4 + $0x4] sm:$0xf]
      %v2025 = vld [vmem:[%s4 + $0x8] sm:$0xf]
      %v2026 = vld [vmem:[%s4 + $0xc] sm:$0xf]
      %v2027 = vld [vmem:[%s4 + $0x10] sm:$0xf]
      %v2028 = vld [vmem:[%s4 + $0x14] sm:$0xf]
      %v2030 = vshrl.u32 %v2022, 16
      %v2032 = vshll.u32 %v2022, 16
      %v2034 = vrot.slane %v2032, 1
      %v2035 = vor.u32 %v2030, %v2034
      %v2042 = vunpack.c.l.b16 %v2023
      %v2043 = vunpack.c.l.b16 %v2024
      %v2044 = vunpack.c.l.b16 %v2025
      %v2045 = vunpack.c.l.b16 %v2026
      %v2046 = vunpack.c.l.b16 %v2027
      %v2047 = vunpack.c.l.b16 %v2028
      %v2048 = vpack.c.b16 %v2043, %v2042
      %v2049 = vpack.c.b16 %v2045, %v2044
      %v2050 = vpack.c.b16 %v2047, %v2046
      %v2055 = vsel %vm1970, %v2035, 0
      %2057 = vmatpush.bf16.msra.mxu0 0
      %2058 = vmatpush.bf16.msra.mxu0 0
      %2059 = vmatpush.bf16.msra.mxu0 0
      %2060 = vmatpush.bf16.msra.mxu0 0
      %2061 = vmatpush.bf16.msra.mxu0 0
      %2062 = vmatpush.bf16.msra.mxu0 %v2050
      %2063 = vmatpush.bf16.msra.mxu0 %v2049
      %2064 = vmatpush.bf16.msra.mxu0 %v2048
      %2065 = vmatmul.bf16.gmra.mxu0 %v2055
      %v2066 = vpop.f32.mrf.mxu0
      %v2067 = vadd.f32 0.0, %v2066
      %v2068 = vpop.f32.mrf.mxu0
      %2069 = vdwg.mxu0
      %s2070 = scalar_lea.vmem %s264, 8
      %2071 = vst.msk [vmem:[%s2070] sm:$0xff] %vm359, %v2067
      %2073 = vrot.lane.b32.xlu0 %v1884, 8
      %v2074 = vpop.permute.xlu0 %2073
      %2075 = vrot.lane.b32.xlu0 %v1885, 8
      %v2076 = vpop.permute.xlu0 %2075
      %2079 = vrot.lane.b32.xlu0 %v1882, 16
      %v2080 = vpop.permute.xlu0 %2079
      %2081 = vrot.lane.b32.xlu0 %v1883, 16
      %v2082 = vpop.permute.xlu0 %2081
      %v2086 = vrot.slane %v1886, 7
      %2087 = vrot.lane.b32.xlu0 %v2086, 24
      %v2088 = vpop.permute.xlu0 %2087
      %2090 = vrot.lane.b32.xlu0 %v2002, 32
      %v2091 = vpop.permute.xlu0 %2090
      %2093 = vrot.lane.b32.xlu0 %v1915, 40
      %v2094 = vpop.permute.xlu0 %2093
      %v2096 = vsel %vm353, %v1886, %v2074
      %v2097 = vsel %vm353, %v1887, %v2076
      %v2098 = vsel %vm359, %v2096, %v2080
      %v2099 = vsel %vm359, %v2097, %v2082
      %v2100 = vsel %vm365, %v2098, %v2088
      %v2101 = vsel %vm365, %v2099, %v2088
      %v2102 = vsel %vm371, %v2100, %v2091
      %v2103 = vsel %vm371, %v2101, %v2091
      %v2104 = vsel %vm1935, %v2102, %v2094
      %v2105 = vsel %vm1935, %v2103, %v2094
      %v2106 = vpack.c.bf16 %v2105, %v2104
      %v2107 = vld [vmem:[%s4] sm:$0xf]
      %v2108 = vld [vmem:[%s4 + $0x4] sm:$0xf]
      %v2109 = vld [vmem:[%s4 + $0x8] sm:$0xf]
      %v2110 = vld [vmem:[%s4 + $0xc] sm:$0xf]
      %v2111 = vld [vmem:[%s4 + $0x10] sm:$0xf]
      %v2112 = vld [vmem:[%s4 + $0x14] sm:$0xf]
      %v2114 = vshrl.u32 %v2106, 16
      %v2116 = vshll.u32 %v2106, 16
      %v2118 = vrot.slane %v2116, 1
      %v2119 = vor.u32 %v2114, %v2118
      %v2126 = vunpack.c.l.b16 %v2107
      %v2127 = vunpack.c.l.b16 %v2108
      %v2128 = vunpack.c.l.b16 %v2109
      %v2129 = vunpack.c.l.b16 %v2110
      %v2130 = vunpack.c.l.b16 %v2111
      %v2131 = vunpack.c.l.b16 %v2112
      %v2132 = vpack.c.b16 %v2127, %v2126
      %v2133 = vpack.c.b16 %v2129, %v2128
      %v2134 = vpack.c.b16 %v2131, %v2130
      %v2139 = vsel %vm1970, %v2119, 0
      %2141 = vmatpush.bf16.msra.mxu0 0
      %2142 = vmatpush.bf16.msra.mxu0 0
      %2143 = vmatpush.bf16.msra.mxu0 0
      %2144 = vmatpush.bf16.msra.mxu0 0
      %2145 = vmatpush.bf16.msra.mxu0 0
      %2146 = vmatpush.bf16.msra.mxu0 %v2134
      %2147 = vmatpush.bf16.msra.mxu0 %v2133
      %2148 = vmatpush.bf16.msra.mxu0 %v2132
      %2149 = vmatmul.bf16.gmra.mxu0 %v2139
      %v2150 = vpop.f32.mrf.mxu0
      %v2151 = vadd.f32 0.0, %v2150
      %v2152 = vpop.f32.mrf.mxu0
      %2153 = vdwg.mxu0
      %s2154 = scalar_lea.vmem %s264, 16
      %2155 = vst.msk [vmem:[%s2154] sm:$0xff] %vm359, %v2151
      %2157 = vrot.lane.b32.xlu0 %v1886, 8
      %v2158 = vpop.permute.xlu0 %2157
      %2159 = vrot.lane.b32.xlu0 %v1887, 8
      %v2160 = vpop.permute.xlu0 %2159
      %2163 = vrot.lane.b32.xlu0 %v1884, 16
      %v2164 = vpop.permute.xlu0 %2163
      %2165 = vrot.lane.b32.xlu0 %v1885, 16
      %v2166 = vpop.permute.xlu0 %2165
      %v2170 = vrot.slane %v1888, 7
      %2171 = vrot.lane.b32.xlu0 %v2170, 24
      %v2172 = vpop.permute.xlu0 %2171
      %2174 = vrot.lane.b32.xlu0 %v2086, 32
      %v2175 = vpop.permute.xlu0 %2174
      %2177 = vrot.lane.b32.xlu0 %v2002, 40
      %v2178 = vpop.permute.xlu0 %2177
      %v2180 = vsel %vm353, %v1888, %v2158
      %v2181 = vsel %vm353, %v1889, %v2160
      %v2182 = vsel %vm359, %v2180, %v2164
      %v2183 = vsel %vm359, %v2181, %v2166
      %v2184 = vsel %vm365, %v2182, %v2172
      %v2185 = vsel %vm365, %v2183, %v2172
      %v2186 = vsel %vm371, %v2184, %v2175
      %v2187 = vsel %vm371, %v2185, %v2175
      %v2188 = vsel %vm1935, %v2186, %v2178
      %v2189 = vsel %vm1935, %v2187, %v2178
      %v2190 = vpack.c.bf16 %v2189, %v2188
      %v2191 = vld [vmem:[%s4] sm:$0xf]
      %v2192 = vld [vmem:[%s4 + $0x4] sm:$0xf]
      %v2193 = vld [vmem:[%s4 + $0x8] sm:$0xf]
      %v2194 = vld [vmem:[%s4 + $0xc] sm:$0xf]
      %v2195 = vld [vmem:[%s4 + $0x10] sm:$0xf]
      %v2196 = vld [vmem:[%s4 + $0x14] sm:$0xf]
      %v2198 = vshrl.u32 %v2190, 16
      %v2200 = vshll.u32 %v2190, 16
      %v2202 = vrot.slane %v2200, 1
      %v2203 = vor.u32 %v2198, %v2202
      %v2210 = vunpack.c.l.b16 %v2191
      %v2211 = vunpack.c.l.b16 %v2192
      %v2212 = vunpack.c.l.b16 %v2193
      %v2213 = vunpack.c.l.b16 %v2194
      %v2214 = vunpack.c.l.b16 %v2195
      %v2215 = vunpack.c.l.b16 %v2196
      %v2216 = vpack.c.b16 %v2211, %v2210
      %v2217 = vpack.c.b16 %v2213, %v2212
      %v2218 = vpack.c.b16 %v2215, %v2214
      %v2223 = vsel %vm1970, %v2203, 0
      %2225 = vmatpush.bf16.msra.mxu0 0
      %2226 = vmatpush.bf16.msra.mxu0 0
      %2227 = vmatpush.bf16.msra.mxu0 0
      %2228 = vmatpush.bf16.msra.mxu0 0
      %2229 = vmatpush.bf16.msra.mxu0 0
      %2230 = vmatpush.bf16.msra.mxu0 %v2218
      %2231 = vmatpush.bf16.msra.mxu0 %v2217
      %2232 = vmatpush.bf16.msra.mxu0 %v2216
      %2233 = vmatmul.bf16.gmra.mxu0 %v2223
      %v2234 = vpop.f32.mrf.mxu0
      %v2235 = vadd.f32 0.0, %v2234
      %v2236 = vpop.f32.mrf.mxu0
      %2237 = vdwg.mxu0
      %s2238 = scalar_lea.vmem %s264, 24
      %2239 = vst.msk [vmem:[%s2238] sm:$0xff] %vm359, %v2235
      %2241 = vrot.lane.b32.xlu0 %v1888, 8
      %v2242 = vpop.permute.xlu0 %2241
      %2243 = vrot.lane.b32.xlu0 %v1889, 8
      %v2244 = vpop.permute.xlu0 %2243
      %2247 = vrot.lane.b32.xlu0 %v1886, 16
      %v2248 = vpop.permute.xlu0 %2247
      %2249 = vrot.lane.b32.xlu0 %v1887, 16
      %v2250 = vpop.permute.xlu0 %2249
      %v2254 = vrot.slane %v1890, 7
      %2255 = vrot.lane.b32.xlu0 %v2254, 24
      %v2256 = vpop.permute.xlu0 %2255
      %2258 = vrot.lane.b32.xlu0 %v2170, 32
      %v2259 = vpop.permute.xlu0 %2258
      %2261 = vrot.lane.b32.xlu0 %v2086, 40
      %v2262 = vpop.permute.xlu0 %2261
      %v2264 = vsel %vm353, %v1890, %v2242
      %v2265 = vsel %vm353, %v1891, %v2244
      %v2266 = vsel %vm359, %v2264, %v2248
      %v2267 = vsel %vm359, %v2265, %v2250
      %v2268 = vsel %vm365, %v2266, %v2256
      %v2269 = vsel %vm365, %v2267, %v2256
      %v2270 = vsel %vm371, %v2268, %v2259
      %v2271 = vsel %vm371, %v2269, %v2259
      %v2272 = vsel %vm1935, %v2270, %v2262
      %v2273 = vsel %vm1935, %v2271, %v2262
      %v2274 = vpack.c.bf16 %v2273, %v2272
      %v2275 = vld [vmem:[%s4] sm:$0xf]
      %v2276 = vld [vmem:[%s4 + $0x4] sm:$0xf]
      %v2277 = vld [vmem:[%s4 + $0x8] sm:$0xf]
      %v2278 = vld [vmem:[%s4 + $0xc] sm:$0xf]
      %v2279 = vld [vmem:[%s4 + $0x10] sm:$0xf]
      %v2280 = vld [vmem:[%s4 + $0x14] sm:$0xf]
      %v2282 = vshrl.u32 %v2274, 16
      %v2284 = vshll.u32 %v2274, 16
      %v2286 = vrot.slane %v2284, 1
      %v2287 = vor.u32 %v2282, %v2286
      %v2294 = vunpack.c.l.b16 %v2275
      %v2295 = vunpack.c.l.b16 %v2276
      %v2296 = vunpack.c.l.b16 %v2277
      %v2297 = vunpack.c.l.b16 %v2278
      %v2298 = vunpack.c.l.b16 %v2279
      %v2299 = vunpack.c.l.b16 %v2280
      %v2300 = vpack.c.b16 %v2295, %v2294
      %v2301 = vpack.c.b16 %v2297, %v2296
      %v2302 = vpack.c.b16 %v2299, %v2298
      %v2307 = vsel %vm1970, %v2287, 0
      %2309 = vmatpush.bf16.msra.mxu0 0
      %2310 = vmatpush.bf16.msra.mxu0 0
      %2311 = vmatpush.bf16.msra.mxu0 0
      %2312 = vmatpush.bf16.msra.mxu0 0
      %2313 = vmatpush.bf16.msra.mxu0 0
      %2314 = vmatpush.bf16.msra.mxu0 %v2302
      %2315 = vmatpush.bf16.msra.mxu0 %v2301
      %2316 = vmatpush.bf16.msra.mxu0 %v2300
      %2317 = vmatmul.bf16.gmra.mxu0 %v2307
      %v2318 = vpop.f32.mrf.mxu0
      %v2319 = vadd.f32 0.0, %v2318
      %v2320 = vpop.f32.mrf.mxu0
      %2321 = vdwg.mxu0
      %s2322 = scalar_lea.vmem %s264, 32
      %2323 = vst.msk [vmem:[%s2322] sm:$0xff] %vm359, %v2319
      %2325 = vrot.lane.b32.xlu0 %v1890, 8
      %v2326 = vpop.permute.xlu0 %2325
      %2327 = vrot.lane.b32.xlu0 %v1891, 8
      %v2328 = vpop.permute.xlu0 %2327
      %2331 = vrot.lane.b32.xlu0 %v1888, 16
      %v2332 = vpop.permute.xlu0 %2331
      %2333 = vrot.lane.b32.xlu0 %v1889, 16
      %v2334 = vpop.permute.xlu0 %2333
      %v2338 = vrot.slane %v1892, 7
      %2339 = vrot.lane.b32.xlu0 %v2338, 24
      %v2340 = vpop.permute.xlu0 %2339
      %2342 = vrot.lane.b32.xlu0 %v2254, 32
      %v2343 = vpop.permute.xlu0 %2342
      %2345 = vrot.lane.b32.xlu0 %v2170, 40
      %v2346 = vpop.permute.xlu0 %2345
      %v2348 = vsel %vm353, %v1892, %v2326
      %v2349 = vsel %vm353, %v1893, %v2328
      %v2350 = vsel %vm359, %v2348, %v2332
      %v2351 = vsel %vm359, %v2349, %v2334
      %v2352 = vsel %vm365, %v2350, %v2340
      %v2353 = vsel %vm365, %v2351, %v2340
      %v2354 = vsel %vm371, %v2352, %v2343
      %v2355 = vsel %vm371, %v2353, %v2343
      %v2356 = vsel %vm1935, %v2354, %v2346
      %v2357 = vsel %vm1935, %v2355, %v2346
      %v2358 = vpack.c.bf16 %v2357, %v2356
      %v2359 = vld [vmem:[%s4] sm:$0xf]
      %v2360 = vld [vmem:[%s4 + $0x4] sm:$0xf]
      %v2361 = vld [vmem:[%s4 + $0x8] sm:$0xf]
      %v2362 = vld [vmem:[%s4 + $0xc] sm:$0xf]
      %v2363 = vld [vmem:[%s4 + $0x10] sm:$0xf]
      %v2364 = vld [vmem:[%s4 + $0x14] sm:$0xf]
      %v2366 = vshrl.u32 %v2358, 16
      %v2368 = vshll.u32 %v2358, 16
      %v2370 = vrot.slane %v2368, 1
      %v2371 = vor.u32 %v2366, %v2370
      %v2378 = vunpack.c.l.b16 %v2359
      %v2379 = vunpack.c.l.b16 %v2360
      %v2380 = vunpack.c.l.b16 %v2361
      %v2381 = vunpack.c.l.b16 %v2362
      %v2382 = vunpack.c.l.b16 %v2363
      %v2383 = vunpack.c.l.b16 %v2364
      %v2384 = vpack.c.b16 %v2379, %v2378
      %v2385 = vpack.c.b16 %v2381, %v2380
      %v2386 = vpack.c.b16 %v2383, %v2382
      %v2391 = vsel %vm1970, %v2371, 0
      %2393 = vmatpush.bf16.msra.mxu0 0
      %2394 = vmatpush.bf16.msra.mxu0 0
      %2395 = vmatpush.bf16.msra.mxu0 0
      %2396 = vmatpush.bf16.msra.mxu0 0
      %2397 = vmatpush.bf16.msra.mxu0 0
      %2398 = vmatpush.bf16.msra.mxu0 %v2386
      %2399 = vmatpush.bf16.msra.mxu0 %v2385
      %2400 = vmatpush.bf16.msra.mxu0 %v2384
      %2401 = vmatmul.bf16.gmra.mxu0 %v2391
      %v2402 = vpop.f32.mrf.mxu0
      %v2403 = vadd.f32 0.0, %v2402
      %v2404 = vpop.f32.mrf.mxu0
      %2405 = vdwg.mxu0
      %s2406 = scalar_lea.vmem %s264, 40
      %2407 = vst.msk [vmem:[%s2406] sm:$0xff] %vm359, %v2403
      %2409 = vrot.lane.b32.xlu0 %v1892, 8
      %v2410 = vpop.permute.xlu0 %2409
      %2411 = vrot.lane.b32.xlu0 %v1893, 8
      %v2412 = vpop.permute.xlu0 %2411
      %2415 = vrot.lane.b32.xlu0 %v1890, 16
      %v2416 = vpop.permute.xlu0 %2415
      %2417 = vrot.lane.b32.xlu0 %v1891, 16
      %v2418 = vpop.permute.xlu0 %2417
      %v2422 = vrot.slane %v1894, 7
      %2423 = vrot.lane.b32.xlu0 %v2422, 24
      %v2424 = vpop.permute.xlu0 %2423
      %2426 = vrot.lane.b32.xlu0 %v2338, 32
      %v2427 = vpop.permute.xlu0 %2426
      %2429 = vrot.lane.b32.xlu0 %v2254, 40
      %v2430 = vpop.permute.xlu0 %2429
      %v2432 = vsel %vm353, %v1894, %v2410
      %v2433 = vsel %vm353, %v1895, %v2412
      %v2434 = vsel %vm359, %v2432, %v2416
      %v2435 = vsel %vm359, %v2433, %v2418
      %v2436 = vsel %vm365, %v2434, %v2424
      %v2437 = vsel %vm365, %v2435, %v2424
      %v2438 = vsel %vm371, %v2436, %v2427
      %v2439 = vsel %vm371, %v2437, %v2427
      %v2440 = vsel %vm1935, %v2438, %v2430
      %v2441 = vsel %vm1935, %v2439, %v2430
      %v2442 = vpack.c.bf16 %v2441, %v2440
      %v2443 = vld [vmem:[%s4] sm:$0xf]
      %v2444 = vld [vmem:[%s4 + $0x4] sm:$0xf]
      %v2445 = vld [vmem:[%s4 + $0x8] sm:$0xf]
      %v2446 = vld [vmem:[%s4 + $0xc] sm:$0xf]
      %v2447 = vld [vmem:[%s4 + $0x10] sm:$0xf]
      %v2448 = vld [vmem:[%s4 + $0x14] sm:$0xf]
      %v2450 = vshrl.u32 %v2442, 16
      %v2452 = vshll.u32 %v2442, 16
      %v2454 = vrot.slane %v2452, 1
      %v2455 = vor.u32 %v2450, %v2454
      %v2462 = vunpack.c.l.b16 %v2443
      %v2463 = vunpack.c.l.b16 %v2444
      %v2464 = vunpack.c.l.b16 %v2445
      %v2465 = vunpack.c.l.b16 %v2446
      %v2466 = vunpack.c.l.b16 %v2447
      %v2467 = vunpack.c.l.b16 %v2448
      %v2468 = vpack.c.b16 %v2463, %v2462
      %v2469 = vpack.c.b16 %v2465, %v2464
      %v2470 = vpack.c.b16 %v2467, %v2466
      %v2475 = vsel %vm1970, %v2455, 0
      %2477 = vmatpush.bf16.msra.mxu0 0
      %2478 = vmatpush.bf16.msra.mxu0 0
      %2479 = vmatpush.bf16.msra.mxu0 0
      %2480 = vmatpush.bf16.msra.mxu0 0
      %2481 = vmatpush.bf16.msra.mxu0 0
      %2482 = vmatpush.bf16.msra.mxu0 %v2470
      %2483 = vmatpush.bf16.msra.mxu0 %v2469
      %2484 = vmatpush.bf16.msra.mxu0 %v2468
      %2485 = vmatmul.bf16.gmra.mxu0 %v2475
      %v2486 = vpop.f32.mrf.mxu0
      %v2487 = vadd.f32 0.0, %v2486
      %v2488 = vpop.f32.mrf.mxu0
      %2489 = vdwg.mxu0
      %s2490 = scalar_lea.vmem %s264, 48
      %2491 = vst.msk [vmem:[%s2490] sm:$0xff] %vm359, %v2487
      %2493 = vrot.lane.b32.xlu0 %v1894, 8
      %v2494 = vpop.permute.xlu0 %2493
      %2495 = vrot.lane.b32.xlu0 %v1895, 8
      %v2496 = vpop.permute.xlu0 %2495
      %2499 = vrot.lane.b32.xlu0 %v1892, 16
      %v2500 = vpop.permute.xlu0 %2499
      %2501 = vrot.lane.b32.xlu0 %v1893, 16
      %v2502 = vpop.permute.xlu0 %2501
      %v2506 = vrot.slane %v1896, 7
      %2507 = vrot.lane.b32.xlu0 %v2506, 24
      %v2508 = vpop.permute.xlu0 %2507
      %2510 = vrot.lane.b32.xlu0 %v2422, 32
      %v2511 = vpop.permute.xlu0 %2510
      %2513 = vrot.lane.b32.xlu0 %v2338, 40
      %v2514 = vpop.permute.xlu0 %2513
      %v2516 = vsel %vm353, %v1896, %v2494
      %v2517 = vsel %vm353, %v1897, %v2496
      %v2518 = vsel %vm359, %v2516, %v2500
      %v2519 = vsel %vm359, %v2517, %v2502
      %v2520 = vsel %vm365, %v2518, %v2508
      %v2521 = vsel %vm365, %v2519, %v2508
      %v2522 = vsel %vm371, %v2520, %v2511
      %v2523 = vsel %vm371, %v2521, %v2511
      %v2524 = vsel %vm1935, %v2522, %v2514
      %v2525 = vsel %vm1935, %v2523, %v2514
      %v2526 = vpack.c.bf16 %v2525, %v2524
      %v2527 = vld [vmem:[%s4] sm:$0xf]
      %v2528 = vld [vmem:[%s4 + $0x4] sm:$0xf]
      %v2529 = vld [vmem:[%s4 + $0x8] sm:$0xf]
      %v2530 = vld [vmem:[%s4 + $0xc] sm:$0xf]
      %v2531 = vld [vmem:[%s4 + $0x10] sm:$0xf]
      %v2532 = vld [vmem:[%s4 + $0x14] sm:$0xf]
      %v2534 = vshrl.u32 %v2526, 16
      %v2536 = vshll.u32 %v2526, 16
      %v2538 = vrot.slane %v2536, 1
      %v2539 = vor.u32 %v2534, %v2538
      %v2546 = vunpack.c.l.b16 %v2527
      %v2547 = vunpack.c.l.b16 %v2528
      %v2548 = vunpack.c.l.b16 %v2529
      %v2549 = vunpack.c.l.b16 %v2530
      %v2550 = vunpack.c.l.b16 %v2531
      %v2551 = vunpack.c.l.b16 %v2532
      %v2552 = vpack.c.b16 %v2547, %v2546
      %v2553 = vpack.c.b16 %v2549, %v2548
      %v2554 = vpack.c.b16 %v2551, %v2550
      %v2559 = vsel %vm1970, %v2539, 0
      %2561 = vmatpush.bf16.msra.mxu0 0
      %2562 = vmatpush.bf16.msra.mxu0 0
      %2563 = vmatpush.bf16.msra.mxu0 0
      %2564 = vmatpush.bf16.msra.mxu0 0
      %2565 = vmatpush.bf16.msra.mxu0 0
      %2566 = vmatpush.bf16.msra.mxu0 %v2554
      %2567 = vmatpush.bf16.msra.mxu0 %v2553
      %2568 = vmatpush.bf16.msra.mxu0 %v2552
      %2569 = vmatmul.bf16.gmra.mxu0 %v2559
      %v2570 = vpop.f32.mrf.mxu0
      %v2571 = vadd.f32 0.0, %v2570
      %v2572 = vpop.f32.mrf.mxu0
      %2573 = vdwg.mxu0
      %s2574 = scalar_lea.vmem %s264, 56
      %2575 = vst.msk [vmem:[%s2574] sm:$0xff] %vm359, %v2571
      %p2576 = scmp.lt.s32.totalorder %s18, 1
      %s2577 = scalar_select %p2576, %s18, 1
      %s2578 = smul.addr %s2577, 20
      %s2579 = smul.addr %s2578, 8
      %s2580 = scalar_lea.vmem %s5, %s2579
      %p2581 = scmp.lt.s32.totalorder %s18, 1
      %s2582 = scalar_select %p2581, %s18, 1
      %s2583 = smul.addr %s2582, 8
      %s2584 = smul.addr %s2583, 8
      %s2585 = scalar_lea.vmem %s6, %s2584
      // Predicated region
      $region41: #{_lambda_.2} parent=39 // pred_check
        %p2586 = pneg %p146
      $region42: #{_lambda_.2} parent=39 // pred_check_branch
        %2588 = sbr.rel (%p2586) target = $region44
      $region43: #{_lambda_.2} parent=39 // pred_region
        _
      $region44: #{_lambda_.2} parent=39 // pred_fallthru
        _
      // Predicated region
      $region45: #{_lambda_.2} parent=39 // pred_check
        %p2589 = pneg %p172
      $region46: #{_lambda_.2} parent=39 // pred_check_branch
        %2591 = sbr.rel (%p2589) target = $region48
      $region47: #{_lambda_.2} parent=39 // pred_region
        _
      $region48: #{_lambda_.2} parent=39 // pred_fallthru
        _
    $region40: #{_lambda_.2} parent=5 // pred_fallthru
      _
    %p2592 = scmp.le.s32.totalorder 2, %s13
    // Predicated region
    $region49: #{_lambda_.2} parent=5 // pred_check
      %p2593 = pneg %p2592
    $region50: #{_lambda_.2} parent=5 // pred_check_branch
      %2595 = sbr.rel (%p2593) target = $region52
    $region51: #{_lambda_.2} parent=5 // pred_region
      %s2596 = ssub.s32 %s13, 2
      // Predicated region
      $region53: #{_lambda_.2} parent=51 // pred_check
        %p2597 = pneg %p152
      $region54: #{_lambda_.2} parent=51 // pred_check_branch
        %2599 = sbr.rel (%p2597) target = $region56
      $region55: #{_lambda_.2} parent=51 // pred_region
        %p2600 = scmp.lt.s32.totalorder %s19, 1
        %s2601 = scalar_select %p2600, %s19, 1
        %s2602 = smul.addr %s2601, 20
        %s2603 = smul.addr %s2602, 8
        %s2604 = scalar_lea.vmem %s5, %s2603
      $region56: #{_lambda_.2} parent=51 // pred_fallthru
        _
      // Predicated region
      $region57: #{_lambda_.2} parent=51 // pred_check
        %p2605 = pneg %p178
      $region58: #{_lambda_.2} parent=51 // pred_check_branch
        %2607 = sbr.rel (%p2605) target = $region60
      $region59: #{_lambda_.2} parent=51 // pred_region
        %p2608 = scmp.lt.s32.totalorder %s19, 1
        %s2609 = scalar_select %p2608, %s19, 1
        %s2610 = smul.addr %s2609, 8
        %s2611 = smul.addr %s2610, 8
        %s2612 = scalar_lea.vmem %s6, %s2611
      $region60: #{_lambda_.2} parent=51 // pred_fallthru
        _
    $region52: #{_lambda_.2} parent=5 // pred_fallthru
      _
  $region6: #{_lambda_.2} parent=0 // loop_footer
    %s17 = sadd.s32 1, %s13
  $region7: #{_lambda_.2} parent=0 // loop_footer_branch
    %12 = sbr.rel target = $region3
  $region8: #{_lambda_.2} parent=0 // loop_exit
    _

</llo_original>
